<compile_context>
chip_gen: v7x
topology: tpu7x:2x2x1
jax: 0.10.0
libtpu: 0.0.40
codegen_flags: <defaults>
</compile_context>

<pallas_src>
import numpy as np
import jax
import jax.numpy as jnp
from jax.experimental import pallas as pl
from jax.experimental.pallas import tpu as pltpu


def _round_up(x, m):
    return ((x + m - 1) // m) * m


# ----------------------------------------------------------------------------
# Buffer construction (mirrors STFTONNX2D.__init__ for model_type='istft_MB').
# Host-side numpy: these are module constants, not part of the forward pass.
# ----------------------------------------------------------------------------
def make_istft_mb_buffers(n_fft, hop_len, max_frames, num_bands, window_type="hann"):
    half = n_fft // 2
    k = np.arange(n_fft)
    if window_type == "hamming":
        window = 0.54 - 0.46 * np.cos(2.0 * np.pi * k / n_fft)
    elif window_type == "bartlett":
        window = 1.0 - np.abs(2.0 * k / n_fft - 1.0)
    elif window_type == "blackman":
        window = (0.42 - 0.5 * np.cos(2.0 * np.pi * k / n_fft)
                  + 0.08 * np.cos(4.0 * np.pi * k / n_fft))
    else:  # hann (periodic) — also the dict default in the torch module
        window = 0.5 - 0.5 * np.cos(2.0 * np.pi * k / n_fft)
    window = window.astype(np.float64)

    # fourier_basis = [Re(F[:half+1]); Im(F[:half+1])], F = fft(eye(n_fft))
    fb = np.fft.fft(np.eye(n_fft))
    fourier_basis = np.vstack([np.real(fb[: half + 1, :]), np.imag(fb[: half + 1, :])])
    inverse_basis = window[None, :] * np.linalg.pinv(
        fourier_basis * n_fft / hop_len).T                       # (n_fft+2, n_fft)

    # window_sum / window_sum_inv (total_pad == 0 here)
    n = n_fft + hop_len * (max_frames - 1)
    window_sum = np.zeros(n, dtype=np.float64)
    wn = window / np.abs(window).max()
    win_sq = wn ** 2
    for i in range(max_frames):
        s = i * hop_len
        window_sum[s:min(n, s + n_fft)] += win_sq[: max(0, min(n_fft, n - s))]
    with np.errstate(divide="ignore"):
        window_sum_inv = n_fft / (window_sum * hop_len)

    # Band structure: contiguous bins from 0; trailing bins beyond
    # num_bands*freq_per_band are dropped, exactly as in the module.
    freq_per_band = (half + 1) // num_bands
    nbf = num_bands * freq_per_band

    # mb_inverse_basis exactly as the module builds it: (num_bands, 2F, n_fft)
    mb = []
    for b in range(num_bands):
        s, e = b * freq_per_band, (b + 1) * freq_per_band
        mb.append(np.concatenate([inverse_basis[s:e],
                                  inverse_basis[half + 1 + s: half + 1 + e]], axis=0))
    mb_inverse_basis = np.stack(mb, axis=0)

    # Split real/imag bases for the Pallas kernel: (2, n_fft, NBF) so the kernel
    # does two dots instead of a channel concat + one dot.
    basis_2 = np.stack(
        [np.ascontiguousarray(inverse_basis[:nbf].T),
         np.ascontiguousarray(inverse_basis[half + 1: half + 1 + nbf].T)], axis=0)

    return dict(
        basis_2=jnp.asarray(basis_2, jnp.float32),
        mb_inverse_basis=jnp.asarray(mb_inverse_basis, jnp.float32),
        window_sum_inv=jnp.asarray(window_sum_inv, jnp.float32),
        freq_per_band=freq_per_band,
    )


# ----------------------------------------------------------------------------
# Pallas forward pass
# ----------------------------------------------------------------------------
def istft_mb_forward(band_mag, band_phase, basis_2, window_sum_inv, n_fft, hop_len,
                     *, compute_dtype=jnp.float32, tile_frames=8192, fuse_trig=True):
    """Pallas port of STFTONNX2D.istft_MB_forward.

    band_mag, band_phase: (B, num_bands, F, T) float32
    basis_2:              (2, n_fft, num_bands*F) split real/imag inverse basis
    returns:              (B, 1, hop_len*(T-1)) float32
    """
    B, NB, F, T = band_mag.shape
    half = n_fft // 2
    assert n_fft % hop_len == 0, "n_fft must be a multiple of hop_len"
    # TODO(synk): overlap-add for n_fft % hop_len != 0 is not ported.
    K = n_fft // hop_len
    NBF = NB * F
    hop = hop_len
    assert basis_2.shape == (2, n_fft, NBF)

    # Flatten (band, freq) -> channel; frames stay on the lane axis.
    a = band_mag.reshape(B, NBF, T)
    b = band_phase.reshape(B, NBF, T)

    # Frame tiling: 128-lane aligned, large by default (per-step VMEM is only a
    # few MiB even at TT=8192), capped by the data actually present (masking
    # handles the partial last tile -- no wrapper jnp.pad, no extra HBM pass).
    tile_frames = max(128, (tile_frames // 128) * 128)
    TT = min(tile_frames, _round_up(T, 128))
    n_t = -(-(T + K - 1) // TT)          # enough output columns for the OLA tail
    n_cols = n_t * TT
    t_in_last = (T - 1) // TT            # clamp target for the (rare) extra tile

    # window_sum_inv folded into the kernel: wsi2d[r, u] = wsi[u*hop + r] inside
    # the kept sample range [half, Ltot-half), 0 elsewhere (keeps inf/nan out of
    # dead columns while preserving the module's values on kept samples).
    Ltot = hop * (T - 1) + n_fft
    wsi_flat = jnp.zeros((n_cols * hop,), jnp.float32)
    wsi_flat = wsi_flat.at[half:Ltot - half].set(window_sum_inv[half:Ltot - half])
    wsi2d = wsi_flat.reshape(n_cols, hop).T                      # (hop, n_cols)

    if not fuse_trig:                    # fallback: trig precomputed by XLA
        a, b = a * jnp.cos(b), a * jnp.sin(b)

    basis = basis_2.astype(compute_dtype)                        # tiny, VMEM resident
    prec = (jax.lax.Precision.HIGHEST
            if jnp.dtype(compute_dtype) == jnp.float32 else None)

    def kernel(a_ref, b_ref, basis_ref, wsi_ref, out_ref, carry_ref):
        t_idx = pl.program_id(1)

        @pl.when(t_idx == 0)
        def _():                         # new batch row -> clear OLA carry
            carry_ref[...] = jnp.zeros_like(carry_ref)

        av = a_ref[0]                    # (NBF, TT)
        bv = b_ref[0]
        # Mask frames past T (partial / clamped tail tile contents are undefined).
        col = jax.lax.broadcasted_iota(jnp.int32, (NBF, TT), 1) + t_idx * TT
        valid = col < T
        if fuse_trig:
            real = jnp.where(valid, av * jnp.cos(bv), 0.0)
            imag = jnp.where(valid, av * jnp.sin(bv), 0.0)
        else:
            real = jnp.where(valid, av, 0.0)
            imag = jnp.where(valid, bv, 0.0)

        # frames_t[n, u] = sum_f basis_r[n,f]*real[f,u] + basis_i[n,f]*imag[f,u]
        frames_t = (jnp.dot(basis_ref[0], real.astype(compute_dtype),
                            preferred_element_type=jnp.float32, precision=prec)
                    + jnp.dot(basis_ref[1], imag.astype(compute_dtype),
                              preferred_element_type=jnp.float32, precision=prec))
        # (n_fft, TT) f32

        # Overlap-add with XLU rolls + lane masks (no zero-concat relayouts).
        # local[r, v]   += frames_t[j*hop + r, v - j]         for v >= j
        # carry[r, c]   += frames_t[j*hop + r, TT - j + c]    for c <  j
        lane = jax.lax.broadcasted_iota(jnp.int32, (hop, TT), 1)
        local = frames_t[:hop, :]
        carry_acc = jnp.zeros((hop, TT), jnp.float32)
        for j in range(1, K):
            rolled = pltpu.roll(frames_t[j * hop:(j + 1) * hop, :], shift=j, axis=1)
            local = local + jnp.where(lane >= j, rolled, 0.0)
            carry_acc = carry_acc + jnp.where(lane < j, rolled, 0.0)

        out_ref[0] = ((local + carry_ref[...]) * wsi_ref[...]).astype(out_ref.dtype)
        carry_ref[...] = carry_acc       # tail (first K-1 lanes) -> next tile

    grid = (B, n_t)
    flops = B * n_cols * (4 * n_fft * NBF + 2 * NBF + 8 * hop * K)
    transcend = (2 * B * NBF * n_cols) if fuse_trig else 0
    bytes_accessed = 4 * (2 * B * NBF * T + 2 * B * hop * n_cols) + 8 * n_fft * NBF

    out3 = pl.pallas_call(
        kernel,
        out_shape=jax.ShapeDtypeStruct((B, hop, n_cols), jnp.float32),
        grid_spec=pltpu.PrefetchScalarGridSpec(
            num_scalar_prefetch=0,
            grid=grid,
            in_specs=[
                pl.BlockSpec((1, NBF, TT),
                             lambda i, t: (i, 0, jnp.minimum(t, t_in_last))),
                pl.BlockSpec((1, NBF, TT),
                             lambda i, t: (i, 0, jnp.minimum(t, t_in_last))),
                pl.BlockSpec((2, n_fft, NBF), lambda i, t: (0, 0, 0)),   # resident
                pl.BlockSpec((hop, TT), lambda i, t: (0, t)),            # window
            ],
            out_specs=pl.BlockSpec((1, hop, TT), lambda i, t: (i, 0, t)),
            scratch_shapes=[pltpu.VMEM((hop, TT), jnp.float32)],
        ),
        # Batch axis is megacore-parallel; the frame axis carries the OLA tail
        # (carry scratch), so it must stay sequential ("arbitrary").
        compiler_params=pltpu.CompilerParams(
            dimension_semantics=("parallel", "arbitrary")),
        cost_estimate=pl.CostEstimate(
            flops=flops, transcendentals=transcend, bytes_accessed=bytes_accessed),
    )(a, b, basis, wsi2d)

    # out3[b, r, u] is the (already window-scaled) signal at sample u*hop + r.
    # Slice to the columns that contain kept samples before the transpose.
    need_cols = -(-(Ltot - half) // hop)
    sig = jnp.transpose(out3[:, :, :need_cols], (0, 2, 1)).reshape(B, need_cols * hop)
    return sig[:, half:Ltot - half][:, None, :]


# ----------------------------------------------------------------------------
# Pure-JAX reference (literal port of istft_MB_forward: per-frame matmul +
# scatter-add overlap-add using the module's mb_inverse_basis buffer).
# ----------------------------------------------------------------------------
def reference_istft_mb(band_mag, band_phase, mb_inverse_basis, window_sum_inv,
                       n_fft, hop_len):
    B, NB, F, T = band_mag.shape
    half = n_fft // 2
    L = hop_len * (T - 1) + n_fft
    pos = (np.arange(T)[:, None] * hop_len + np.arange(n_fft)[None, :]).reshape(-1)
    out = jnp.zeros((B, L), jnp.float32)
    for band in range(NB):
        real = band_mag[:, band] * jnp.cos(band_phase[:, band])
        imag = band_mag[:, band] * jnp.sin(band_phase[:, band])
        ci = jnp.concatenate([real, imag], axis=1)                        # (B, 2F, T)
        frames = jnp.einsum("bct,cn->btn", ci, mb_inverse_basis[band],
                            precision=jax.lax.Precision.HIGHEST)          # (B, T, n_fft)
        out = out.at[:, pos].add(frames.reshape(B, T * n_fft))
    out = out[:, half:L - half] * window_sum_inv[half:L - half]
    return out[:, None, :]


if __name__ == "__main__":
    # Shapes consistent with iSTFTNet2-MB's post-upsample iSTFT:
    # n_fft=16, hop=4, 4 bands of (n_fft//2+1)//4 = 2 bins each.
    n_fft, hop_len, num_bands = 16, 4, 4

    def make_case(B, T, seed):
        bufs = make_istft_mb_buffers(n_fft, hop_len, T, num_bands, "hann")
        F = bufs["freq_per_band"]
        k1, k2 = jax.random.split(jax.random.PRNGKey(seed))
        mag = jnp.abs(jax.random.normal(k1, (B, num_bands, F, T), jnp.float32))
        ph = jax.random.uniform(k2, (B, num_bands, F, T), jnp.float32,
                                minval=-np.pi, maxval=np.pi)
        ref = jax.block_until_ready(
            reference_istft_mb(mag, ph, bufs["mb_inverse_basis"],
                               bufs["window_sum_inv"], n_fft, hop_len))
        return bufs, mag, ph, ref

    # Case A (B=2, T=384): exercises the multi-tile frame axis (cross-tile OLA
    # carry + fully-masked clamped tail tile) and the default large-tile config.
    bufsA, magA, phA, refA = make_case(B=2, T=384, seed=0)
    # Case B (B=1, T=131): partial last tile (T not a multiple of 128).
    bufsB, magB, phB, refB = make_case(B=1, T=131, seed=1)

    configs = [(bufsA, magA, phA, refA, 128),      # forced multi-tile, TT=128
               (bufsA, magA, phA, refA, 8192),     # default tile size
               (bufsB, magB, phB, refB, 8192)]

    def run_all(fuse):
        outs = []
        for bufs, mag, ph, _, tf in configs:
            outs.append(jax.block_until_ready(
                istft_mb_forward(mag, ph, bufs["basis_2"], bufs["window_sum_inv"],
                                 n_fft, hop_len, tile_frames=tf, fuse_trig=fuse)))
        return outs

    try:
        outs = run_all(True)
    except Exception:
        # TODO(synk): fallback if this build cannot lower in-kernel sin/cos.
        outs = run_all(False)

    for (bufs, mag, ph, ref, tf), out in zip(configs, outs):
        assert out.shape == ref.shape, (out.shape, ref.shape)
        err = float(jnp.max(jnp.abs(out - ref)))
        assert err < 2e-3, (tf, err)

    print("KERNEL_OK")
</pallas_src>

<mosaic_0001>
module attributes {stable_mosaic.version = 11 : i64} {
  func.func @kernel(%arg0: i32, %arg1: i32, %arg2: memref<1x8x128xf32, #tpu.memory_space<vmem>>, %arg3: memref<1x8x128xf32, #tpu.memory_space<vmem>>, %arg4: memref<2x16x8xf32, #tpu.memory_space<vmem>>, %arg5: memref<4x128xf32, #tpu.memory_space<vmem>>, %arg6: memref<1x4x128xf32, #tpu.memory_space<vmem>>, %arg7: memref<4x128xf32, #tpu.memory_space<vmem>>) attributes {dimension_semantics = [#tpu.dimension_semantics<parallel>, #tpu.dimension_semantics<arbitrary>], iteration_bounds = array<i64: 2, 4>, scalar_prefetch = 0 : i64, scratch_operands = 1 : i64, tpu.core_type = #tpu.core_type<tc>, window_params = [{transform_indices = @transform_0, window_bounds = array<i64: 1, 8, 128>}, {transform_indices = @transform_1, window_bounds = array<i64: 1, 8, 128>}, {pipeline_mode = #tpu.pipeline_mode<synchronous>, transform_indices = @transform_2, window_bounds = array<i64: 2, 16, 8>}, {transform_indices = @transform_3, window_bounds = array<i64: 4, 128>}, {transform_indices = @transform_4, window_bounds = array<i64: 1, 4, 128>}]} {
    %c0_i32 = arith.constant 0 : i32
    %0 = arith.cmpi eq, %arg1, %c0_i32 : i32
    %1 = arith.extui %0 : i1 to i32
    %c0_i32_0 = arith.constant 0 : i32
    %2 = arith.cmpi ne, %1, %c0_i32_0 : i32
    scf.if %2 {
      %cst_36 = arith.constant 0.000000e+00 : f32
      %75 = vector.broadcast %cst_36 : f32 to vector<4x128xf32>
      %c0_37 = arith.constant 0 : index
      %c0_38 = arith.constant 0 : index
      %76 = vector.load %arg7[%c0_37, %c0_38] : memref<4x128xf32, #tpu.memory_space<vmem>>, vector<4x128xf32>
      tpu.vector_store %arg7[%c0_37, %c0_38], %75 {strides = array<i32>} : memref<4x128xf32, #tpu.memory_space<vmem>>, vector<4x128xf32>,
    } else {
    }
    %c0 = arith.constant 0 : index
    %c0_1 = arith.constant 0 : index
    %c0_2 = arith.constant 0 : index
    %3 = vector.load %arg2[%c0, %c0_1, %c0_2] : memref<1x8x128xf32, #tpu.memory_space<vmem>>, vector<1x8x128xf32>
    %4 = vector.shape_cast %3 : vector<1x8x128xf32> to vector<8x128xf32>
    %c0_3 = arith.constant 0 : index
    %c0_4 = arith.constant 0 : index
    %c0_5 = arith.constant 0 : index
    %5 = vector.load %arg3[%c0_3, %c0_4, %c0_5] : memref<1x8x128xf32, #tpu.memory_space<vmem>>, vector<1x8x128xf32>
    %6 = vector.shape_cast %5 : vector<1x8x128xf32> to vector<8x128xf32>
    %7 = tpu.iota {dimensions = array<i32: 1>} : vector<8x128xi32>
    %c128_i32 = arith.constant 128 : i32
    %8 = arith.muli %arg1, %c128_i32 : i32
    %9 = vector.broadcast %8 : i32 to vector<8x128xi32>
    %10 = arith.addi %7, %9 : vector<8x128xi32>
    %c384_i32 = arith.constant 384 : i32
    %11 = vector.broadcast %c384_i32 : i32 to vector<8x128xi32>
    %12 = arith.cmpi slt, %10, %11 : vector<8x128xi32>
    %13 = math.cos %6 : vector<8x128xf32>
    %14 = arith.mulf %4, %13 : vector<8x128xf32>
    %cst = arith.constant 0.000000e+00 : f32
    %15 = vector.broadcast %cst : f32 to vector<8x128xf32>
    %16 = arith.select %12, %14, %15 : vector<8x128xi1>, vector<8x128xf32>
    %17 = math.sin %6 : vector<8x128xf32>
    %18 = arith.mulf %4, %17 : vector<8x128xf32>
    %cst_6 = arith.constant 0.000000e+00 : f32
    %19 = vector.broadcast %cst_6 : f32 to vector<8x128xf32>
    %20 = arith.select %12, %18, %19 : vector<8x128xi1>, vector<8x128xf32>
    %c0_7 = arith.constant 0 : index
    %c0_8 = arith.constant 0 : index
    %c0_9 = arith.constant 0 : index
    %21 = vector.load %arg4[%c0_7, %c0_8, %c0_9] : memref<2x16x8xf32, #tpu.memory_space<vmem>>, vector<1x16x8xf32>
    %22 = vector.shape_cast %21 : vector<1x16x8xf32> to vector<16x8xf32>
    %cst_10 = arith.constant dense<0.000000e+00> : vector<16x128xf32>
    %23 = tpu.matmul %22, %16, %cst_10 {dimension_numbers = #tpu.dot_dimension_numbers<[1], [0], [0], [1], [0, 0, 1, 1], [], []>, precision = #tpu.contract_precision<fp32>} : vector<16x8xf32>, vector<8x128xf32>, vector<16x128xf32> -> vector<16x128xf32>
    %c1 = arith.constant 1 : index
    %c0_11 = arith.constant 0 : index
    %c0_12 = arith.constant 0 : index
    %24 = vector.load %arg4[%c1, %c0_11, %c0_12] : memref<2x16x8xf32, #tpu.memory_space<vmem>>, vector<1x16x8xf32>
    %25 = vector.shape_cast %24 : vector<1x16x8xf32> to vector<16x8xf32>
    %cst_13 = arith.constant dense<0.000000e+00> : vector<16x128xf32>
    %26 = tpu.matmul %25, %20, %cst_13 {dimension_numbers = #tpu.dot_dimension_numbers<[1], [0], [0], [1], [0, 0, 1, 1], [], []>, precision = #tpu.contract_precision<fp32>} : vector<16x8xf32>, vector<8x128xf32>, vector<16x128xf32> -> vector<16x128xf32>
    %27 = arith.addf %23, %26 : vector<16x128xf32>
    %28 = tpu.iota {dimensions = array<i32: 1>} : vector<4x128xi32>
    %29 = vector.extract_strided_slice %27 {offsets = [0, 0], sizes = [4, 128], strides = [1, 1]} : vector<16x128xf32> to vector<4x128xf32>
    %cst_14 = arith.constant 0.000000e+00 : f32
    %30 = vector.broadcast %cst_14 : f32 to vector<4x128xf32>
    %31 = vector.extract_strided_slice %27 {offsets = [4, 0], sizes = [4, 128], strides = [1, 1]} : vector<16x128xf32> to vector<4x128xf32>
    %c1_i32 = arith.constant 1 : i32
    %32 = tpu.dynamic_rotate %31 by %c1_i32 dim 1 : vector<4x128xf32>, i32 -> vector<4x128xf32>
    %c1_i32_15 = arith.constant 1 : i32
    %33 = vector.broadcast %c1_i32_15 : i32 to vector<4x128xi32>
    %34 = arith.cmpi sge, %28, %33 : vector<4x128xi32>
    %cst_16 = arith.constant 0.000000e+00 : f32
    %35 = vector.broadcast %cst_16 : f32 to vector<4x128xf32>
    %36 = arith.select %34, %32, %35 : vector<4x128xi1>, vector<4x128xf32>
    %37 = arith.addf %29, %36 : vector<4x128xf32>
    %c1_i32_17 = arith.constant 1 : i32
    %38 = vector.broadcast %c1_i32_17 : i32 to vector<4x128xi32>
    %39 = arith.cmpi slt, %28, %38 : vector<4x128xi32>
    %cst_18 = arith.constant 0.000000e+00 : f32
    %40 = vector.broadcast %cst_18 : f32 to vector<4x128xf32>
    %41 = arith.select %39, %32, %40 : vector<4x128xi1>, vector<4x128xf32>
    %42 = arith.addf %30, %41 : vector<4x128xf32>
    %43 = vector.extract_strided_slice %27 {offsets = [8, 0], sizes = [4, 128], strides = [1, 1]} : vector<16x128xf32> to vector<4x128xf32>
    %c2_i32 = arith.constant 2 : i32
    %44 = tpu.dynamic_rotate %43 by %c2_i32 dim 1 : vector<4x128xf32>, i32 -> vector<4x128xf32>
    %c2_i32_19 = arith.constant 2 : i32
    %45 = vector.broadcast %c2_i32_19 : i32 to vector<4x128xi32>
    %46 = arith.cmpi sge, %28, %45 : vector<4x128xi32>
    %cst_20 = arith.constant 0.000000e+00 : f32
    %47 = vector.broadcast %cst_20 : f32 to vector<4x128xf32>
    %48 = arith.select %46, %44, %47 : vector<4x128xi1>, vector<4x128xf32>
    %49 = arith.addf %37, %48 : vector<4x128xf32>
    %c2_i32_21 = arith.constant 2 : i32
    %50 = vector.broadcast %c2_i32_21 : i32 to vector<4x128xi32>
    %51 = arith.cmpi slt, %28, %50 : vector<4x128xi32>
    %cst_22 = arith.constant 0.000000e+00 : f32
    %52 = vector.broadcast %cst_22 : f32 to vector<4x128xf32>
    %53 = arith.select %51, %44, %52 : vector<4x128xi1>, vector<4x128xf32>
    %54 = arith.addf %42, %53 : vector<4x128xf32>
    %55 = vector.extract_strided_slice %27 {offsets = [12, 0], sizes = [4, 128], strides = [1, 1]} : vector<16x128xf32> to vector<4x128xf32>
    %c3_i32 = arith.constant 3 : i32
    %56 = tpu.dynamic_rotate %55 by %c3_i32 dim 1 : vector<4x128xf32>, i32 -> vector<4x128xf32>
    %c3_i32_23 = arith.constant 3 : i32
    %57 = vector.broadcast %c3_i32_23 : i32 to vector<4x128xi32>
    %58 = arith.cmpi sge, %28, %57 : vector<4x128xi32>
    %cst_24 = arith.constant 0.000000e+00 : f32
    %59 = vector.broadcast %cst_24 : f32 to vector<4x128xf32>
    %60 = arith.select %58, %56, %59 : vector<4x128xi1>, vector<4x128xf32>
    %61 = arith.addf %49, %60 : vector<4x128xf32>
    %c3_i32_25 = arith.constant 3 : i32
    %62 = vector.broadcast %c3_i32_25 : i32 to vector<4x128xi32>
    %63 = arith.cmpi slt, %28, %62 : vector<4x128xi32>
    %cst_26 = arith.constant 0.000000e+00 : f32
    %64 = vector.broadcast %cst_26 : f32 to vector<4x128xf32>
    %65 = arith.select %63, %56, %64 : vector<4x128xi1>, vector<4x128xf32>
    %66 = arith.addf %54, %65 : vector<4x128xf32>
    %c0_27 = arith.constant 0 : index
    %c0_28 = arith.constant 0 : index
    %67 = vector.load %arg7[%c0_27, %c0_28] : memref<4x128xf32, #tpu.memory_space<vmem>>, vector<4x128xf32>
    %68 = arith.addf %61, %67 : vector<4x128xf32>
    %c0_29 = arith.constant 0 : index
    %c0_30 = arith.constant 0 : index
    %69 = vector.load %arg5[%c0_29, %c0_30] : memref<4x128xf32, #tpu.memory_space<vmem>>, vector<4x128xf32>
    %70 = arith.mulf %68, %69 : vector<4x128xf32>
    %c0_31 = arith.constant 0 : index
    %c0_32 = arith.constant 0 : index
    %c0_33 = arith.constant 0 : index
    %71 = vector.load %arg6[%c0_31, %c0_32, %c0_33] : memref<1x4x128xf32, #tpu.memory_space<vmem>>, vector<1x4x128xf32>
    %72 = vector.shape_cast %71 : vector<1x4x128xf32> to vector<4x128xf32>
    %73 = vector.shape_cast %70 : vector<4x128xf32> to vector<1x4x128xf32>
    tpu.vector_store %arg6[%c0_31, %c0_32, %c0_33], %73 {strides = array<i32>} : memref<1x4x128xf32, #tpu.memory_space<vmem>>, vector<1x4x128xf32>,
    %c0_34 = arith.constant 0 : index
    %c0_35 = arith.constant 0 : index
    %74 = vector.load %arg7[%c0_34, %c0_35] : memref<4x128xf32, #tpu.memory_space<vmem>>, vector<4x128xf32>
    tpu.vector_store %arg7[%c0_34, %c0_35], %66 {strides = array<i32>} : memref<4x128xf32, #tpu.memory_space<vmem>>, vector<4x128xf32>,
    return
  }
  func.func @transform_0(%arg0: i32, %arg1: i32) -> (i32, i32, i32) {
    %c2_i32 = arith.constant 2 : i32
    %0 = arith.minsi %arg1, %c2_i32 : i32
    %c0_i32 = arith.constant 0 : i32
    %c0_i32_0 = arith.constant 0 : i32
    return %arg0, %c0_i32, %0 : i32, i32, i32
  }
  func.func @transform_1(%arg0: i32, %arg1: i32) -> (i32, i32, i32) {
    %c2_i32 = arith.constant 2 : i32
    %0 = arith.minsi %arg1, %c2_i32 : i32
    %c0_i32 = arith.constant 0 : i32
    %c0_i32_0 = arith.constant 0 : i32
    return %arg0, %c0_i32, %0 : i32, i32, i32
  }
  func.func @transform_2(%arg0: i32, %arg1: i32) -> (i32, i32, i32) {
    %c0_i32 = arith.constant 0 : i32
    %c0_i32_0 = arith.constant 0 : i32
    %c0_i32_1 = arith.constant 0 : i32
    %c0_i32_2 = arith.constant 0 : i32
    return %c0_i32, %c0_i32_0, %c0_i32_1 : i32, i32, i32
  }
  func.func @transform_3(%arg0: i32, %arg1: i32) -> (i32, i32) {
    %c0_i32 = arith.constant 0 : i32
    %c0_i32_0 = arith.constant 0 : i32
    return %c0_i32, %arg1 : i32, i32
  }
  func.func @transform_4(%arg0: i32, %arg1: i32) -> (i32, i32, i32) {
    %c0_i32 = arith.constant 0 : i32
    %c0_i32_0 = arith.constant 0 : i32
    return %arg0, %c0_i32, %arg1 : i32, i32, i32
  }
}

module attributes {stable_mosaic.version = 11 : i64} {
  func.func @kernel(%arg0: i32, %arg1: i32, %arg2: memref<1x8x128xf32, #tpu.memory_space<vmem>>, %arg3: memref<1x8x128xf32, #tpu.memory_space<vmem>>, %arg4: memref<2x16x8xf32, #tpu.memory_space<vmem>>, %arg5: memref<4x128xf32, #tpu.memory_space<vmem>>, %arg6: memref<1x4x128xf32, #tpu.memory_space<vmem>>, %arg7: memref<4x128xf32, #tpu.memory_space<vmem>>) attributes {dimension_semantics = [#tpu.dimension_semantics<parallel>, #tpu.dimension_semantics<arbitrary>], iteration_bounds = array<i64: 2, 4>, scalar_prefetch = 0 : i64, scratch_operands = 1 : i64, tpu.core_type = #tpu.core_type<tc>, window_params = [{transform_indices = @transform_0, window_bounds = array<i64: 1, 8, 128>}, {transform_indices = @transform_1, window_bounds = array<i64: 1, 8, 128>}, {pipeline_mode = #tpu.pipeline_mode<synchronous>, transform_indices = @transform_2, window_bounds = array<i64: 2, 16, 8>}, {transform_indices = @transform_3, window_bounds = array<i64: 4, 128>}, {transform_indices = @transform_4, window_bounds = array<i64: 1, 4, 128>}]} {
    %c0_i32 = arith.constant 0 : i32
    %0 = arith.cmpi eq, %arg1, %c0_i32 : i32
    %1 = arith.extui %0 : i1 to i32
    %c0_i32_0 = arith.constant 0 : i32
    %2 = arith.cmpi ne, %1, %c0_i32_0 : i32
    scf.if %2 {
      %cst_36 = arith.constant 0.000000e+00 : f32
      %71 = vector.broadcast %cst_36 : f32 to vector<4x128xf32>
      %c0_37 = arith.constant 0 : index
      %c0_38 = arith.constant 0 : index
      %72 = vector.load %arg7[%c0_37, %c0_38] : memref<4x128xf32, #tpu.memory_space<vmem>>, vector<4x128xf32>
      tpu.vector_store %arg7[%c0_37, %c0_38], %71 {strides = array<i32>} : memref<4x128xf32, #tpu.memory_space<vmem>>, vector<4x128xf32>,
    } else {
    }
    %c0 = arith.constant 0 : index
    %c0_1 = arith.constant 0 : index
    %c0_2 = arith.constant 0 : index
    %3 = vector.load %arg2[%c0, %c0_1, %c0_2] : memref<1x8x128xf32, #tpu.memory_space<vmem>>, vector<1x8x128xf32>
    %4 = vector.shape_cast %3 : vector<1x8x128xf32> to vector<8x128xf32>
    %c0_3 = arith.constant 0 : index
    %c0_4 = arith.constant 0 : index
    %c0_5 = arith.constant 0 : index
    %5 = vector.load %arg3[%c0_3, %c0_4, %c0_5] : memref<1x8x128xf32, #tpu.memory_space<vmem>>, vector<1x8x128xf32>
    %6 = vector.shape_cast %5 : vector<1x8x128xf32> to vector<8x128xf32>
    %7 = tpu.iota {dimensions = array<i32: 1>} : vector<8x128xi32>
    %c128_i32 = arith.constant 128 : i32
    %8 = arith.muli %arg1, %c128_i32 : i32
    %9 = vector.broadcast %8 : i32 to vector<8x128xi32>
    %10 = arith.addi %7, %9 : vector<8x128xi32>
    %c384_i32 = arith.constant 384 : i32
    %11 = vector.broadcast %c384_i32 : i32 to vector<8x128xi32>
    %12 = arith.cmpi slt, %10, %11 : vector<8x128xi32>
    %cst = arith.constant 0.000000e+00 : f32
    %13 = vector.broadcast %cst : f32 to vector<8x128xf32>
    %14 = arith.select %12, %4, %13 : vector<8x128xi1>, vector<8x128xf32>
    %cst_6 = arith.constant 0.000000e+00 : f32
    %15 = vector.broadcast %cst_6 : f32 to vector<8x128xf32>
    %16 = arith.select %12, %6, %15 : vector<8x128xi1>, vector<8x128xf32>
    %c0_7 = arith.constant 0 : index
    %c0_8 = arith.constant 0 : index
    %c0_9 = arith.constant 0 : index
    %17 = vector.load %arg4[%c0_7, %c0_8, %c0_9] : memref<2x16x8xf32, #tpu.memory_space<vmem>>, vector<1x16x8xf32>
    %18 = vector.shape_cast %17 : vector<1x16x8xf32> to vector<16x8xf32>
    %cst_10 = arith.constant dense<0.000000e+00> : vector<16x128xf32>
    %19 = tpu.matmul %18, %14, %cst_10 {dimension_numbers = #tpu.dot_dimension_numbers<[1], [0], [0], [1], [0, 0, 1, 1], [], []>, precision = #tpu.contract_precision<fp32>} : vector<16x8xf32>, vector<8x128xf32>, vector<16x128xf32> -> vector<16x128xf32>
    %c1 = arith.constant 1 : index
    %c0_11 = arith.constant 0 : index
    %c0_12 = arith.constant 0 : index
    %20 = vector.load %arg4[%c1, %c0_11, %c0_12] : memref<2x16x8xf32, #tpu.memory_space<vmem>>, vector<1x16x8xf32>
    %21 = vector.shape_cast %20 : vector<1x16x8xf32> to vector<16x8xf32>
    %cst_13 = arith.constant dense<0.000000e+00> : vector<16x128xf32>
    %22 = tpu.matmul %21, %16, %cst_13 {dimension_numbers = #tpu.dot_dimension_numbers<[1], [0], [0], [1], [0, 0, 1, 1], [], []>, precision = #tpu.contract_precision<fp32>} : vector<16x8xf32>, vector<8x128xf32>, vector<16x128xf32> -> vector<16x128xf32>
    %23 = arith.addf %19, %22 : vector<16x128xf32>
    %24 = tpu.iota {dimensions = array<i32: 1>} : vector<4x128xi32>
    %25 = vector.extract_strided_slice %23 {offsets = [0, 0], sizes = [4, 128], strides = [1, 1]} : vector<16x128xf32> to vector<4x128xf32>
    %cst_14 = arith.constant 0.000000e+00 : f32
    %26 = vector.broadcast %cst_14 : f32 to vector<4x128xf32>
    %27 = vector.extract_strided_slice %23 {offsets = [4, 0], sizes = [4, 128], strides = [1, 1]} : vector<16x128xf32> to vector<4x128xf32>
    %c1_i32 = arith.constant 1 : i32
    %28 = tpu.dynamic_rotate %27 by %c1_i32 dim 1 : vector<4x128xf32>, i32 -> vector<4x128xf32>
    %c1_i32_15 = arith.constant 1 : i32
    %29 = vector.broadcast %c1_i32_15 : i32 to vector<4x128xi32>
    %30 = arith.cmpi sge, %24, %29 : vector<4x128xi32>
    %cst_16 = arith.constant 0.000000e+00 : f32
    %31 = vector.broadcast %cst_16 : f32 to vector<4x128xf32>
    %32 = arith.select %30, %28, %31 : vector<4x128xi1>, vector<4x128xf32>
    %33 = arith.addf %25, %32 : vector<4x128xf32>
    %c1_i32_17 = arith.constant 1 : i32
    %34 = vector.broadcast %c1_i32_17 : i32 to vector<4x128xi32>
    %35 = arith.cmpi slt, %24, %34 : vector<4x128xi32>
    %cst_18 = arith.constant 0.000000e+00 : f32
    %36 = vector.broadcast %cst_18 : f32 to vector<4x128xf32>
    %37 = arith.select %35, %28, %36 : vector<4x128xi1>, vector<4x128xf32>
    %38 = arith.addf %26, %37 : vector<4x128xf32>
    %39 = vector.extract_strided_slice %23 {offsets = [8, 0], sizes = [4, 128], strides = [1, 1]} : vector<16x128xf32> to vector<4x128xf32>
    %c2_i32 = arith.constant 2 : i32
    %40 = tpu.dynamic_rotate %39 by %c2_i32 dim 1 : vector<4x128xf32>, i32 -> vector<4x128xf32>
    %c2_i32_19 = arith.constant 2 : i32
    %41 = vector.broadcast %c2_i32_19 : i32 to vector<4x128xi32>
    %42 = arith.cmpi sge, %24, %41 : vector<4x128xi32>
    %cst_20 = arith.constant 0.000000e+00 : f32
    %43 = vector.broadcast %cst_20 : f32 to vector<4x128xf32>
    %44 = arith.select %42, %40, %43 : vector<4x128xi1>, vector<4x128xf32>
    %45 = arith.addf %33, %44 : vector<4x128xf32>
    %c2_i32_21 = arith.constant 2 : i32
    %46 = vector.broadcast %c2_i32_21 : i32 to vector<4x128xi32>
    %47 = arith.cmpi slt, %24, %46 : vector<4x128xi32>
    %cst_22 = arith.constant 0.000000e+00 : f32
    %48 = vector.broadcast %cst_22 : f32 to vector<4x128xf32>
    %49 = arith.select %47, %40, %48 : vector<4x128xi1>, vector<4x128xf32>
    %50 = arith.addf %38, %49 : vector<4x128xf32>
    %51 = vector.extract_strided_slice %23 {offsets = [12, 0], sizes = [4, 128], strides = [1, 1]} : vector<16x128xf32> to vector<4x128xf32>
    %c3_i32 = arith.constant 3 : i32
    %52 = tpu.dynamic_rotate %51 by %c3_i32 dim 1 : vector<4x128xf32>, i32 -> vector<4x128xf32>
    %c3_i32_23 = arith.constant 3 : i32
    %53 = vector.broadcast %c3_i32_23 : i32 to vector<4x128xi32>
    %54 = arith.cmpi sge, %24, %53 : vector<4x128xi32>
    %cst_24 = arith.constant 0.000000e+00 : f32
    %55 = vector.broadcast %cst_24 : f32 to vector<4x128xf32>
    %56 = arith.select %54, %52, %55 : vector<4x128xi1>, vector<4x128xf32>
    %57 = arith.addf %45, %56 : vector<4x128xf32>
    %c3_i32_25 = arith.constant 3 : i32
    %58 = vector.broadcast %c3_i32_25 : i32 to vector<4x128xi32>
    %59 = arith.cmpi slt, %24, %58 : vector<4x128xi32>
    %cst_26 = arith.constant 0.000000e+00 : f32
    %60 = vector.broadcast %cst_26 : f32 to vector<4x128xf32>
    %61 = arith.select %59, %52, %60 : vector<4x128xi1>, vector<4x128xf32>
    %62 = arith.addf %50, %61 : vector<4x128xf32>
    %c0_27 = arith.constant 0 : index
    %c0_28 = arith.constant 0 : index
    %63 = vector.load %arg7[%c0_27, %c0_28] : memref<4x128xf32, #tpu.memory_space<vmem>>, vector<4x128xf32>
    %64 = arith.addf %57, %63 : vector<4x128xf32>
    %c0_29 = arith.constant 0 : index
    %c0_30 = arith.constant 0 : index
    %65 = vector.load %arg5[%c0_29, %c0_30] : memref<4x128xf32, #tpu.memory_space<vmem>>, vector<4x128xf32>
    %66 = arith.mulf %64, %65 : vector<4x128xf32>
    %c0_31 = arith.constant 0 : index
    %c0_32 = arith.constant 0 : index
    %c0_33 = arith.constant 0 : index
    %67 = vector.load %arg6[%c0_31, %c0_32, %c0_33] : memref<1x4x128xf32, #tpu.memory_space<vmem>>, vector<1x4x128xf32>
    %68 = vector.shape_cast %67 : vector<1x4x128xf32> to vector<4x128xf32>
    %69 = vector.shape_cast %66 : vector<4x128xf32> to vector<1x4x128xf32>
    tpu.vector_store %arg6[%c0_31, %c0_32, %c0_33], %69 {strides = array<i32>} : memref<1x4x128xf32, #tpu.memory_space<vmem>>, vector<1x4x128xf32>,
    %c0_34 = arith.constant 0 : index
    %c0_35 = arith.constant 0 : index
    %70 = vector.load %arg7[%c0_34, %c0_35] : memref<4x128xf32, #tpu.memory_space<vmem>>, vector<4x128xf32>
    tpu.vector_store %arg7[%c0_34, %c0_35], %62 {strides = array<i32>} : memref<4x128xf32, #tpu.memory_space<vmem>>, vector<4x128xf32>,
    return
  }
  func.func @transform_0(%arg0: i32, %arg1: i32) -> (i32, i32, i32) {
    %c2_i32 = arith.constant 2 : i32
    %0 = arith.minsi %arg1, %c2_i32 : i32
    %c0_i32 = arith.constant 0 : i32
    %c0_i32_0 = arith.constant 0 : i32
    return %arg0, %c0_i32, %0 : i32, i32, i32
  }
  func.func @transform_1(%arg0: i32, %arg1: i32) -> (i32, i32, i32) {
    %c2_i32 = arith.constant 2 : i32
    %0 = arith.minsi %arg1, %c2_i32 : i32
    %c0_i32 = arith.constant 0 : i32
    %c0_i32_0 = arith.constant 0 : i32
    return %arg0, %c0_i32, %0 : i32, i32, i32
  }
  func.func @transform_2(%arg0: i32, %arg1: i32) -> (i32, i32, i32) {
    %c0_i32 = arith.constant 0 : i32
    %c0_i32_0 = arith.constant 0 : i32
    %c0_i32_1 = arith.constant 0 : i32
    %c0_i32_2 = arith.constant 0 : i32
    return %c0_i32, %c0_i32_0, %c0_i32_1 : i32, i32, i32
  }
  func.func @transform_3(%arg0: i32, %arg1: i32) -> (i32, i32) {
    %c0_i32 = arith.constant 0 : i32
    %c0_i32_0 = arith.constant 0 : i32
    return %c0_i32, %arg1 : i32, i32
  }
  func.func @transform_4(%arg0: i32, %arg1: i32) -> (i32, i32, i32) {
    %c0_i32 = arith.constant 0 : i32
    %c0_i32_0 = arith.constant 0 : i32
    return %arg0, %c0_i32, %arg1 : i32, i32, i32
  }
}

</mosaic_0001>

<llo_original>
// kernel: tpu_custom_call.1
$region0: #{tpu_custom_call.1}
  #allocation0 [shape = 'u32[]', space=smem, size = 0x4, offset = 0x4, fixed_abs, tag = 'smem constant byte address 0x4 - core index']
  #allocation1 [shape = 'u32[144,128]{1,0:T(1,128)}', space=vmem, size = 0x12000, scoped, tag = 'internal scratch']
  #allocation2 [shape = 'f32[4,128]{1,0:T(4,128)}', space=vmem, size = 0x800, scoped, tag = 'scratch operand']
  %s0 = inlined_call_operand.vmem [shape: f32[2,8,384], index: 0, kind: input, shape index: {}]
  %s1 = inlined_call_operand.hbm [shape: f32[2,8,384], index: 1, kind: input, shape index: {}]
  %s2 = inlined_call_operand.vmem [shape: f32[2,16,8], index: 2, kind: input, shape index: {}]
  %s3 = inlined_call_operand.hbm [shape: f32[4,512], index: 3, kind: input, shape index: {}]
  %s4 = inlined_call_operand.hbm [shape: f32[2,4,512], index: 4, kind: output, shape index: {}]
  %s5 = sld [smem:[#allocation0]]
  $region61: #{tpu_custom_call.1} parent=0
    _
  %s7 = ssub.s32 1, %s5
  %s8 = scalar_select 0, %s7, %s5
  $region1: #{tpu_custom_call.1} parent=0
    #allocation3 [shape = 'u8[8192]{0}', space=vmem, size = 0x2000, scoped, tag = 'input window, operand 1']
    #allocation4 [shape = 's32[2]{0}', space=sflag, size = 0x8, scoped, tag = 'scoped memory for tpu_custom_call.1']
    #allocation5 [shape = 's32[2]{0}', space=sflag, size = 0x8, scoped, tag = 'scoped memory for tpu_custom_call.1']
    #allocation6 [shape = 'u8[4096]{0}', space=vmem, size = 0x1000, scoped, tag = 'input window, operand 3']
    #allocation7 [shape = 's32[2]{0}', space=sflag, size = 0x8, scoped, tag = 'scoped memory for tpu_custom_call.1']
    #allocation8 [shape = 'u8[4096]{0}', space=vmem, size = 0x1000, scoped, tag = 'output window, operand 0']
    %9 = vsyncpa [#allocation4], 0
    %s10 = scalar_lea.sflag [#allocation4], 1
    %11 = vsyncpa %s10, 0
    %12 = vsyncpa [#allocation7], 0
    %s13 = scalar_lea.sflag [#allocation7], 1
    %14 = vsyncpa %s13, 0
    %15 = vsyncpa [#allocation5], 0
    %s16 = scalar_lea.sflag [#allocation5], 1
    %17 = vsyncpa %s16, 0
    loop: start=0, step=1, limit=10
    $region2: #{tpu_custom_call.1} parent=1 // loop_pre_header
      _
    $region3: #{tpu_custom_call.1} parent=1 // loop_header
      %s19 = sphi 0, %s23
      %p20 = scmp.ge.s32.totalorder %s19, 10
      %s26 = sphi 0, %s38
      %s27 = sphi 0, %s34
      %s28 = sphi 0, %s26
      %s29 = sphi 0, %s27
      %s30 = sphi 0, %s28
      %s31 = sphi 0, %s29
      %s47 = sphi 0, %s49
      %s50 = sphi 0, %s47
      %s51 = sphi 0, %s50
      %s67 = sphi 0, %s51
      %s79 = sphi 0, %s81
      %s82 = sphi 0, %s79
      %s83 = sphi 0, %s82
      %s99 = sphi 0, %s83
      %s103 = sphi 0, %s103
      %s105 = sphi 0, %s103
      %s106 = sphi 0, %s105
      %s120 = sphi 0, %s106
      %s126 = sphi 0, %s128
      %s129 = sphi 0, %s126
      %s130 = sphi 0, %s129
      %s146 = sphi 0, %s130
      %s154 = sphi 0, %s156
      %s157 = sphi 0, %s154
      %s158 = sphi 0, %s157
      %s174 = sphi 0, %s158
    $region4: #{tpu_custom_call.1} parent=1 // loop_header_branch
      %22 = sbr.rel (%p20) target = $region8
    $region5: #{tpu_custom_call.1} parent=1 // loop_body
      %s24 = ssub.s32 %s19, 1
      %s25 = ssub.s32 %s19, 2
      %s32 = sadd.s32 1, %s27
      %p33 = scmp.ge.s32.totalorder %s32, 4
      %s34 = scalar_select %p33, 0, %s32
      %s35 = sadd.s32 1, %s26
      %s36 = scalar_select %p33, %s35, %s26
      %p37 = scmp.ge.s32.totalorder %s36, 2
      %s38 = scalar_select %p37, 0, %s36
      %p39 = scmp.lt.s32.totalorder %s27, 2
      %s40 = scalar_select %p39, %s27, 2
      %p41 = scmp.lt.s32.totalorder %s34, 2
      %s42 = scalar_select %p41, %s34, 2
      %s43 = ssub.s32 %s26, %s38
      %s44 = ssub.s32 %s40, %s42
      %s45 = sor.u32 %s43, %s44
      %p46 = scmp.eq.s32.totalorder %s45, 0
      %s48 = sadd.s32 %s47, 1
      %s49 = scalar_select %p46, %s47, %s48
      %p52 = pneg %p46
      %p53 = scmp.eq.s32.totalorder %s19, 7
      %p54 = por %p52, %p53
      %p55 = scmp.ne.s32.totalorder %s47, %s50
      %p56 = scmp.eq.s32.totalorder %s19, 0
      %p57 = por %p55, %p56
      %p58 = scmp.ne.s32.totalorder %s47, %s50
      %p59 = scmp.eq.s32.totalorder %s24, 7
      %p60 = por %p58, %p59
      %p61 = scmp.ne.s32.totalorder %s50, %s51
      %p62 = scmp.eq.s32.totalorder %s24, 0
      %p63 = por %p61, %p62
      %p64 = scmp.ne.s32.totalorder %s50, %s51
      %p65 = scmp.eq.s32.totalorder %s25, 7
      %p66 = por %p64, %p65
      %p68 = scmp.ne.s32.totalorder %s51, %s67
      %p69 = scmp.eq.s32.totalorder %s25, 0
      %p70 = por %p68, %p69
      %p71 = scmp.lt.s32.totalorder %s27, 2
      %s72 = scalar_select %p71, %s27, 2
      %p73 = scmp.lt.s32.totalorder %s34, 2
      %s74 = scalar_select %p73, %s34, 2
      %s75 = ssub.s32 %s26, %s38
      %s76 = ssub.s32 %s72, %s74
      %s77 = sor.u32 %s75, %s76
      %p78 = scmp.eq.s32.totalorder %s77, 0
      %s80 = sadd.s32 %s79, 1
      %s81 = scalar_select %p78, %s79, %s80
      %p84 = pneg %p78
      %p85 = scmp.eq.s32.totalorder %s19, 7
      %p86 = por %p84, %p85
      %p87 = scmp.ne.s32.totalorder %s79, %s82
      %p88 = scmp.eq.s32.totalorder %s19, 0
      %p89 = por %p87, %p88
      %p90 = scmp.ne.s32.totalorder %s79, %s82
      %p91 = scmp.eq.s32.totalorder %s24, 7
      %p92 = por %p90, %p91
      %p93 = scmp.ne.s32.totalorder %s82, %s83
      %p94 = scmp.eq.s32.totalorder %s24, 0
      %p95 = por %p93, %p94
      %p96 = scmp.ne.s32.totalorder %s82, %s83
      %p97 = scmp.eq.s32.totalorder %s25, 7
      %p98 = por %p96, %p97
      %p100 = scmp.ne.s32.totalorder %s83, %s99
      %p101 = scmp.eq.s32.totalorder %s25, 0
      %p102 = por %p100, %p101
      %s104 = sadd.s32 %s103, 1
      %p107 = scmp.eq.s32.totalorder %s19, 7
      %p108 = scmp.ne.s32.totalorder %s103, %s105
      %p109 = scmp.eq.s32.totalorder %s19, 0
      %p110 = por %p108, %p109
      %p111 = scmp.ne.s32.totalorder %s103, %s105
      %p112 = scmp.eq.s32.totalorder %s24, 7
      %p113 = por %p111, %p112
      %p114 = scmp.ne.s32.totalorder %s105, %s106
      %p115 = scmp.eq.s32.totalorder %s24, 0
      %p116 = por %p114, %p115
      %p117 = scmp.ne.s32.totalorder %s105, %s106
      %p118 = scmp.eq.s32.totalorder %s25, 7
      %p119 = por %p117, %p118
      %p121 = scmp.ne.s32.totalorder %s106, %s120
      %p122 = scmp.eq.s32.totalorder %s25, 0
      %p123 = por %p121, %p122
      %s124 = ssub.s32 %s27, %s34
      %p125 = scmp.eq.s32.totalorder %s124, 0
      %s127 = sadd.s32 %s126, 1
      %s128 = scalar_select %p125, %s126, %s127
      %p131 = pneg %p125
      %p132 = scmp.eq.s32.totalorder %s19, 7
      %p133 = por %p131, %p132
      %p134 = scmp.ne.s32.totalorder %s126, %s129
      %p135 = scmp.eq.s32.totalorder %s19, 0
      %p136 = por %p134, %p135
      %p137 = scmp.ne.s32.totalorder %s126, %s129
      %p138 = scmp.eq.s32.totalorder %s24, 7
      %p139 = por %p137, %p138
      %p140 = scmp.ne.s32.totalorder %s129, %s130
      %p141 = scmp.eq.s32.totalorder %s24, 0
      %p142 = por %p140, %p141
      %p143 = scmp.ne.s32.totalorder %s129, %s130
      %p144 = scmp.eq.s32.totalorder %s25, 7
      %p145 = por %p143, %p144
      %p147 = scmp.ne.s32.totalorder %s130, %s146
      %p148 = scmp.eq.s32.totalorder %s25, 0
      %p149 = por %p147, %p148
      %s150 = ssub.s32 %s26, %s38
      %s151 = ssub.s32 %s27, %s34
      %s152 = sor.u32 %s150, %s151
      %p153 = scmp.eq.s32.totalorder %s152, 0
      %s155 = sadd.s32 %s154, 1
      %s156 = scalar_select %p153, %s154, %s155
      %p159 = pneg %p153
      %p160 = scmp.eq.s32.totalorder %s19, 7
      %p161 = por %p159, %p160
      %p162 = scmp.ne.s32.totalorder %s154, %s157
      %p163 = scmp.eq.s32.totalorder %s19, 0
      %p164 = por %p162, %p163
      %p165 = scmp.ne.s32.totalorder %s154, %s157
      %p166 = scmp.eq.s32.totalorder %s24, 7
      %p167 = por %p165, %p166
      %p168 = scmp.ne.s32.totalorder %s157, %s158
      %p169 = scmp.eq.s32.totalorder %s24, 0
      %p170 = por %p168, %p169
      %p171 = scmp.ne.s32.totalorder %s157, %s158
      %p172 = scmp.eq.s32.totalorder %s25, 7
      %p173 = por %p171, %p172
      %p175 = scmp.ne.s32.totalorder %s158, %s174
      %p176 = scmp.eq.s32.totalorder %s25, 0
      %p177 = por %p175, %p176
      %p178 = scmp.le.s32.totalorder 1, %s19
      %p179 = scmp.lt.s32.totalorder %s19, 9
      %p180 = pnand %p178, %p179
      %p181 = pneg %p180
      // Predicated region
      $region9: #{tpu_custom_call.1} parent=5 // pred_check
        _
      $region10: #{tpu_custom_call.1} parent=5 // pred_check_branch
        %183 = sbr.rel (%p180) target = $region12
      $region11: #{tpu_custom_call.1} parent=5 // pred_region
        %s184 = ssub.s32 %s19, 1
        // Predicated region
        $region13: #{tpu_custom_call.1} parent=11 // pred_check
          %p185 = pneg %p116
        $region14: #{tpu_custom_call.1} parent=11 // pred_check_branch
          %187 = sbr.rel (%p185) target = $region16
        $region15: #{tpu_custom_call.1} parent=11 // pred_region
          _
        $region16: #{tpu_custom_call.1} parent=11 // pred_fallthru
          _
      $region12: #{tpu_custom_call.1} parent=5 // pred_fallthru
        _
      %p188 = scmp.lt.s32.totalorder %s19, 8
      // Predicated region
      $region17: #{tpu_custom_call.1} parent=5 // pred_check
        %p189 = pneg %p188
      $region18: #{tpu_custom_call.1} parent=5 // pred_check_branch
        %191 = sbr.rel (%p189) target = $region20
      $region19: #{tpu_custom_call.1} parent=5 // pred_region
        // Predicated region
        $region21: #{tpu_custom_call.1} parent=19 // pred_check
          %p192 = pneg %p57
        $region22: #{tpu_custom_call.1} parent=19 // pred_check_branch
          %194 = sbr.rel (%p192) target = $region24
        $region23: #{tpu_custom_call.1} parent=19 // pred_region
          %p195 = scmp.lt.s32.totalorder %s27, 2
          %s196 = scalar_select %p195, %s27, 2
          %p197 = scmp.lt.s32.totalorder %s26, 1
          %s198 = scalar_select %p197, %s26, 1
          %p199 = scmp.lt.s32.totalorder %s196, 2
          %s200 = scalar_select %p199, %s196, 2
          %s201 = smul.addr %s198, 3
          %s202 = sadd.s32 %s200, %s201
          %s203 = smul.addr %s202, 8
          %s204 = scalar_lea.vmem %s0, %s203
          %p205 = scmp.lt.s32.totalorder %s27, 2
          %s206 = scalar_select %p205, %s27, 2
        $region24: #{tpu_custom_call.1} parent=19 // pred_fallthru
          _
        // Predicated region
        $region25: #{tpu_custom_call.1} parent=19 // pred_check
          %p207 = pneg %p89
        $region26: #{tpu_custom_call.1} parent=19 // pred_check_branch
          %209 = sbr.rel (%p207) target = $region28
        $region27: #{tpu_custom_call.1} parent=19 // pred_region
          %s210 = sand.u32 %s79, 1
          %s211 = scalar_lea.sflag [#allocation4], %s210
          %s212 = sand.u32 %s79, 1
          %s213 = smul.addr %s212, 8
          %s214 = scalar_lea.vmem [#allocation3], %s213
          %p215 = scmp.lt.s32.totalorder %s27, 2
          %s216 = scalar_select %p215, %s27, 2
          %s218 = ssub.s32 128, 128
          %219 = vsyncadd %s211, %s218
          %s220 = smul.addr %s26, 3
          %s221 = sadd.s32 %s216, %s220
          %s222 = smul.addr %s221, 128
          %s223 = scalar_lea.hbm %s1, %s222
          %s225 = sshll.u32 %s214, 4
          %s226 = int_to_ptr.vmem [resolvable:$true] %s225
          %228 = dma.hbm_to_vmem [thread:$0]  %s223, 128, %s226, %s211
        $region28: #{tpu_custom_call.1} parent=19 // pred_fallthru
          _
        // Predicated region
        $region29: #{tpu_custom_call.1} parent=19 // pred_check
          %p229 = pneg %p136
        $region30: #{tpu_custom_call.1} parent=19 // pred_check_branch
          %231 = sbr.rel (%p229) target = $region32
        $region31: #{tpu_custom_call.1} parent=19 // pred_region
          %s232 = sand.u32 %s126, 1
          %s233 = scalar_lea.sflag [#allocation7], %s232
          %s234 = sand.u32 %s126, 1
          %s235 = smul.addr %s234, 4
          %s236 = scalar_lea.vmem [#allocation6], %s235
          %s238 = ssub.s32 64, 64
          %239 = vsyncadd %s233, %s238
          %s240 = smul.addr %s27, 64
          %s241 = scalar_lea.hbm %s3, %s240
          %s243 = sshll.u32 %s236, 4
          %s244 = int_to_ptr.vmem [resolvable:$true] %s243
          %246 = dma.hbm_to_vmem [thread:$0]  %s241, 64, %s244, %s233
        $region32: #{tpu_custom_call.1} parent=19 // pred_fallthru
          _
      $region20: #{tpu_custom_call.1} parent=5 // pred_fallthru
        _
      %p247 = scmp.le.s32.totalorder 1, %s19
      %p248 = scmp.lt.s32.totalorder %s19, 9
      %p249 = pnand %p247, %p248
      %p250 = pneg %p249
      // Predicated region
      $region33: #{tpu_custom_call.1} parent=5 // pred_check
        _
      $region34: #{tpu_custom_call.1} parent=5 // pred_check_branch
        %252 = sbr.rel (%p249) target = $region36
      $region35: #{tpu_custom_call.1} parent=5 // pred_region
        %s253 = ssub.s32 %s19, 1
        %s254 = sand.u32 %s82, 1
        %s255 = scalar_lea.sflag [#allocation4], %s254
        %s256 = sand.u32 %s82, 1
        %s257 = smul.addr %s256, 8
        %s258 = scalar_lea.vmem [#allocation3], %s257
        // Predicated region
        $region37: #{tpu_custom_call.1} parent=35 // pred_check
          %p259 = pneg %p95
        $region38: #{tpu_custom_call.1} parent=35 // pred_check_branch
          %261 = sbr.rel (%p259) target = $region40
        $region39: #{tpu_custom_call.1} parent=35 // pred_region
          %262 = dma.done %s255, 128
        $region40: #{tpu_custom_call.1} parent=35 // pred_fallthru
          _
        %s263 = sand.u32 %s129, 1
        %s264 = scalar_lea.sflag [#allocation7], %s263
        %s265 = sand.u32 %s129, 1
        %s266 = smul.addr %s265, 4
        %s267 = scalar_lea.vmem [#allocation6], %s266
        // Predicated region
        $region41: #{tpu_custom_call.1} parent=35 // pred_check
          %p268 = pneg %p142
        $region42: #{tpu_custom_call.1} parent=35 // pred_check_branch
          %270 = sbr.rel (%p268) target = $region44
        $region43: #{tpu_custom_call.1} parent=35 // pred_region
          %271 = dma.done %s264, 64
        $region44: #{tpu_custom_call.1} parent=35 // pred_fallthru
          _
        %p272 = scmp.lt.s32.totalorder %s29, 2
        %s273 = scalar_select %p272, %s29, 2
        %p274 = scmp.lt.s32.totalorder %s28, 1
        %s275 = scalar_select %p274, %s28, 1
        %p276 = scmp.lt.s32.totalorder %s273, 2
        %s277 = scalar_select %p276, %s273, 2
        %s278 = smul.addr %s275, 3
        %s279 = sadd.s32 %s277, %s278
        %s280 = smul.addr %s279, 8
        %s281 = scalar_lea.vmem %s0, %s280
        %p282 = pneg %p63
        %p283 = pneg %p60
        %s284 = sand.u32 %s82, 1
        %s285 = scalar_lea.sflag [#allocation4], %s284
        %s286 = sand.u32 %s82, 1
        %s287 = smul.addr %s286, 8
        %s288 = scalar_lea.vmem [#allocation3], %s287
        %p289 = pneg %p95
        %p290 = pneg %p92
        %p291 = pneg %p116
        %p292 = pneg %p113
        %s293 = sand.u32 %s129, 1
        %s294 = scalar_lea.sflag [#allocation7], %s293
        %s295 = sand.u32 %s129, 1
        %s296 = smul.addr %s295, 4
        %s297 = scalar_lea.vmem [#allocation6], %s296
        %p298 = pneg %p142
        %p299 = pneg %p139
        %p300 = pneg %p170
        %p301 = pneg %p167
        %s302 = sand.u32 %s157, 1
        %s303 = scalar_lea.sflag [#allocation5], %s302
        %s304 = sand.u32 %s157, 1
        %s305 = smul.addr %s304, 4
        %s306 = scalar_lea.vmem [#allocation8], %s305
        %p307 = scmp.lt.s32.totalorder %s29, 2
        %s308 = scalar_select %p307, %s29, 2
        %p309 = scmp.lt.s32.totalorder %s28, 1
        %s310 = scalar_select %p309, %s28, 1
        %p311 = scmp.lt.s32.totalorder %s308, 2
        %s312 = scalar_select %p311, %s308, 2
        %s313 = smul.addr %s310, 3
        %s314 = sadd.s32 %s312, %s313
        %s315 = smul.addr %s314, 8
        %s316 = scalar_lea.vmem %s0, %s315
        %p317 = scmp.lt.s32.totalorder %s29, 2
        %s318 = scalar_select %p317, %s29, 2
        %p319 = scmp.lt.s32.totalorder %s29, 2
        %s320 = scalar_select %p319, %s29, 2
        %p321 = scmp.eq.s32.totalorder %s29, 0
        // Predicated region
        $region45: #{tpu_custom_call.1} parent=35 // pred_check
          %p322 = pneg %p321
        $region46: #{tpu_custom_call.1} parent=35 // pred_check_branch
          %324 = sbr.rel (%p322) target = $region48
        $region47: #{tpu_custom_call.1} parent=35 // pred_region
          %325 = vst [vmem:[#allocation2] sm:$0xf] 0.0
        $region48: #{tpu_custom_call.1} parent=35 // pred_fallthru
          _
        %v326 = vld [vmem:[%s316] sm:$0xff]
        %v327 = vld [vmem:[%s258] sm:$0xff]
        %v328 = vlaneseq
        %v329 = vand.u32 %v328, 127
        %s330 = smul.u32 %s29, 128
        %v331 = vstv %s330
        %v332 = vadd.s32 %v329, %v331
        %vm333 = vcmp.lt.s32.totalorder %v332, 384
        %v334 = vand.u32 2147483647, %v327
        %vm335 = vcmp.le.f32.partialorder %v334, 0.7853982
        %vm336 = vcmp.lt.s32.totalorder %v327, 0
        %v337 = vand.u32 %v327, 2139095040
        %v338 = vshrl.u32 %v337, 23
        %v339 = vsub.s32 %v338, 127
        %v340 = vand.u32 2147483647, %v327
        %v341 = vand.u32 %v340, 8388607
        %v342 = vor.u32 %v341, 8388608
        %v343 = vsub.s32 0, %v342
        %v344 = vadd.s32 %v339, 1
        %vm345 = vcmp.gt.s32.totalorder %v344, 0
        %v346 = vsel %vm345, %v344, 0
        %v347 = vshrl.u32 %v346, 5
        %v348 = vand.u32 %v346, 31
        %v349 = vsub.s32 32, %v348
        %v350 = vshrl.u32 683565275, %v349
        %v351 = vshll.u32 683565275, %v348
        %v352 = vshrl.u32 2475754826, %v349
        %v353 = vor.u32 %v351, %v352
        %v354 = vshll.u32 2475754826, %v348
        %v355 = vshrl.u32 2131351028, %v349
        %v356 = vor.u32 %v354, %v355
        %v357 = vshll.u32 2131351028, %v348
        %v358 = vshrl.u32 2102212464, %v349
        %v359 = vor.u32 %v357, %v358
        %v360 = vshll.u32 2102212464, %v348
        %v361 = vshrl.u32 920167782, %v349
        %v362 = vor.u32 %v360, %v361
        %v363 = vshll.u32 920167782, %v348
        %v364 = vshrl.u32 1326507024, %v349
        %v365 = vor.u32 %v363, %v364
        %vm366 = vcmp.lt.s32.totalorder %v347, 1
        %vm367 = vcmp.lt.s32.totalorder %v347, 2
        %vm368 = vcmp.lt.s32.totalorder %v347, 3
        %vm369 = vcmp.lt.s32.totalorder %v347, 4
        %v370 = vsel %vm366, %v350, %v353
        %v371 = vsel %vm369, %v359, 2102212464
        %v372 = vsel %vm368, %v356, %v371
        %v373 = vsel %vm367, %v370, %v372
        %v374 = vsel %vm366, %v353, %v356
        %v375 = vsel %vm369, %v362, 920167782
        %v376 = vsel %vm368, %v359, %v375
        %v377 = vsel %vm367, %v374, %v376
        %v378 = vsel %vm366, %v356, %v359
        %v379 = vsel %vm369, %v365, 1326507024
        %v380 = vsel %vm368, %v362, %v379
        %v381 = vsel %vm367, %v378, %v380
        %v382 = vshll.u32 %v342, 8
        %v383 = vmul.u32.u64.compose %v382, %v381
        %v384 = vextract.low.u32 %v383
        %v385 = vextract.high.u32 %v383
        %v386 = vmul.u32.u64.compose %v382, %v377
        %v387 = vextract.low.u32 %v386
        %v388 = vextract.high.u32 %v386
        %v389 = vmul.u32 %v382, %v373
        %v390 = vadd.s32 %v385, %v387
        %vm391 = vc.u32 %v385, %v387
        %v392 = vadd.s32 %v388, 1
        %v393 = vsel %vm391, %v392, %v388
        %v394 = vadd.s32 %v389, %v393
        %v395 = vadd.s32 %v394, 536870912
        %v396 = vshrl.u32 %v395, 30
        %v397 = vshll.u32 %v396, 30
        %v398 = vsub.s32 %v394, %v397
        %vm399 = vcmp.lt.s32.totalorder %v398, 0
        %v400 = vsub.s32 0, %v398
        %v401 = vsel %vm399, %v400, %v398
        %v402 = vclz %v401
        %v403 = vsub.s32 %v402, 2
        %vm404 = vcmp.gt.s32.totalorder 0, %v403
        %v405 = vsel %vm404, 0, %v403
        %v406 = vsub.s32 32, %v405
        %v407 = vshll.u32 %v398, %v405
        %v408 = vshrl.u32 %v390, %v406
        %v409 = vor.u32 %v407, %v408
        %v410 = vsub.s32 4294967266, %v405
        %v411 = vadd.s32 %v410, 127
        %v412 = vshll.u32 %v411, 23
        %v413 = vor.u32 4788187, %v412
        %v414 = vand.u32 2147483647, %v413
        %v416 = vcvt.s32.f32 %v409
        %v417 = vmul.f32 %v416, %v414
        %v418 = vxor.u32 %v417, 2147483648
        %v419 = vsel %vm336, %v418, %v417
        %v420 = vsub.s32 4, %v396
        %v421 = vsel %vm336, %v420, %v396
        %v422 = vsel %vm335, %v327, %v419
        %v423 = vsel %vm335, 0, %v421
        %v424 = vcosq.f32.pop %v422
        %v425 = vsinq.f32.pop %v422
        %vm426 = vweird.f32 %v327
        %v427 = vand.u32 %v423, 3
        %vm428 = vcmp.lt.s32.totalorder %v427, 2
        %vm429 = vcmp.eq.s32.totalorder %v427, 0
        %v430 = vxor.u32 %v425, 2147483648
        %v431 = vsel %vm429, %v424, %v430
        %vm432 = vcmp.eq.s32.totalorder %v427, 2
        %v433 = vxor.u32 %v424, 2147483648
        %v434 = vsel %vm432, %v433, %v425
        %v435 = vsel %vm428, %v431, %v434
        %v436 = vsel %vm426, nan, %v435
        %v437 = vmul.f32 %v326, %v436
        %v438 = vsel %vm333, %v437, 0.0
        %v439 = vand.u32 2147483647, %v327
        %vm440 = vcmp.le.f32.partialorder %v439, 0.7853982
        %vm441 = vcmp.lt.s32.totalorder %v327, 0
        %v442 = vand.u32 %v327, 2139095040
        %v443 = vshrl.u32 %v442, 23
        %v444 = vsub.s32 %v443, 127
        %v445 = vand.u32 2147483647, %v327
        %v446 = vand.u32 %v445, 8388607
        %v447 = vor.u32 %v446, 8388608
        %v448 = vsub.s32 0, %v447
        %v449 = vadd.s32 %v444, 1
        %vm450 = vcmp.gt.s32.totalorder %v449, 0
        %v451 = vsel %vm450, %v449, 0
        %v452 = vshrl.u32 %v451, 5
        %v453 = vand.u32 %v451, 31
        %v454 = vsub.s32 32, %v453
        %v455 = vshrl.u32 683565275, %v454
        %v456 = vshll.u32 683565275, %v453
        %v457 = vshrl.u32 2475754826, %v454
        %v458 = vor.u32 %v456, %v457
        %v459 = vshll.u32 2475754826, %v453
        %v460 = vshrl.u32 2131351028, %v454
        %v461 = vor.u32 %v459, %v460
        %v462 = vshll.u32 2131351028, %v453
        %v463 = vshrl.u32 2102212464, %v454
        %v464 = vor.u32 %v462, %v463
        %v465 = vshll.u32 2102212464, %v453
        %v466 = vshrl.u32 920167782, %v454
        %v467 = vor.u32 %v465, %v466
        %v468 = vshll.u32 920167782, %v453
        %v469 = vshrl.u32 1326507024, %v454
        %v470 = vor.u32 %v468, %v469
        %vm471 = vcmp.lt.s32.totalorder %v452, 1
        %vm472 = vcmp.lt.s32.totalorder %v452, 2
        %vm473 = vcmp.lt.s32.totalorder %v452, 3
        %vm474 = vcmp.lt.s32.totalorder %v452, 4
        %v475 = vsel %vm471, %v455, %v458
        %v476 = vsel %vm474, %v464, 2102212464
        %v477 = vsel %vm473, %v461, %v476
        %v478 = vsel %vm472, %v475, %v477
        %v479 = vsel %vm471, %v458, %v461
        %v480 = vsel %vm474, %v467, 920167782
        %v481 = vsel %vm473, %v464, %v480
        %v482 = vsel %vm472, %v479, %v481
        %v483 = vsel %vm471, %v461, %v464
        %v484 = vsel %vm474, %v470, 1326507024
        %v485 = vsel %vm473, %v467, %v484
        %v486 = vsel %vm472, %v483, %v485
        %v487 = vshll.u32 %v447, 8
        %v488 = vmul.u32.u64.compose %v487, %v486
        %v489 = vextract.low.u32 %v488
        %v490 = vextract.high.u32 %v488
        %v491 = vmul.u32.u64.compose %v487, %v482
        %v492 = vextract.low.u32 %v491
        %v493 = vextract.high.u32 %v491
        %v494 = vmul.u32 %v487, %v478
        %v495 = vadd.s32 %v490, %v492
        %vm496 = vc.u32 %v490, %v492
        %v497 = vadd.s32 %v493, 1
        %v498 = vsel %vm496, %v497, %v493
        %v499 = vadd.s32 %v494, %v498
        %v500 = vadd.s32 %v499, 536870912
        %v501 = vshrl.u32 %v500, 30
        %v502 = vshll.u32 %v501, 30
        %v503 = vsub.s32 %v499, %v502
        %vm504 = vcmp.lt.s32.totalorder %v503, 0
        %v505 = vsub.s32 0, %v503
        %v506 = vsel %vm504, %v505, %v503
        %v507 = vclz %v506
        %v508 = vsub.s32 %v507, 2
        %vm509 = vcmp.gt.s32.totalorder 0, %v508
        %v510 = vsel %vm509, 0, %v508
        %v511 = vsub.s32 32, %v510
        %v512 = vshll.u32 %v503, %v510
        %v513 = vshrl.u32 %v495, %v511
        %v514 = vor.u32 %v512, %v513
        %v515 = vsub.s32 4294967266, %v510
        %v516 = vadd.s32 %v515, 127
        %v517 = vshll.u32 %v516, 23
        %v518 = vor.u32 4788187, %v517
        %v519 = vand.u32 2147483647, %v518
        %v521 = vcvt.s32.f32 %v514
        %v522 = vmul.f32 %v521, %v519
        %v523 = vxor.u32 %v522, 2147483648
        %v524 = vsel %vm441, %v523, %v522
        %v525 = vsub.s32 4, %v501
        %v526 = vsel %vm441, %v525, %v501
        %v527 = vsel %vm440, %v327, %v524
        %v528 = vsel %vm440, 0, %v526
        %v529 = vcosq.f32.pop %v527
        %v530 = vsinq.f32.pop %v527
        %vm531 = vweird.f32 %v327
        %v532 = vadd.s32 %v528, 3
        %v533 = vand.u32 %v532, 3
        %vm534 = vcmp.lt.s32.totalorder %v533, 2
        %vm535 = vcmp.eq.s32.totalorder %v533, 0
        %v536 = vxor.u32 %v530, 2147483648
        %v537 = vsel %vm535, %v529, %v536
        %vm538 = vcmp.eq.s32.totalorder %v533, 2
        %v539 = vxor.u32 %v529, 2147483648
        %v540 = vsel %vm538, %v539, %v530
        %v541 = vsel %vm534, %v537, %v540
        %v542 = vsel %vm531, nan, %v541
        %v543 = vmul.f32 %v326, %v542
        %v544 = vsel %vm333, %v543, 0.0
        %v545 = vld [vmem:[%s2] sm:$0xff]
        %v546 = vld [vmem:[%s2 + $0x8] sm:$0xff]
        %s547 = scalar_lea.vmem %s2, 16
        %v548 = vld [vmem:[%s547] sm:$0xff]
        %v549 = vld [vmem:[%s547 + $0x8] sm:$0xff]
        %vm550 = vcmask 64512
        %v552 = vsel %vm550, %v548, 0
        %v555 = vsel %vm550, %v549, 0
        %557 = vmatprep.subr.mxu0 0.0
        %v558 = vand.u32 %v544, 4294901760
        %559 = vmatpush1.msra.mxu0 %v558
        %560 = vmatprep.subr.mxu0 0.0
        %561 = vmatpush1.msra.mxu0 0.0
        %562 = vmatprep.subr.mxu0 0.0
        %563 = vmatpush1.msra.mxu0 0.0
        %564 = vmatprep.subr.mxu0 0.0
        %565 = vmatpush1.msra.mxu0 0.0
        %566 = vmatprep.subr.mxu0 0.0
        %567 = vmatpush1.msra.mxu0 0.0
        %568 = vmatprep.subr.mxu0 0.0
        %569 = vmatpush1.msra.mxu0 0.0
        %570 = vmatprep.subr.mxu0 0.0
        %571 = vmatpush1.msra.mxu0 0.0
        %572 = vmatprep.subr.mxu0 0.0
        %573 = vmatpush1.msra.mxu0 0.0
        %574 = vmatprep.subr.mxu0 0.0
        %575 = vmatpush1.msra.mxu0 0.0
        %576 = vmatprep.subr.mxu0 0.0
        %577 = vmatpush1.msra.mxu0 0.0
        %578 = vmatprep.subr.mxu0 0.0
        %579 = vmatpush1.msra.mxu0 0.0
        %580 = vmatprep.subr.mxu0 0.0
        %581 = vmatpush1.msra.mxu0 0.0
        %582 = vmatprep.subr.mxu0 0.0
        %583 = vmatpush1.msra.mxu0 0.0
        %584 = vmatprep.subr.mxu0 0.0
        %585 = vmatpush1.msra.mxu0 0.0
        %586 = vmatprep.subr.mxu0 0.0
        %587 = vmatpush1.msra.mxu0 0.0
        %588 = vmatprep.subr.mxu0 0.0
        %589 = vmatpush1.msra.mxu0 0.0
        %590 = vmatprep.subr.mxu0 0.0
        %591 = vmatpush1.msra.mxu0 0.0
        %592 = vmatprep.subr.mxu0 0.0
        %593 = vmatpush1.msra.mxu0 0.0
        %594 = vmatprep.subr.mxu0 0.0
        %595 = vmatpush1.msra.mxu0 0.0
        %596 = vmatprep.subr.mxu0 0.0
        %597 = vmatpush1.msra.mxu0 0.0
        %598 = vmatprep.subr.mxu0 0.0
        %599 = vmatpush1.msra.mxu0 0.0
        %600 = vmatprep.subr.mxu0 0.0
        %601 = vmatpush1.msra.mxu0 0.0
        %602 = vmatprep.subr.mxu0 0.0
        %603 = vmatpush1.msra.mxu0 0.0
        %604 = vmatprep.subr.mxu0 0.0
        %605 = vmatpush1.msra.mxu0 0.0
        %606 = vmatprep.subr.mxu0 0.0
        %607 = vmatpush1.msra.mxu0 0.0
        %608 = vmatprep.subr.mxu0 0.0
        %609 = vmatpush1.msra.mxu0 0.0
        %610 = vmatprep.subr.mxu0 0.0
        %611 = vmatpush1.msra.mxu0 0.0
        %612 = vmatprep.subr.mxu0 0.0
        %613 = vmatpush1.msra.mxu0 0.0
        %614 = vmatprep.subr.mxu0 0.0
        %615 = vmatpush1.msra.mxu0 0.0
        %616 = vmatprep.subr.mxu0 0.0
        %617 = vmatpush1.msra.mxu0 0.0
        %618 = vmatprep.subr.mxu0 0.0
        %619 = vmatpush1.msra.mxu0 0.0
        %620 = vmatprep.subr.mxu0 0.0
        %621 = vmatpush1.msra.mxu0 0.0
        %622 = vmatprep.mubr.f32.mxu0 0.0
        %v623 = vand.u32 %v552, 4294901760
        %v624 = vsub.f32 %v552, %v623
        %v625 = vand.u32 %v624, 4294901760
        %v626 = vsub.f32 %v624, %v625
        %v627 = vand.u32 %v626, 4294901760
        %628 = vmatmul.mubr.f32.gmra.mrb[0].mxu0 %v627
        %v629 = vpop.f32.mrb[0].mxu0
        %v630 = vadd.f32 0.0, %v629
        %v631 = vpop.f32.mrb[0].mxu0
        %632 = vmatprep.mubr.f32.mxu0 0.0
        %v633 = vand.u32 %v555, 4294901760
        %v634 = vsub.f32 %v555, %v633
        %v635 = vand.u32 %v634, 4294901760
        %v636 = vsub.f32 %v634, %v635
        %v637 = vand.u32 %v636, 4294901760
        %638 = vmatmul.mubr.f32.gmra.mrb[0].mxu0 %v637
        %v639 = vpop.f32.mrb[0].mxu0
        %v640 = vadd.f32 0.0, %v639
        %v641 = vpop.f32.mrb[0].mxu0
        %642 = vdwg.mxu0
        %643 = vmatprep.subr.mxu0 0.0
        %v644 = vand.u32 %v544, 4294901760
        %v645 = vsub.f32 %v544, %v644
        %v646 = vand.u32 %v645, 4294901760
        %v647 = vsub.f32 %v645, %v646
        %v648 = vand.u32 %v647, 4294901760
        %649 = vmatpush1.msra.mxu0 %v648
        %650 = vmatprep.subr.mxu0 0.0
        %651 = vmatpush1.msra.mxu0 0.0
        %652 = vmatprep.subr.mxu0 0.0
        %653 = vmatpush1.msra.mxu0 0.0
        %654 = vmatprep.subr.mxu0 0.0
        %655 = vmatpush1.msra.mxu0 0.0
        %656 = vmatprep.subr.mxu0 0.0
        %657 = vmatpush1.msra.mxu0 0.0
        %658 = vmatprep.subr.mxu0 0.0
        %659 = vmatpush1.msra.mxu0 0.0
        %660 = vmatprep.subr.mxu0 0.0
        %661 = vmatpush1.msra.mxu0 0.0
        %662 = vmatprep.subr.mxu0 0.0
        %663 = vmatpush1.msra.mxu0 0.0
        %664 = vmatprep.subr.mxu0 0.0
        %665 = vmatpush1.msra.mxu0 0.0
        %666 = vmatprep.subr.mxu0 0.0
        %667 = vmatpush1.msra.mxu0 0.0
        %668 = vmatprep.subr.mxu0 0.0
        %669 = vmatpush1.msra.mxu0 0.0
        %670 = vmatprep.subr.mxu0 0.0
        %671 = vmatpush1.msra.mxu0 0.0
        %672 = vmatprep.subr.mxu0 0.0
        %673 = vmatpush1.msra.mxu0 0.0
        %674 = vmatprep.subr.mxu0 0.0
        %675 = vmatpush1.msra.mxu0 0.0
        %676 = vmatprep.subr.mxu0 0.0
        %677 = vmatpush1.msra.mxu0 0.0
        %678 = vmatprep.subr.mxu0 0.0
        %679 = vmatpush1.msra.mxu0 0.0
        %680 = vmatprep.subr.mxu0 0.0
        %681 = vmatpush1.msra.mxu0 0.0
        %682 = vmatprep.subr.mxu0 0.0
        %683 = vmatpush1.msra.mxu0 0.0
        %684 = vmatprep.subr.mxu0 0.0
        %685 = vmatpush1.msra.mxu0 0.0
        %686 = vmatprep.subr.mxu0 0.0
        %687 = vmatpush1.msra.mxu0 0.0
        %688 = vmatprep.subr.mxu0 0.0
        %689 = vmatpush1.msra.mxu0 0.0
        %690 = vmatprep.subr.mxu0 0.0
        %691 = vmatpush1.msra.mxu0 0.0
        %692 = vmatprep.subr.mxu0 0.0
        %693 = vmatpush1.msra.mxu0 0.0
        %694 = vmatprep.subr.mxu0 0.0
        %695 = vmatpush1.msra.mxu0 0.0
        %696 = vmatprep.subr.mxu0 0.0
        %697 = vmatpush1.msra.mxu0 0.0
        %698 = vmatprep.subr.mxu0 0.0
        %699 = vmatpush1.msra.mxu0 0.0
        %700 = vmatprep.subr.mxu0 0.0
        %701 = vmatpush1.msra.mxu0 0.0
        %702 = vmatprep.subr.mxu0 0.0
        %703 = vmatpush1.msra.mxu0 0.0
        %704 = vmatprep.subr.mxu0 0.0
        %705 = vmatpush1.msra.mxu0 0.0
        %706 = vmatprep.subr.mxu0 0.0
        %707 = vmatpush1.msra.mxu0 0.0
        %708 = vmatprep.subr.mxu0 0.0
        %709 = vmatpush1.msra.mxu0 0.0
        %710 = vmatprep.subr.mxu0 0.0
        %711 = vmatpush1.msra.mxu0 0.0
        %712 = vmatprep.mubr.f32.mxu0 0.0
        %v713 = vand.u32 %v552, 4294901760
        %714 = vmatmul.mubr.f32.gmra.mrb[0].mxu0 %v713
        %v715 = vpop.f32.mrb[0].mxu0
        %v716 = vadd.f32 %v630, %v715
        %v717 = vpop.f32.mrb[0].mxu0
        %718 = vmatprep.mubr.f32.mxu0 0.0
        %v719 = vand.u32 %v555, 4294901760
        %720 = vmatmul.mubr.f32.gmra.mrb[0].mxu0 %v719
        %v721 = vpop.f32.mrb[0].mxu0
        %v722 = vadd.f32 %v640, %v721
        %v723 = vpop.f32.mrb[0].mxu0
        %724 = vdwg.mxu0
        %725 = vmatprep.subr.mxu0 0.0
        %v726 = vand.u32 %v544, 4294901760
        %v727 = vsub.f32 %v544, %v726
        %728 = vmatpush1.msra.mxu0 %v727
        %729 = vmatprep.subr.mxu0 0.0
        %730 = vmatpush1.msra.mxu0 0.0
        %731 = vmatprep.subr.mxu0 0.0
        %732 = vmatpush1.msra.mxu0 0.0
        %733 = vmatprep.subr.mxu0 0.0
        %734 = vmatpush1.msra.mxu0 0.0
        %735 = vmatprep.subr.mxu0 0.0
        %736 = vmatpush1.msra.mxu0 0.0
        %737 = vmatprep.subr.mxu0 0.0
        %738 = vmatpush1.msra.mxu0 0.0
        %739 = vmatprep.subr.mxu0 0.0
        %740 = vmatpush1.msra.mxu0 0.0
        %741 = vmatprep.subr.mxu0 0.0
        %742 = vmatpush1.msra.mxu0 0.0
        %743 = vmatprep.subr.mxu0 0.0
        %744 = vmatpush1.msra.mxu0 0.0
        %745 = vmatprep.subr.mxu0 0.0
        %746 = vmatpush1.msra.mxu0 0.0
        %747 = vmatprep.subr.mxu0 0.0
        %748 = vmatpush1.msra.mxu0 0.0
        %749 = vmatprep.subr.mxu0 0.0
        %750 = vmatpush1.msra.mxu0 0.0
        %751 = vmatprep.subr.mxu0 0.0
        %752 = vmatpush1.msra.mxu0 0.0
        %753 = vmatprep.subr.mxu0 0.0
        %754 = vmatpush1.msra.mxu0 0.0
        %755 = vmatprep.subr.mxu0 0.0
        %756 = vmatpush1.msra.mxu0 0.0
        %757 = vmatprep.subr.mxu0 0.0
        %758 = vmatpush1.msra.mxu0 0.0
        %759 = vmatprep.subr.mxu0 0.0
        %760 = vmatpush1.msra.mxu0 0.0
        %761 = vmatprep.subr.mxu0 0.0
        %762 = vmatpush1.msra.mxu0 0.0
        %763 = vmatprep.subr.mxu0 0.0
        %764 = vmatpush1.msra.mxu0 0.0
        %765 = vmatprep.subr.mxu0 0.0
        %766 = vmatpush1.msra.mxu0 0.0
        %767 = vmatprep.subr.mxu0 0.0
        %768 = vmatpush1.msra.mxu0 0.0
        %769 = vmatprep.subr.mxu0 0.0
        %770 = vmatpush1.msra.mxu0 0.0
        %771 = vmatprep.subr.mxu0 0.0
        %772 = vmatpush1.msra.mxu0 0.0
        %773 = vmatprep.subr.mxu0 0.0
        %774 = vmatpush1.msra.mxu0 0.0
        %775 = vmatprep.subr.mxu0 0.0
        %776 = vmatpush1.msra.mxu0 0.0
        %777 = vmatprep.subr.mxu0 0.0
        %778 = vmatpush1.msra.mxu0 0.0
        %779 = vmatprep.subr.mxu0 0.0
        %780 = vmatpush1.msra.mxu0 0.0
        %781 = vmatprep.subr.mxu0 0.0
        %782 = vmatpush1.msra.mxu0 0.0
        %783 = vmatprep.subr.mxu0 0.0
        %784 = vmatpush1.msra.mxu0 0.0
        %785 = vmatprep.subr.mxu0 0.0
        %786 = vmatpush1.msra.mxu0 0.0
        %787 = vmatprep.subr.mxu0 0.0
        %788 = vmatpush1.msra.mxu0 0.0
        %789 = vmatprep.subr.mxu0 0.0
        %790 = vmatpush1.msra.mxu0 0.0
        %791 = vmatprep.mubr.f32.mxu0 0.0
        %v792 = vand.u32 %v552, 4294901760
        %v793 = vsub.f32 %v552, %v792
        %794 = vmatmul.mubr.f32.gmra.mrb[0].mxu0 %v793
        %v795 = vpop.f32.mrb[0].mxu0
        %v796 = vadd.f32 %v716, %v795
        %v797 = vpop.f32.mrb[0].mxu0
        %798 = vmatprep.mubr.f32.mxu0 0.0
        %v799 = vand.u32 %v555, 4294901760
        %v800 = vsub.f32 %v555, %v799
        %801 = vmatmul.mubr.f32.gmra.mrb[0].mxu0 %v800
        %v802 = vpop.f32.mrb[0].mxu0
        %v803 = vadd.f32 %v722, %v802
        %v804 = vpop.f32.mrb[0].mxu0
        %805 = vdwg.mxu0
        %806 = vmatprep.subr.mxu0 0.0
        %v807 = vand.u32 %v544, 4294901760
        %808 = vmatpush1.msra.mxu0 %v807
        %809 = vmatprep.subr.mxu0 0.0
        %810 = vmatpush1.msra.mxu0 0.0
        %811 = vmatprep.subr.mxu0 0.0
        %812 = vmatpush1.msra.mxu0 0.0
        %813 = vmatprep.subr.mxu0 0.0
        %814 = vmatpush1.msra.mxu0 0.0
        %815 = vmatprep.subr.mxu0 0.0
        %816 = vmatpush1.msra.mxu0 0.0
        %817 = vmatprep.subr.mxu0 0.0
        %818 = vmatpush1.msra.mxu0 0.0
        %819 = vmatprep.subr.mxu0 0.0
        %820 = vmatpush1.msra.mxu0 0.0
        %821 = vmatprep.subr.mxu0 0.0
        %822 = vmatpush1.msra.mxu0 0.0
        %823 = vmatprep.subr.mxu0 0.0
        %824 = vmatpush1.msra.mxu0 0.0
        %825 = vmatprep.subr.mxu0 0.0
        %826 = vmatpush1.msra.mxu0 0.0
        %827 = vmatprep.subr.mxu0 0.0
        %828 = vmatpush1.msra.mxu0 0.0
        %829 = vmatprep.subr.mxu0 0.0
        %830 = vmatpush1.msra.mxu0 0.0
        %831 = vmatprep.subr.mxu0 0.0
        %832 = vmatpush1.msra.mxu0 0.0
        %833 = vmatprep.subr.mxu0 0.0
        %834 = vmatpush1.msra.mxu0 0.0
        %835 = vmatprep.subr.mxu0 0.0
        %836 = vmatpush1.msra.mxu0 0.0
        %837 = vmatprep.subr.mxu0 0.0
        %838 = vmatpush1.msra.mxu0 0.0
        %839 = vmatprep.subr.mxu0 0.0
        %840 = vmatpush1.msra.mxu0 0.0
        %841 = vmatprep.subr.mxu0 0.0
        %842 = vmatpush1.msra.mxu0 0.0
        %843 = vmatprep.subr.mxu0 0.0
        %844 = vmatpush1.msra.mxu0 0.0
        %845 = vmatprep.subr.mxu0 0.0
        %846 = vmatpush1.msra.mxu0 0.0
        %847 = vmatprep.subr.mxu0 0.0
        %848 = vmatpush1.msra.mxu0 0.0
        %849 = vmatprep.subr.mxu0 0.0
        %850 = vmatpush1.msra.mxu0 0.0
        %851 = vmatprep.subr.mxu0 0.0
        %852 = vmatpush1.msra.mxu0 0.0
        %853 = vmatprep.subr.mxu0 0.0
        %854 = vmatpush1.msra.mxu0 0.0
        %855 = vmatprep.subr.mxu0 0.0
        %856 = vmatpush1.msra.mxu0 0.0
        %857 = vmatprep.subr.mxu0 0.0
        %858 = vmatpush1.msra.mxu0 0.0
        %859 = vmatprep.subr.mxu0 0.0
        %860 = vmatpush1.msra.mxu0 0.0
        %861 = vmatprep.subr.mxu0 0.0
        %862 = vmatpush1.msra.mxu0 0.0
        %863 = vmatprep.subr.mxu0 0.0
        %864 = vmatpush1.msra.mxu0 0.0
        %865 = vmatprep.subr.mxu0 0.0
        %866 = vmatpush1.msra.mxu0 0.0
        %867 = vmatprep.subr.mxu0 0.0
        %868 = vmatpush1.msra.mxu0 0.0
        %869 = vmatprep.subr.mxu0 0.0
        %870 = vmatpush1.msra.mxu0 0.0
        %871 = vmatprep.mubr.f32.mxu0 0.0
        %v872 = vand.u32 %v552, 4294901760
        %v873 = vsub.f32 %v552, %v872
        %v874 = vand.u32 %v873, 4294901760
        %875 = vmatmul.mubr.f32.gmra.mrb[0].mxu0 %v874
        %v876 = vpop.f32.mrb[0].mxu0
        %v877 = vadd.f32 %v796, %v876
        %v878 = vpop.f32.mrb[0].mxu0
        %879 = vmatprep.mubr.f32.mxu0 0.0
        %v880 = vand.u32 %v555, 4294901760
        %v881 = vsub.f32 %v555, %v880
        %v882 = vand.u32 %v881, 4294901760
        %883 = vmatmul.mubr.f32.gmra.mrb[0].mxu0 %v882
        %v884 = vpop.f32.mrb[0].mxu0
        %v885 = vadd.f32 %v803, %v884
        %v886 = vpop.f32.mrb[0].mxu0
        %887 = vdwg.mxu0
        %888 = vmatprep.subr.mxu0 0.0
        %v889 = vand.u32 %v544, 4294901760
        %v890 = vsub.f32 %v544, %v889
        %v891 = vand.u32 %v890, 4294901760
        %892 = vmatpush1.msra.mxu0 %v891
        %893 = vmatprep.subr.mxu0 0.0
        %894 = vmatpush1.msra.mxu0 0.0
        %895 = vmatprep.subr.mxu0 0.0
        %896 = vmatpush1.msra.mxu0 0.0
        %897 = vmatprep.subr.mxu0 0.0
        %898 = vmatpush1.msra.mxu0 0.0
        %899 = vmatprep.subr.mxu0 0.0
        %900 = vmatpush1.msra.mxu0 0.0
        %901 = vmatprep.subr.mxu0 0.0
        %902 = vmatpush1.msra.mxu0 0.0
        %903 = vmatprep.subr.mxu0 0.0
        %904 = vmatpush1.msra.mxu0 0.0
        %905 = vmatprep.subr.mxu0 0.0
        %906 = vmatpush1.msra.mxu0 0.0
        %907 = vmatprep.subr.mxu0 0.0
        %908 = vmatpush1.msra.mxu0 0.0
        %909 = vmatprep.subr.mxu0 0.0
        %910 = vmatpush1.msra.mxu0 0.0
        %911 = vmatprep.subr.mxu0 0.0
        %912 = vmatpush1.msra.mxu0 0.0
        %913 = vmatprep.subr.mxu0 0.0
        %914 = vmatpush1.msra.mxu0 0.0
        %915 = vmatprep.subr.mxu0 0.0
        %916 = vmatpush1.msra.mxu0 0.0
        %917 = vmatprep.subr.mxu0 0.0
        %918 = vmatpush1.msra.mxu0 0.0
        %919 = vmatprep.subr.mxu0 0.0
        %920 = vmatpush1.msra.mxu0 0.0
        %921 = vmatprep.subr.mxu0 0.0
        %922 = vmatpush1.msra.mxu0 0.0
        %923 = vmatprep.subr.mxu0 0.0
        %924 = vmatpush1.msra.mxu0 0.0
        %925 = vmatprep.subr.mxu0 0.0
        %926 = vmatpush1.msra.mxu0 0.0
        %927 = vmatprep.subr.mxu0 0.0
        %928 = vmatpush1.msra.mxu0 0.0
        %929 = vmatprep.subr.mxu0 0.0
        %930 = vmatpush1.msra.mxu0 0.0
        %931 = vmatprep.subr.mxu0 0.0
        %932 = vmatpush1.msra.mxu0 0.0
        %933 = vmatprep.subr.mxu0 0.0
        %934 = vmatpush1.msra.mxu0 0.0
        %935 = vmatprep.subr.mxu0 0.0
        %936 = vmatpush1.msra.mxu0 0.0
        %937 = vmatprep.subr.mxu0 0.0
        %938 = vmatpush1.msra.mxu0 0.0
        %939 = vmatprep.subr.mxu0 0.0
        %940 = vmatpush1.msra.mxu0 0.0
        %941 = vmatprep.subr.mxu0 0.0
        %942 = vmatpush1.msra.mxu0 0.0
        %943 = vmatprep.subr.mxu0 0.0
        %944 = vmatpush1.msra.mxu0 0.0
        %945 = vmatprep.subr.mxu0 0.0
        %946 = vmatpush1.msra.mxu0 0.0
        %947 = vmatprep.subr.mxu0 0.0
        %948 = vmatpush1.msra.mxu0 0.0
        %949 = vmatprep.subr.mxu0 0.0
        %950 = vmatpush1.msra.mxu0 0.0
        %951 = vmatprep.subr.mxu0 0.0
        %952 = vmatpush1.msra.mxu0 0.0
        %953 = vmatprep.subr.mxu0 0.0
        %954 = vmatpush1.msra.mxu0 0.0
        %955 = vmatprep.mubr.f32.mxu0 0.0
        %v956 = vand.u32 %v552, 4294901760
        %957 = vmatmul.mubr.f32.gmra.mrb[0].mxu0 %v956
        %v958 = vpop.f32.mrb[0].mxu0
        %v959 = vadd.f32 %v877, %v958
        %v960 = vpop.f32.mrb[0].mxu0
        %961 = vmatprep.mubr.f32.mxu0 0.0
        %v962 = vand.u32 %v555, 4294901760
        %963 = vmatmul.mubr.f32.gmra.mrb[0].mxu0 %v962
        %v964 = vpop.f32.mrb[0].mxu0
        %v965 = vadd.f32 %v885, %v964
        %v966 = vpop.f32.mrb[0].mxu0
        %967 = vdwg.mxu0
        %968 = vmatprep.subr.mxu0 0.0
        %v969 = vand.u32 %v544, 4294901760
        %970 = vmatpush1.msra.mxu0 %v969
        %971 = vmatprep.subr.mxu0 0.0
        %972 = vmatpush1.msra.mxu0 0.0
        %973 = vmatprep.subr.mxu0 0.0
        %974 = vmatpush1.msra.mxu0 0.0
        %975 = vmatprep.subr.mxu0 0.0
        %976 = vmatpush1.msra.mxu0 0.0
        %977 = vmatprep.subr.mxu0 0.0
        %978 = vmatpush1.msra.mxu0 0.0
        %979 = vmatprep.subr.mxu0 0.0
        %980 = vmatpush1.msra.mxu0 0.0
        %981 = vmatprep.subr.mxu0 0.0
        %982 = vmatpush1.msra.mxu0 0.0
        %983 = vmatprep.subr.mxu0 0.0
        %984 = vmatpush1.msra.mxu0 0.0
        %985 = vmatprep.subr.mxu0 0.0
        %986 = vmatpush1.msra.mxu0 0.0
        %987 = vmatprep.subr.mxu0 0.0
        %988 = vmatpush1.msra.mxu0 0.0
        %989 = vmatprep.subr.mxu0 0.0
        %990 = vmatpush1.msra.mxu0 0.0
        %991 = vmatprep.subr.mxu0 0.0
        %992 = vmatpush1.msra.mxu0 0.0
        %993 = vmatprep.subr.mxu0 0.0
        %994 = vmatpush1.msra.mxu0 0.0
        %995 = vmatprep.subr.mxu0 0.0
        %996 = vmatpush1.msra.mxu0 0.0
        %997 = vmatprep.subr.mxu0 0.0
        %998 = vmatpush1.msra.mxu0 0.0
        %999 = vmatprep.subr.mxu0 0.0
        %1000 = vmatpush1.msra.mxu0 0.0
        %1001 = vmatprep.subr.mxu0 0.0
        %1002 = vmatpush1.msra.mxu0 0.0
        %1003 = vmatprep.subr.mxu0 0.0
        %1004 = vmatpush1.msra.mxu0 0.0
        %1005 = vmatprep.subr.mxu0 0.0
        %1006 = vmatpush1.msra.mxu0 0.0
        %1007 = vmatprep.subr.mxu0 0.0
        %1008 = vmatpush1.msra.mxu0 0.0
        %1009 = vmatprep.subr.mxu0 0.0
        %1010 = vmatpush1.msra.mxu0 0.0
        %1011 = vmatprep.subr.mxu0 0.0
        %1012 = vmatpush1.msra.mxu0 0.0
        %1013 = vmatprep.subr.mxu0 0.0
        %1014 = vmatpush1.msra.mxu0 0.0
        %1015 = vmatprep.subr.mxu0 0.0
        %1016 = vmatpush1.msra.mxu0 0.0
        %1017 = vmatprep.subr.mxu0 0.0
        %1018 = vmatpush1.msra.mxu0 0.0
        %1019 = vmatprep.subr.mxu0 0.0
        %1020 = vmatpush1.msra.mxu0 0.0
        %1021 = vmatprep.subr.mxu0 0.0
        %1022 = vmatpush1.msra.mxu0 0.0
        %1023 = vmatprep.subr.mxu0 0.0
        %1024 = vmatpush1.msra.mxu0 0.0
        %1025 = vmatprep.subr.mxu0 0.0
        %1026 = vmatpush1.msra.mxu0 0.0
        %1027 = vmatprep.subr.mxu0 0.0
        %1028 = vmatpush1.msra.mxu0 0.0
        %1029 = vmatprep.subr.mxu0 0.0
        %1030 = vmatpush1.msra.mxu0 0.0
        %1031 = vmatprep.subr.mxu0 0.0
        %1032 = vmatpush1.msra.mxu0 0.0
        %1033 = vmatprep.mubr.f32.mxu0 0.0
        %v1034 = vand.u32 %v552, 4294901760
        %1035 = vmatmul.mubr.f32.gmra.mrb[0].mxu0 %v1034
        %v1036 = vpop.f32.mrb[0].mxu0
        %v1037 = vadd.f32 %v959, %v1036
        %v1038 = vpop.f32.mrb[0].mxu0
        %1039 = vmatprep.mubr.f32.mxu0 0.0
        %v1040 = vand.u32 %v555, 4294901760
        %1041 = vmatmul.mubr.f32.gmra.mrb[0].mxu0 %v1040
        %v1042 = vpop.f32.mrb[0].mxu0
        %v1043 = vadd.f32 %v965, %v1042
        %v1044 = vpop.f32.mrb[0].mxu0
        %1045 = vdwg.mxu0
        %v1047 = vsel %vm550, %v545, 0
        %v1050 = vsel %vm550, %v546, 0
        %1052 = vmatprep.subr.mxu0 0.0
        %v1053 = vand.u32 %v438, 4294901760
        %1054 = vmatpush1.msra.mxu0 %v1053
        %1055 = vmatprep.subr.mxu0 0.0
        %1056 = vmatpush1.msra.mxu0 0.0
        %1057 = vmatprep.subr.mxu0 0.0
        %1058 = vmatpush1.msra.mxu0 0.0
        %1059 = vmatprep.subr.mxu0 0.0
        %1060 = vmatpush1.msra.mxu0 0.0
        %1061 = vmatprep.subr.mxu0 0.0
        %1062 = vmatpush1.msra.mxu0 0.0
        %1063 = vmatprep.subr.mxu0 0.0
        %1064 = vmatpush1.msra.mxu0 0.0
        %1065 = vmatprep.subr.mxu0 0.0
        %1066 = vmatpush1.msra.mxu0 0.0
        %1067 = vmatprep.subr.mxu0 0.0
        %1068 = vmatpush1.msra.mxu0 0.0
        %1069 = vmatprep.subr.mxu0 0.0
        %1070 = vmatpush1.msra.mxu0 0.0
        %1071 = vmatprep.subr.mxu0 0.0
        %1072 = vmatpush1.msra.mxu0 0.0
        %1073 = vmatprep.subr.mxu0 0.0
        %1074 = vmatpush1.msra.mxu0 0.0
        %1075 = vmatprep.subr.mxu0 0.0
        %1076 = vmatpush1.msra.mxu0 0.0
        %1077 = vmatprep.subr.mxu0 0.0
        %1078 = vmatpush1.msra.mxu0 0.0
        %1079 = vmatprep.subr.mxu0 0.0
        %1080 = vmatpush1.msra.mxu0 0.0
        %1081 = vmatprep.subr.mxu0 0.0
        %1082 = vmatpush1.msra.mxu0 0.0
        %1083 = vmatprep.subr.mxu0 0.0
        %1084 = vmatpush1.msra.mxu0 0.0
        %1085 = vmatprep.subr.mxu0 0.0
        %1086 = vmatpush1.msra.mxu0 0.0
        %1087 = vmatprep.subr.mxu0 0.0
        %1088 = vmatpush1.msra.mxu0 0.0
        %1089 = vmatprep.subr.mxu0 0.0
        %1090 = vmatpush1.msra.mxu0 0.0
        %1091 = vmatprep.subr.mxu0 0.0
        %1092 = vmatpush1.msra.mxu0 0.0
        %1093 = vmatprep.subr.mxu0 0.0
        %1094 = vmatpush1.msra.mxu0 0.0
        %1095 = vmatprep.subr.mxu0 0.0
        %1096 = vmatpush1.msra.mxu0 0.0
        %1097 = vmatprep.subr.mxu0 0.0
        %1098 = vmatpush1.msra.mxu0 0.0
        %1099 = vmatprep.subr.mxu0 0.0
        %1100 = vmatpush1.msra.mxu0 0.0
        %1101 = vmatprep.subr.mxu0 0.0
        %1102 = vmatpush1.msra.mxu0 0.0
        %1103 = vmatprep.subr.mxu0 0.0
        %1104 = vmatpush1.msra.mxu0 0.0
        %1105 = vmatprep.subr.mxu0 0.0
        %1106 = vmatpush1.msra.mxu0 0.0
        %1107 = vmatprep.subr.mxu0 0.0
        %1108 = vmatpush1.msra.mxu0 0.0
        %1109 = vmatprep.subr.mxu0 0.0
        %1110 = vmatpush1.msra.mxu0 0.0
        %1111 = vmatprep.subr.mxu0 0.0
        %1112 = vmatpush1.msra.mxu0 0.0
        %1113 = vmatprep.subr.mxu0 0.0
        %1114 = vmatpush1.msra.mxu0 0.0
        %1115 = vmatprep.subr.mxu0 0.0
        %1116 = vmatpush1.msra.mxu0 0.0
        %1117 = vmatprep.mubr.f32.mxu0 0.0
        %v1118 = vand.u32 %v1047, 4294901760
        %v1119 = vsub.f32 %v1047, %v1118
        %v1120 = vand.u32 %v1119, 4294901760
        %v1121 = vsub.f32 %v1119, %v1120
        %v1122 = vand.u32 %v1121, 4294901760
        %1123 = vmatmul.mubr.f32.gmra.mrb[0].mxu0 %v1122
        %v1124 = vpop.f32.mrb[0].mxu0
        %v1125 = vadd.f32 %v1037, %v1124
        %v1126 = vpop.f32.mrb[0].mxu0
        %1127 = vmatprep.mubr.f32.mxu0 0.0
        %v1128 = vand.u32 %v1050, 4294901760
        %v1129 = vsub.f32 %v1050, %v1128
        %v1130 = vand.u32 %v1129, 4294901760
        %v1131 = vsub.f32 %v1129, %v1130
        %v1132 = vand.u32 %v1131, 4294901760
        %1133 = vmatmul.mubr.f32.gmra.mrb[0].mxu0 %v1132
        %v1134 = vpop.f32.mrb[0].mxu0
        %v1135 = vadd.f32 %v1043, %v1134
        %v1136 = vpop.f32.mrb[0].mxu0
        %1137 = vdwg.mxu0
        %1138 = vmatprep.subr.mxu0 0.0
        %v1139 = vand.u32 %v438, 4294901760
        %v1140 = vsub.f32 %v438, %v1139
        %v1141 = vand.u32 %v1140, 4294901760
        %v1142 = vsub.f32 %v1140, %v1141
        %v1143 = vand.u32 %v1142, 4294901760
        %1144 = vmatpush1.msra.mxu0 %v1143
        %1145 = vmatprep.subr.mxu0 0.0
        %1146 = vmatpush1.msra.mxu0 0.0
        %1147 = vmatprep.subr.mxu0 0.0
        %1148 = vmatpush1.msra.mxu0 0.0
        %1149 = vmatprep.subr.mxu0 0.0
        %1150 = vmatpush1.msra.mxu0 0.0
        %1151 = vmatprep.subr.mxu0 0.0
        %1152 = vmatpush1.msra.mxu0 0.0
        %1153 = vmatprep.subr.mxu0 0.0
        %1154 = vmatpush1.msra.mxu0 0.0
        %1155 = vmatprep.subr.mxu0 0.0
        %1156 = vmatpush1.msra.mxu0 0.0
        %1157 = vmatprep.subr.mxu0 0.0
        %1158 = vmatpush1.msra.mxu0 0.0
        %1159 = vmatprep.subr.mxu0 0.0
        %1160 = vmatpush1.msra.mxu0 0.0
        %1161 = vmatprep.subr.mxu0 0.0
        %1162 = vmatpush1.msra.mxu0 0.0
        %1163 = vmatprep.subr.mxu0 0.0
        %1164 = vmatpush1.msra.mxu0 0.0
        %1165 = vmatprep.subr.mxu0 0.0
        %1166 = vmatpush1.msra.mxu0 0.0
        %1167 = vmatprep.subr.mxu0 0.0
        %1168 = vmatpush1.msra.mxu0 0.0
        %1169 = vmatprep.subr.mxu0 0.0
        %1170 = vmatpush1.msra.mxu0 0.0
        %1171 = vmatprep.subr.mxu0 0.0
        %1172 = vmatpush1.msra.mxu0 0.0
        %1173 = vmatprep.subr.mxu0 0.0
        %1174 = vmatpush1.msra.mxu0 0.0
        %1175 = vmatprep.subr.mxu0 0.0
        %1176 = vmatpush1.msra.mxu0 0.0
        %1177 = vmatprep.subr.mxu0 0.0
        %1178 = vmatpush1.msra.mxu0 0.0
        %1179 = vmatprep.subr.mxu0 0.0
        %1180 = vmatpush1.msra.mxu0 0.0
        %1181 = vmatprep.subr.mxu0 0.0
        %1182 = vmatpush1.msra.mxu0 0.0
        %1183 = vmatprep.subr.mxu0 0.0
        %1184 = vmatpush1.msra.mxu0 0.0
        %1185 = vmatprep.subr.mxu0 0.0
        %1186 = vmatpush1.msra.mxu0 0.0
        %1187 = vmatprep.subr.mxu0 0.0
        %1188 = vmatpush1.msra.mxu0 0.0
        %1189 = vmatprep.subr.mxu0 0.0
        %1190 = vmatpush1.msra.mxu0 0.0
        %1191 = vmatprep.subr.mxu0 0.0
        %1192 = vmatpush1.msra.mxu0 0.0
        %1193 = vmatprep.subr.mxu0 0.0
        %1194 = vmatpush1.msra.mxu0 0.0
        %1195 = vmatprep.subr.mxu0 0.0
        %1196 = vmatpush1.msra.mxu0 0.0
        %1197 = vmatprep.subr.mxu0 0.0
        %1198 = vmatpush1.msra.mxu0 0.0
        %1199 = vmatprep.subr.mxu0 0.0
        %1200 = vmatpush1.msra.mxu0 0.0
        %1201 = vmatprep.subr.mxu0 0.0
        %1202 = vmatpush1.msra.mxu0 0.0
        %1203 = vmatprep.subr.mxu0 0.0
        %1204 = vmatpush1.msra.mxu0 0.0
        %1205 = vmatprep.subr.mxu0 0.0
        %1206 = vmatpush1.msra.mxu0 0.0
        %1207 = vmatprep.mubr.f32.mxu0 0.0
        %v1208 = vand.u32 %v1047, 4294901760
        %1209 = vmatmul.mubr.f32.gmra.mrb[0].mxu0 %v1208
        %v1210 = vpop.f32.mrb[0].mxu0
        %v1211 = vadd.f32 %v1125, %v1210
        %v1212 = vpop.f32.mrb[0].mxu0
        %1213 = vmatprep.mubr.f32.mxu0 0.0
        %v1214 = vand.u32 %v1050, 4294901760
        %1215 = vmatmul.mubr.f32.gmra.mrb[0].mxu0 %v1214
        %v1216 = vpop.f32.mrb[0].mxu0
        %v1217 = vadd.f32 %v1135, %v1216
        %v1218 = vpop.f32.mrb[0].mxu0
        %1219 = vdwg.mxu0
        %1220 = vmatprep.subr.mxu0 0.0
        %v1221 = vand.u32 %v438, 4294901760
        %v1222 = vsub.f32 %v438, %v1221
        %1223 = vmatpush1.msra.mxu0 %v1222
        %1224 = vmatprep.subr.mxu0 0.0
        %1225 = vmatpush1.msra.mxu0 0.0
        %1226 = vmatprep.subr.mxu0 0.0
        %1227 = vmatpush1.msra.mxu0 0.0
        %1228 = vmatprep.subr.mxu0 0.0
        %1229 = vmatpush1.msra.mxu0 0.0
        %1230 = vmatprep.subr.mxu0 0.0
        %1231 = vmatpush1.msra.mxu0 0.0
        %1232 = vmatprep.subr.mxu0 0.0
        %1233 = vmatpush1.msra.mxu0 0.0
        %1234 = vmatprep.subr.mxu0 0.0
        %1235 = vmatpush1.msra.mxu0 0.0
        %1236 = vmatprep.subr.mxu0 0.0
        %1237 = vmatpush1.msra.mxu0 0.0
        %1238 = vmatprep.subr.mxu0 0.0
        %1239 = vmatpush1.msra.mxu0 0.0
        %1240 = vmatprep.subr.mxu0 0.0
        %1241 = vmatpush1.msra.mxu0 0.0
        %1242 = vmatprep.subr.mxu0 0.0
        %1243 = vmatpush1.msra.mxu0 0.0
        %1244 = vmatprep.subr.mxu0 0.0
        %1245 = vmatpush1.msra.mxu0 0.0
        %1246 = vmatprep.subr.mxu0 0.0
        %1247 = vmatpush1.msra.mxu0 0.0
        %1248 = vmatprep.subr.mxu0 0.0
        %1249 = vmatpush1.msra.mxu0 0.0
        %1250 = vmatprep.subr.mxu0 0.0
        %1251 = vmatpush1.msra.mxu0 0.0
        %1252 = vmatprep.subr.mxu0 0.0
        %1253 = vmatpush1.msra.mxu0 0.0
        %1254 = vmatprep.subr.mxu0 0.0
        %1255 = vmatpush1.msra.mxu0 0.0
        %1256 = vmatprep.subr.mxu0 0.0
        %1257 = vmatpush1.msra.mxu0 0.0
        %1258 = vmatprep.subr.mxu0 0.0
        %1259 = vmatpush1.msra.mxu0 0.0
        %1260 = vmatprep.subr.mxu0 0.0
        %1261 = vmatpush1.msra.mxu0 0.0
        %1262 = vmatprep.subr.mxu0 0.0
        %1263 = vmatpush1.msra.mxu0 0.0
        %1264 = vmatprep.subr.mxu0 0.0
        %1265 = vmatpush1.msra.mxu0 0.0
        %1266 = vmatprep.subr.mxu0 0.0
        %1267 = vmatpush1.msra.mxu0 0.0
        %1268 = vmatprep.subr.mxu0 0.0
        %1269 = vmatpush1.msra.mxu0 0.0
        %1270 = vmatprep.subr.mxu0 0.0
        %1271 = vmatpush1.msra.mxu0 0.0
        %1272 = vmatprep.subr.mxu0 0.0
        %1273 = vmatpush1.msra.mxu0 0.0
        %1274 = vmatprep.subr.mxu0 0.0
        %1275 = vmatpush1.msra.mxu0 0.0
        %1276 = vmatprep.subr.mxu0 0.0
        %1277 = vmatpush1.msra.mxu0 0.0
        %1278 = vmatprep.subr.mxu0 0.0
        %1279 = vmatpush1.msra.mxu0 0.0
        %1280 = vmatprep.subr.mxu0 0.0
        %1281 = vmatpush1.msra.mxu0 0.0
        %1282 = vmatprep.subr.mxu0 0.0
        %1283 = vmatpush1.msra.mxu0 0.0
        %1284 = vmatprep.subr.mxu0 0.0
        %1285 = vmatpush1.msra.mxu0 0.0
        %1286 = vmatprep.mubr.f32.mxu0 0.0
        %v1287 = vand.u32 %v1047, 4294901760
        %v1288 = vsub.f32 %v1047, %v1287
        %1289 = vmatmul.mubr.f32.gmra.mrb[0].mxu0 %v1288
        %v1290 = vpop.f32.mrb[0].mxu0
        %v1291 = vadd.f32 %v1211, %v1290
        %v1292 = vpop.f32.mrb[0].mxu0
        %1293 = vmatprep.mubr.f32.mxu0 0.0
        %v1294 = vand.u32 %v1050, 4294901760
        %v1295 = vsub.f32 %v1050, %v1294
        %1296 = vmatmul.mubr.f32.gmra.mrb[0].mxu0 %v1295
        %v1297 = vpop.f32.mrb[0].mxu0
        %v1298 = vadd.f32 %v1217, %v1297
        %v1299 = vpop.f32.mrb[0].mxu0
        %1300 = vdwg.mxu0
        %1301 = vmatprep.subr.mxu0 0.0
        %v1302 = vand.u32 %v438, 4294901760
        %1303 = vmatpush1.msra.mxu0 %v1302
        %1304 = vmatprep.subr.mxu0 0.0
        %1305 = vmatpush1.msra.mxu0 0.0
        %1306 = vmatprep.subr.mxu0 0.0
        %1307 = vmatpush1.msra.mxu0 0.0
        %1308 = vmatprep.subr.mxu0 0.0
        %1309 = vmatpush1.msra.mxu0 0.0
        %1310 = vmatprep.subr.mxu0 0.0
        %1311 = vmatpush1.msra.mxu0 0.0
        %1312 = vmatprep.subr.mxu0 0.0
        %1313 = vmatpush1.msra.mxu0 0.0
        %1314 = vmatprep.subr.mxu0 0.0
        %1315 = vmatpush1.msra.mxu0 0.0
        %1316 = vmatprep.subr.mxu0 0.0
        %1317 = vmatpush1.msra.mxu0 0.0
        %1318 = vmatprep.subr.mxu0 0.0
        %1319 = vmatpush1.msra.mxu0 0.0
        %1320 = vmatprep.subr.mxu0 0.0
        %1321 = vmatpush1.msra.mxu0 0.0
        %1322 = vmatprep.subr.mxu0 0.0
        %1323 = vmatpush1.msra.mxu0 0.0
        %1324 = vmatprep.subr.mxu0 0.0
        %1325 = vmatpush1.msra.mxu0 0.0
        %1326 = vmatprep.subr.mxu0 0.0
        %1327 = vmatpush1.msra.mxu0 0.0
        %1328 = vmatprep.subr.mxu0 0.0
        %1329 = vmatpush1.msra.mxu0 0.0
        %1330 = vmatprep.subr.mxu0 0.0
        %1331 = vmatpush1.msra.mxu0 0.0
        %1332 = vmatprep.subr.mxu0 0.0
        %1333 = vmatpush1.msra.mxu0 0.0
        %1334 = vmatprep.subr.mxu0 0.0
        %1335 = vmatpush1.msra.mxu0 0.0
        %1336 = vmatprep.subr.mxu0 0.0
        %1337 = vmatpush1.msra.mxu0 0.0
        %1338 = vmatprep.subr.mxu0 0.0
        %1339 = vmatpush1.msra.mxu0 0.0
        %1340 = vmatprep.subr.mxu0 0.0
        %1341 = vmatpush1.msra.mxu0 0.0
        %1342 = vmatprep.subr.mxu0 0.0
        %1343 = vmatpush1.msra.mxu0 0.0
        %1344 = vmatprep.subr.mxu0 0.0
        %1345 = vmatpush1.msra.mxu0 0.0
        %1346 = vmatprep.subr.mxu0 0.0
        %1347 = vmatpush1.msra.mxu0 0.0
        %1348 = vmatprep.subr.mxu0 0.0
        %1349 = vmatpush1.msra.mxu0 0.0
        %1350 = vmatprep.subr.mxu0 0.0
        %1351 = vmatpush1.msra.mxu0 0.0
        %1352 = vmatprep.subr.mxu0 0.0
        %1353 = vmatpush1.msra.mxu0 0.0
        %1354 = vmatprep.subr.mxu0 0.0
        %1355 = vmatpush1.msra.mxu0 0.0
        %1356 = vmatprep.subr.mxu0 0.0
        %1357 = vmatpush1.msra.mxu0 0.0
        %1358 = vmatprep.subr.mxu0 0.0
        %1359 = vmatpush1.msra.mxu0 0.0
        %1360 = vmatprep.subr.mxu0 0.0
        %1361 = vmatpush1.msra.mxu0 0.0
        %1362 = vmatprep.subr.mxu0 0.0
        %1363 = vmatpush1.msra.mxu0 0.0
        %1364 = vmatprep.subr.mxu0 0.0
        %1365 = vmatpush1.msra.mxu0 0.0
        %1366 = vmatprep.mubr.f32.mxu0 0.0
        %v1367 = vand.u32 %v1047, 4294901760
        %v1368 = vsub.f32 %v1047, %v1367
        %v1369 = vand.u32 %v1368, 4294901760
        %1370 = vmatmul.mubr.f32.gmra.mrb[0].mxu0 %v1369
        %v1371 = vpop.f32.mrb[0].mxu0
        %v1372 = vadd.f32 %v1291, %v1371
        %v1373 = vpop.f32.mrb[0].mxu0
        %1374 = vmatprep.mubr.f32.mxu0 0.0
        %v1375 = vand.u32 %v1050, 4294901760
        %v1376 = vsub.f32 %v1050, %v1375
        %v1377 = vand.u32 %v1376, 4294901760
        %1378 = vmatmul.mubr.f32.gmra.mrb[0].mxu0 %v1377
        %v1379 = vpop.f32.mrb[0].mxu0
        %v1380 = vadd.f32 %v1298, %v1379
        %v1381 = vpop.f32.mrb[0].mxu0
        %1382 = vdwg.mxu0
        %1383 = vmatprep.subr.mxu0 0.0
        %v1384 = vand.u32 %v438, 4294901760
        %v1385 = vsub.f32 %v438, %v1384
        %v1386 = vand.u32 %v1385, 4294901760
        %1387 = vmatpush1.msra.mxu0 %v1386
        %1388 = vmatprep.subr.mxu0 0.0
        %1389 = vmatpush1.msra.mxu0 0.0
        %1390 = vmatprep.subr.mxu0 0.0
        %1391 = vmatpush1.msra.mxu0 0.0
        %1392 = vmatprep.subr.mxu0 0.0
        %1393 = vmatpush1.msra.mxu0 0.0
        %1394 = vmatprep.subr.mxu0 0.0
        %1395 = vmatpush1.msra.mxu0 0.0
        %1396 = vmatprep.subr.mxu0 0.0
        %1397 = vmatpush1.msra.mxu0 0.0
        %1398 = vmatprep.subr.mxu0 0.0
        %1399 = vmatpush1.msra.mxu0 0.0
        %1400 = vmatprep.subr.mxu0 0.0
        %1401 = vmatpush1.msra.mxu0 0.0
        %1402 = vmatprep.subr.mxu0 0.0
        %1403 = vmatpush1.msra.mxu0 0.0
        %1404 = vmatprep.subr.mxu0 0.0
        %1405 = vmatpush1.msra.mxu0 0.0
        %1406 = vmatprep.subr.mxu0 0.0
        %1407 = vmatpush1.msra.mxu0 0.0
        %1408 = vmatprep.subr.mxu0 0.0
        %1409 = vmatpush1.msra.mxu0 0.0
        %1410 = vmatprep.subr.mxu0 0.0
        %1411 = vmatpush1.msra.mxu0 0.0
        %1412 = vmatprep.subr.mxu0 0.0
        %1413 = vmatpush1.msra.mxu0 0.0
        %1414 = vmatprep.subr.mxu0 0.0
        %1415 = vmatpush1.msra.mxu0 0.0
        %1416 = vmatprep.subr.mxu0 0.0
        %1417 = vmatpush1.msra.mxu0 0.0
        %1418 = vmatprep.subr.mxu0 0.0
        %1419 = vmatpush1.msra.mxu0 0.0
        %1420 = vmatprep.subr.mxu0 0.0
        %1421 = vmatpush1.msra.mxu0 0.0
        %1422 = vmatprep.subr.mxu0 0.0
        %1423 = vmatpush1.msra.mxu0 0.0
        %1424 = vmatprep.subr.mxu0 0.0
        %1425 = vmatpush1.msra.mxu0 0.0
        %1426 = vmatprep.subr.mxu0 0.0
        %1427 = vmatpush1.msra.mxu0 0.0
        %1428 = vmatprep.subr.mxu0 0.0
        %1429 = vmatpush1.msra.mxu0 0.0
        %1430 = vmatprep.subr.mxu0 0.0
        %1431 = vmatpush1.msra.mxu0 0.0
        %1432 = vmatprep.subr.mxu0 0.0
        %1433 = vmatpush1.msra.mxu0 0.0
        %1434 = vmatprep.subr.mxu0 0.0
        %1435 = vmatpush1.msra.mxu0 0.0
        %1436 = vmatprep.subr.mxu0 0.0
        %1437 = vmatpush1.msra.mxu0 0.0
        %1438 = vmatprep.subr.mxu0 0.0
        %1439 = vmatpush1.msra.mxu0 0.0
        %1440 = vmatprep.subr.mxu0 0.0
        %1441 = vmatpush1.msra.mxu0 0.0
        %1442 = vmatprep.subr.mxu0 0.0
        %1443 = vmatpush1.msra.mxu0 0.0
        %1444 = vmatprep.subr.mxu0 0.0
        %1445 = vmatpush1.msra.mxu0 0.0
        %1446 = vmatprep.subr.mxu0 0.0
        %1447 = vmatpush1.msra.mxu0 0.0
        %1448 = vmatprep.subr.mxu0 0.0
        %1449 = vmatpush1.msra.mxu0 0.0
        %1450 = vmatprep.mubr.f32.mxu0 0.0
        %v1451 = vand.u32 %v1047, 4294901760
        %1452 = vmatmul.mubr.f32.gmra.mrb[0].mxu0 %v1451
        %v1453 = vpop.f32.mrb[0].mxu0
        %v1454 = vadd.f32 %v1372, %v1453
        %v1455 = vpop.f32.mrb[0].mxu0
        %1456 = vmatprep.mubr.f32.mxu0 0.0
        %v1457 = vand.u32 %v1050, 4294901760
        %1458 = vmatmul.mubr.f32.gmra.mrb[0].mxu0 %v1457
        %v1459 = vpop.f32.mrb[0].mxu0
        %v1460 = vadd.f32 %v1380, %v1459
        %v1461 = vpop.f32.mrb[0].mxu0
        %1462 = vdwg.mxu0
        %1463 = vmatprep.subr.mxu0 0.0
        %v1464 = vand.u32 %v438, 4294901760
        %1465 = vmatpush1.msra.mxu0 %v1464
        %1466 = vmatprep.subr.mxu0 0.0
        %1467 = vmatpush1.msra.mxu0 0.0
        %1468 = vmatprep.subr.mxu0 0.0
        %1469 = vmatpush1.msra.mxu0 0.0
        %1470 = vmatprep.subr.mxu0 0.0
        %1471 = vmatpush1.msra.mxu0 0.0
        %1472 = vmatprep.subr.mxu0 0.0
        %1473 = vmatpush1.msra.mxu0 0.0
        %1474 = vmatprep.subr.mxu0 0.0
        %1475 = vmatpush1.msra.mxu0 0.0
        %1476 = vmatprep.subr.mxu0 0.0
        %1477 = vmatpush1.msra.mxu0 0.0
        %1478 = vmatprep.subr.mxu0 0.0
        %1479 = vmatpush1.msra.mxu0 0.0
        %1480 = vmatprep.subr.mxu0 0.0
        %1481 = vmatpush1.msra.mxu0 0.0
        %1482 = vmatprep.subr.mxu0 0.0
        %1483 = vmatpush1.msra.mxu0 0.0
        %1484 = vmatprep.subr.mxu0 0.0
        %1485 = vmatpush1.msra.mxu0 0.0
        %1486 = vmatprep.subr.mxu0 0.0
        %1487 = vmatpush1.msra.mxu0 0.0
        %1488 = vmatprep.subr.mxu0 0.0
        %1489 = vmatpush1.msra.mxu0 0.0
        %1490 = vmatprep.subr.mxu0 0.0
        %1491 = vmatpush1.msra.mxu0 0.0
        %1492 = vmatprep.subr.mxu0 0.0
        %1493 = vmatpush1.msra.mxu0 0.0
        %1494 = vmatprep.subr.mxu0 0.0
        %1495 = vmatpush1.msra.mxu0 0.0
        %1496 = vmatprep.subr.mxu0 0.0
        %1497 = vmatpush1.msra.mxu0 0.0
        %1498 = vmatprep.subr.mxu0 0.0
        %1499 = vmatpush1.msra.mxu0 0.0
        %1500 = vmatprep.subr.mxu0 0.0
        %1501 = vmatpush1.msra.mxu0 0.0
        %1502 = vmatprep.subr.mxu0 0.0
        %1503 = vmatpush1.msra.mxu0 0.0
        %1504 = vmatprep.subr.mxu0 0.0
        %1505 = vmatpush1.msra.mxu0 0.0
        %1506 = vmatprep.subr.mxu0 0.0
        %1507 = vmatpush1.msra.mxu0 0.0
        %1508 = vmatprep.subr.mxu0 0.0
        %1509 = vmatpush1.msra.mxu0 0.0
        %1510 = vmatprep.subr.mxu0 0.0
        %1511 = vmatpush1.msra.mxu0 0.0
        %1512 = vmatprep.subr.mxu0 0.0
        %1513 = vmatpush1.msra.mxu0 0.0
        %1514 = vmatprep.subr.mxu0 0.0
        %1515 = vmatpush1.msra.mxu0 0.0
        %1516 = vmatprep.subr.mxu0 0.0
        %1517 = vmatpush1.msra.mxu0 0.0
        %1518 = vmatprep.subr.mxu0 0.0
        %1519 = vmatpush1.msra.mxu0 0.0
        %1520 = vmatprep.subr.mxu0 0.0
        %1521 = vmatpush1.msra.mxu0 0.0
        %1522 = vmatprep.subr.mxu0 0.0
        %1523 = vmatpush1.msra.mxu0 0.0
        %1524 = vmatprep.subr.mxu0 0.0
        %1525 = vmatpush1.msra.mxu0 0.0
        %1526 = vmatprep.subr.mxu0 0.0
        %1527 = vmatpush1.msra.mxu0 0.0
        %1528 = vmatprep.mubr.f32.mxu0 0.0
        %v1529 = vand.u32 %v1047, 4294901760
        %1530 = vmatmul.mubr.f32.gmra.mrb[0].mxu0 %v1529
        %v1531 = vpop.f32.mrb[0].mxu0
        %v1532 = vadd.f32 %v1454, %v1531
        %v1533 = vpop.f32.mrb[0].mxu0
        %1534 = vmatprep.mubr.f32.mxu0 0.0
        %v1535 = vand.u32 %v1050, 4294901760
        %1536 = vmatmul.mubr.f32.gmra.mrb[0].mxu0 %v1535
        %v1537 = vpop.f32.mrb[0].mxu0
        %v1538 = vadd.f32 %v1460, %v1537
        %v1539 = vpop.f32.mrb[0].mxu0
        %1540 = vdwg.mxu0
        %v1542 = vrot.slane %v1532, 4
        %1544 = vrot.lane.b32.xlu0 %v1542, 1
        %v1545 = vpop.permute.xlu0 %1544
        %vm1546 = vcmp.ge.s32.totalorder %v329, 1
        %v1547 = vsel %vm1546, %v1545, 0.0
        %v1548 = vadd.f32 %v1532, %v1547
        %vm1549 = vcmp.lt.s32.totalorder %v329, 1
        %v1550 = vsel %vm1549, %v1545, 0.0
        %v1551 = vadd.f32 %v1550, 0.0
        %1552 = vrot.lane.b32.xlu0 %v1538, 2
        %v1553 = vpop.permute.xlu0 %1552
        %vm1554 = vcmp.ge.s32.totalorder %v329, 2
        %v1555 = vsel %vm1554, %v1553, 0.0
        %v1556 = vadd.f32 %v1548, %v1555
        %vm1557 = vcmp.lt.s32.totalorder %v329, 2
        %v1558 = vsel %vm1557, %v1553, 0.0
        %v1559 = vadd.f32 %v1551, %v1558
        %v1561 = vrot.slane %v1538, 4
        %1563 = vrot.lane.b32.xlu0 %v1561, 3
        %v1564 = vpop.permute.xlu0 %1563
        %vm1565 = vcmp.ge.s32.totalorder %v329, 3
        %v1566 = vsel %vm1565, %v1564, 0.0
        %v1567 = vadd.f32 %v1556, %v1566
        %vm1568 = vcmp.lt.s32.totalorder %v329, 3
        %v1569 = vsel %vm1568, %v1564, 0.0
        %v1570 = vadd.f32 %v1559, %v1569
        %v1571 = vld [vmem:[#allocation2] sm:$0xf]
        %v1572 = vadd.f32 %v1567, %v1571
        %v1573 = vld [vmem:[%s267] sm:$0xf]
        %v1574 = vmul.f32 %v1572, %v1573
        %1575 = vst [vmem:[%s306] sm:$0xf] %v1574
        %1576 = vst [vmem:[#allocation2] sm:$0xf] %v1570
        %s1577 = sand.u32 %s157, 1
        %s1578 = scalar_lea.sflag [#allocation5], %s1577
        %s1579 = sand.u32 %s157, 1
        %s1580 = smul.addr %s1579, 4
        %s1581 = scalar_lea.vmem [#allocation8], %s1580
        // Predicated region
        $region49: #{tpu_custom_call.1} parent=35 // pred_check
          %p1582 = pneg %p167
        $region50: #{tpu_custom_call.1} parent=35 // pred_check_branch
          %1584 = sbr.rel (%p1582) target = $region52
        $region51: #{tpu_custom_call.1} parent=35 // pred_region
          %s1586 = ssub.s32 64, 64
          %1587 = vsyncadd %s1578, %s1586
          %s1588 = smul.addr %s28, 4
          %s1589 = sadd.s32 %s29, %s1588
          %s1590 = smul.addr %s1589, 64
          %s1591 = scalar_lea.hbm %s4, %s1590
          %s1593 = sshll.u32 %s1581, 4
          %s1594 = int_to_ptr.vmem [resolvable:$true] %s1593
          %1596 = dma.vmem_to_hbm [thread:$0]  %s1594, 64, %s1591, %s1578
        $region52: #{tpu_custom_call.1} parent=35 // pred_fallthru
          _
      $region36: #{tpu_custom_call.1} parent=5 // pred_fallthru
        _
      %p1597 = scmp.le.s32.totalorder 2, %s19
      // Predicated region
      $region53: #{tpu_custom_call.1} parent=5 // pred_check
        %p1598 = pneg %p1597
      $region54: #{tpu_custom_call.1} parent=5 // pred_check_branch
        %1600 = sbr.rel (%p1598) target = $region56
      $region55: #{tpu_custom_call.1} parent=5 // pred_region
        %s1601 = ssub.s32 %s19, 2
        // Predicated region
        $region57: #{tpu_custom_call.1} parent=55 // pred_check
          %p1602 = pneg %p173
        $region58: #{tpu_custom_call.1} parent=55 // pred_check_branch
          %1604 = sbr.rel (%p1602) target = $region60
        $region59: #{tpu_custom_call.1} parent=55 // pred_region
          %s1605 = sand.u32 %s158, 1
          %s1606 = scalar_lea.sflag [#allocation5], %s1605
          %s1607 = sand.u32 %s158, 1
          %s1608 = smul.addr %s1607, 4
          %s1609 = scalar_lea.vmem [#allocation8], %s1608
          %1610 = dma.done %s1606, 64
        $region60: #{tpu_custom_call.1} parent=55 // pred_fallthru
          _
      $region56: #{tpu_custom_call.1} parent=5 // pred_fallthru
        _
    $region6: #{tpu_custom_call.1} parent=1 // loop_footer
      %s23 = sadd.s32 1, %s19
    $region7: #{tpu_custom_call.1} parent=1 // loop_footer_branch
      %18 = sbr.rel target = $region3
    $region8: #{tpu_custom_call.1} parent=1 // loop_exit
      _
    %1611 = vsyncpa [#allocation4], 1
    %s1612 = scalar_lea.sflag [#allocation4], 1
    %1613 = vsyncpa %s1612, 1
    %1614 = vsyncpa [#allocation7], 1
    %s1615 = scalar_lea.sflag [#allocation7], 1
    %1616 = vsyncpa %s1615, 1
    %1617 = vsyncpa [#allocation5], 1
    %s1618 = scalar_lea.sflag [#allocation5], 1
    %1619 = vsyncpa %s1618, 1

// kernel: tpu_custom_call.1
$region0: #{tpu_custom_call.1}
  #allocation0 [shape = 'u32[]', space=smem, size = 0x4, offset = 0x4, fixed_abs, tag = 'smem constant byte address 0x4 - core index']
  #allocation1 [shape = 'u32[144,128]{1,0:T(1,128)}', space=vmem, size = 0x12000, scoped, tag = 'internal scratch']
  #allocation2 [shape = 'f32[4,128]{1,0:T(4,128)}', space=vmem, size = 0x800, scoped, tag = 'scratch operand']
  %s0 = inlined_call_operand.vmem [shape: f32[2,8,384], index: 0, kind: input, shape index: {}]
  %s1 = inlined_call_operand.hbm [shape: f32[2,8,384], index: 1, kind: input, shape index: {}]
  %s2 = inlined_call_operand.vmem [shape: f32[2,16,8], index: 2, kind: input, shape index: {}]
  %s3 = inlined_call_operand.hbm [shape: f32[4,512], index: 3, kind: input, shape index: {}]
  %s4 = inlined_call_operand.hbm [shape: f32[2,4,512], index: 4, kind: output, shape index: {}]
  %s5 = sld [smem:[#allocation0]]
  $region61: #{tpu_custom_call.1} parent=0
    _
  %s7 = ssub.s32 1, %s5
  %s8 = scalar_select 0, %s7, %s5
  $region1: #{tpu_custom_call.1} parent=0
    #allocation3 [shape = 'u8[8192]{0}', space=vmem, size = 0x2000, scoped, tag = 'input window, operand 1']
    #allocation4 [shape = 's32[2]{0}', space=sflag, size = 0x8, scoped, tag = 'scoped memory for tpu_custom_call.1']
    #allocation5 [shape = 's32[2]{0}', space=sflag, size = 0x8, scoped, tag = 'scoped memory for tpu_custom_call.1']
    #allocation6 [shape = 'u8[4096]{0}', space=vmem, size = 0x1000, scoped, tag = 'input window, operand 3']
    #allocation7 [shape = 's32[2]{0}', space=sflag, size = 0x8, scoped, tag = 'scoped memory for tpu_custom_call.1']
    #allocation8 [shape = 'u8[4096]{0}', space=vmem, size = 0x1000, scoped, tag = 'output window, operand 0']
    %9 = vsyncpa [#allocation4], 0
    %s10 = scalar_lea.sflag [#allocation4], 1
    %11 = vsyncpa %s10, 0
    %12 = vsyncpa [#allocation7], 0
    %s13 = scalar_lea.sflag [#allocation7], 1
    %14 = vsyncpa %s13, 0
    %15 = vsyncpa [#allocation5], 0
    %s16 = scalar_lea.sflag [#allocation5], 1
    %17 = vsyncpa %s16, 0
    loop: start=0, step=1, limit=10
    $region2: #{tpu_custom_call.1} parent=1 // loop_pre_header
      _
    $region3: #{tpu_custom_call.1} parent=1 // loop_header
      %s19 = sphi 0, %s23
      %p20 = scmp.ge.s32.totalorder %s19, 10
      %s26 = sphi 0, %s38
      %s27 = sphi 0, %s34
      %s28 = sphi 0, %s26
      %s29 = sphi 0, %s27
      %s30 = sphi 0, %s28
      %s31 = sphi 0, %s29
      %s47 = sphi 0, %s49
      %s50 = sphi 0, %s47
      %s51 = sphi 0, %s50
      %s67 = sphi 0, %s51
      %s79 = sphi 0, %s81
      %s82 = sphi 0, %s79
      %s83 = sphi 0, %s82
      %s99 = sphi 0, %s83
      %s103 = sphi 0, %s103
      %s105 = sphi 0, %s103
      %s106 = sphi 0, %s105
      %s120 = sphi 0, %s106
      %s126 = sphi 0, %s128
      %s129 = sphi 0, %s126
      %s130 = sphi 0, %s129
      %s146 = sphi 0, %s130
      %s154 = sphi 0, %s156
      %s157 = sphi 0, %s154
      %s158 = sphi 0, %s157
      %s174 = sphi 0, %s158
    $region4: #{tpu_custom_call.1} parent=1 // loop_header_branch
      %22 = sbr.rel (%p20) target = $region8
    $region5: #{tpu_custom_call.1} parent=1 // loop_body
      %s24 = ssub.s32 %s19, 1
      %s25 = ssub.s32 %s19, 2
      %s32 = sadd.s32 1, %s27
      %p33 = scmp.ge.s32.totalorder %s32, 4
      %s34 = scalar_select %p33, 0, %s32
      %s35 = sadd.s32 1, %s26
      %s36 = scalar_select %p33, %s35, %s26
      %p37 = scmp.ge.s32.totalorder %s36, 2
      %s38 = scalar_select %p37, 0, %s36
      %p39 = scmp.lt.s32.totalorder %s27, 2
      %s40 = scalar_select %p39, %s27, 2
      %p41 = scmp.lt.s32.totalorder %s34, 2
      %s42 = scalar_select %p41, %s34, 2
      %s43 = ssub.s32 %s26, %s38
      %s44 = ssub.s32 %s40, %s42
      %s45 = sor.u32 %s43, %s44
      %p46 = scmp.eq.s32.totalorder %s45, 0
      %s48 = sadd.s32 %s47, 1
      %s49 = scalar_select %p46, %s47, %s48
      %p52 = pneg %p46
      %p53 = scmp.eq.s32.totalorder %s19, 7
      %p54 = por %p52, %p53
      %p55 = scmp.ne.s32.totalorder %s47, %s50
      %p56 = scmp.eq.s32.totalorder %s19, 0
      %p57 = por %p55, %p56
      %p58 = scmp.ne.s32.totalorder %s47, %s50
      %p59 = scmp.eq.s32.totalorder %s24, 7
      %p60 = por %p58, %p59
      %p61 = scmp.ne.s32.totalorder %s50, %s51
      %p62 = scmp.eq.s32.totalorder %s24, 0
      %p63 = por %p61, %p62
      %p64 = scmp.ne.s32.totalorder %s50, %s51
      %p65 = scmp.eq.s32.totalorder %s25, 7
      %p66 = por %p64, %p65
      %p68 = scmp.ne.s32.totalorder %s51, %s67
      %p69 = scmp.eq.s32.totalorder %s25, 0
      %p70 = por %p68, %p69
      %p71 = scmp.lt.s32.totalorder %s27, 2
      %s72 = scalar_select %p71, %s27, 2
      %p73 = scmp.lt.s32.totalorder %s34, 2
      %s74 = scalar_select %p73, %s34, 2
      %s75 = ssub.s32 %s26, %s38
      %s76 = ssub.s32 %s72, %s74
      %s77 = sor.u32 %s75, %s76
      %p78 = scmp.eq.s32.totalorder %s77, 0
      %s80 = sadd.s32 %s79, 1
      %s81 = scalar_select %p78, %s79, %s80
      %p84 = pneg %p78
      %p85 = scmp.eq.s32.totalorder %s19, 7
      %p86 = por %p84, %p85
      %p87 = scmp.ne.s32.totalorder %s79, %s82
      %p88 = scmp.eq.s32.totalorder %s19, 0
      %p89 = por %p87, %p88
      %p90 = scmp.ne.s32.totalorder %s79, %s82
      %p91 = scmp.eq.s32.totalorder %s24, 7
      %p92 = por %p90, %p91
      %p93 = scmp.ne.s32.totalorder %s82, %s83
      %p94 = scmp.eq.s32.totalorder %s24, 0
      %p95 = por %p93, %p94
      %p96 = scmp.ne.s32.totalorder %s82, %s83
      %p97 = scmp.eq.s32.totalorder %s25, 7
      %p98 = por %p96, %p97
      %p100 = scmp.ne.s32.totalorder %s83, %s99
      %p101 = scmp.eq.s32.totalorder %s25, 0
      %p102 = por %p100, %p101
      %s104 = sadd.s32 %s103, 1
      %p107 = scmp.eq.s32.totalorder %s19, 7
      %p108 = scmp.ne.s32.totalorder %s103, %s105
      %p109 = scmp.eq.s32.totalorder %s19, 0
      %p110 = por %p108, %p109
      %p111 = scmp.ne.s32.totalorder %s103, %s105
      %p112 = scmp.eq.s32.totalorder %s24, 7
      %p113 = por %p111, %p112
      %p114 = scmp.ne.s32.totalorder %s105, %s106
      %p115 = scmp.eq.s32.totalorder %s24, 0
      %p116 = por %p114, %p115
      %p117 = scmp.ne.s32.totalorder %s105, %s106
      %p118 = scmp.eq.s32.totalorder %s25, 7
      %p119 = por %p117, %p118
      %p121 = scmp.ne.s32.totalorder %s106, %s120
      %p122 = scmp.eq.s32.totalorder %s25, 0
      %p123 = por %p121, %p122
      %s124 = ssub.s32 %s27, %s34
      %p125 = scmp.eq.s32.totalorder %s124, 0
      %s127 = sadd.s32 %s126, 1
      %s128 = scalar_select %p125, %s126, %s127
      %p131 = pneg %p125
      %p132 = scmp.eq.s32.totalorder %s19, 7
      %p133 = por %p131, %p132
      %p134 = scmp.ne.s32.totalorder %s126, %s129
      %p135 = scmp.eq.s32.totalorder %s19, 0
      %p136 = por %p134, %p135
      %p137 = scmp.ne.s32.totalorder %s126, %s129
      %p138 = scmp.eq.s32.totalorder %s24, 7
      %p139 = por %p137, %p138
      %p140 = scmp.ne.s32.totalorder %s129, %s130
      %p141 = scmp.eq.s32.totalorder %s24, 0
      %p142 = por %p140, %p141
      %p143 = scmp.ne.s32.totalorder %s129, %s130
      %p144 = scmp.eq.s32.totalorder %s25, 7
      %p145 = por %p143, %p144
      %p147 = scmp.ne.s32.totalorder %s130, %s146
      %p148 = scmp.eq.s32.totalorder %s25, 0
      %p149 = por %p147, %p148
      %s150 = ssub.s32 %s26, %s38
      %s151 = ssub.s32 %s27, %s34
      %s152 = sor.u32 %s150, %s151
      %p153 = scmp.eq.s32.totalorder %s152, 0
      %s155 = sadd.s32 %s154, 1
      %s156 = scalar_select %p153, %s154, %s155
      %p159 = pneg %p153
      %p160 = scmp.eq.s32.totalorder %s19, 7
      %p161 = por %p159, %p160
      %p162 = scmp.ne.s32.totalorder %s154, %s157
      %p163 = scmp.eq.s32.totalorder %s19, 0
      %p164 = por %p162, %p163
      %p165 = scmp.ne.s32.totalorder %s154, %s157
      %p166 = scmp.eq.s32.totalorder %s24, 7
      %p167 = por %p165, %p166
      %p168 = scmp.ne.s32.totalorder %s157, %s158
      %p169 = scmp.eq.s32.totalorder %s24, 0
      %p170 = por %p168, %p169
      %p171 = scmp.ne.s32.totalorder %s157, %s158
      %p172 = scmp.eq.s32.totalorder %s25, 7
      %p173 = por %p171, %p172
      %p175 = scmp.ne.s32.totalorder %s158, %s174
      %p176 = scmp.eq.s32.totalorder %s25, 0
      %p177 = por %p175, %p176
      %p178 = scmp.le.s32.totalorder 1, %s19
      %p179 = scmp.lt.s32.totalorder %s19, 9
      %p180 = pnand %p178, %p179
      %p181 = pneg %p180
      // Predicated region
      $region9: #{tpu_custom_call.1} parent=5 // pred_check
        _
      $region10: #{tpu_custom_call.1} parent=5 // pred_check_branch
        %183 = sbr.rel (%p180) target = $region12
      $region11: #{tpu_custom_call.1} parent=5 // pred_region
        %s184 = ssub.s32 %s19, 1
        // Predicated region
        $region13: #{tpu_custom_call.1} parent=11 // pred_check
          %p185 = pneg %p116
        $region14: #{tpu_custom_call.1} parent=11 // pred_check_branch
          %187 = sbr.rel (%p185) target = $region16
        $region15: #{tpu_custom_call.1} parent=11 // pred_region
          _
        $region16: #{tpu_custom_call.1} parent=11 // pred_fallthru
          _
      $region12: #{tpu_custom_call.1} parent=5 // pred_fallthru
        _
      %p188 = scmp.lt.s32.totalorder %s19, 8
      // Predicated region
      $region17: #{tpu_custom_call.1} parent=5 // pred_check
        %p189 = pneg %p188
      $region18: #{tpu_custom_call.1} parent=5 // pred_check_branch
        %191 = sbr.rel (%p189) target = $region20
      $region19: #{tpu_custom_call.1} parent=5 // pred_region
        // Predicated region
        $region21: #{tpu_custom_call.1} parent=19 // pred_check
          %p192 = pneg %p57
        $region22: #{tpu_custom_call.1} parent=19 // pred_check_branch
          %194 = sbr.rel (%p192) target = $region24
        $region23: #{tpu_custom_call.1} parent=19 // pred_region
          %p195 = scmp.lt.s32.totalorder %s27, 2
          %s196 = scalar_select %p195, %s27, 2
          %p197 = scmp.lt.s32.totalorder %s26, 1
          %s198 = scalar_select %p197, %s26, 1
          %p199 = scmp.lt.s32.totalorder %s196, 2
          %s200 = scalar_select %p199, %s196, 2
          %s201 = smul.addr %s198, 3
          %s202 = sadd.s32 %s200, %s201
          %s203 = smul.addr %s202, 8
          %s204 = scalar_lea.vmem %s0, %s203
          %p205 = scmp.lt.s32.totalorder %s27, 2
          %s206 = scalar_select %p205, %s27, 2
        $region24: #{tpu_custom_call.1} parent=19 // pred_fallthru
          _
        // Predicated region
        $region25: #{tpu_custom_call.1} parent=19 // pred_check
          %p207 = pneg %p89
        $region26: #{tpu_custom_call.1} parent=19 // pred_check_branch
          %209 = sbr.rel (%p207) target = $region28
        $region27: #{tpu_custom_call.1} parent=19 // pred_region
          %s210 = sand.u32 %s79, 1
          %s211 = scalar_lea.sflag [#allocation4], %s210
          %s212 = sand.u32 %s79, 1
          %s213 = smul.addr %s212, 8
          %s214 = scalar_lea.vmem [#allocation3], %s213
          %p215 = scmp.lt.s32.totalorder %s27, 2
          %s216 = scalar_select %p215, %s27, 2
          %s218 = ssub.s32 128, 128
          %219 = vsyncadd %s211, %s218
          %s220 = smul.addr %s26, 3
          %s221 = sadd.s32 %s216, %s220
          %s222 = smul.addr %s221, 128
          %s223 = scalar_lea.hbm %s1, %s222
          %s225 = sshll.u32 %s214, 4
          %s226 = int_to_ptr.vmem [resolvable:$true] %s225
          %228 = dma.hbm_to_vmem [thread:$0]  %s223, 128, %s226, %s211
        $region28: #{tpu_custom_call.1} parent=19 // pred_fallthru
          _
        // Predicated region
        $region29: #{tpu_custom_call.1} parent=19 // pred_check
          %p229 = pneg %p136
        $region30: #{tpu_custom_call.1} parent=19 // pred_check_branch
          %231 = sbr.rel (%p229) target = $region32
        $region31: #{tpu_custom_call.1} parent=19 // pred_region
          %s232 = sand.u32 %s126, 1
          %s233 = scalar_lea.sflag [#allocation7], %s232
          %s234 = sand.u32 %s126, 1
          %s235 = smul.addr %s234, 4
          %s236 = scalar_lea.vmem [#allocation6], %s235
          %s238 = ssub.s32 64, 64
          %239 = vsyncadd %s233, %s238
          %s240 = smul.addr %s27, 64
          %s241 = scalar_lea.hbm %s3, %s240
          %s243 = sshll.u32 %s236, 4
          %s244 = int_to_ptr.vmem [resolvable:$true] %s243
          %246 = dma.hbm_to_vmem [thread:$0]  %s241, 64, %s244, %s233
        $region32: #{tpu_custom_call.1} parent=19 // pred_fallthru
          _
      $region20: #{tpu_custom_call.1} parent=5 // pred_fallthru
        _
      %p247 = scmp.le.s32.totalorder 1, %s19
      %p248 = scmp.lt.s32.totalorder %s19, 9
      %p249 = pnand %p247, %p248
      %p250 = pneg %p249
      // Predicated region
      $region33: #{tpu_custom_call.1} parent=5 // pred_check
        _
      $region34: #{tpu_custom_call.1} parent=5 // pred_check_branch
        %252 = sbr.rel (%p249) target = $region36
      $region35: #{tpu_custom_call.1} parent=5 // pred_region
        %s253 = ssub.s32 %s19, 1
        %s254 = sand.u32 %s82, 1
        %s255 = scalar_lea.sflag [#allocation4], %s254
        %s256 = sand.u32 %s82, 1
        %s257 = smul.addr %s256, 8
        %s258 = scalar_lea.vmem [#allocation3], %s257
        // Predicated region
        $region37: #{tpu_custom_call.1} parent=35 // pred_check
          %p259 = pneg %p95
        $region38: #{tpu_custom_call.1} parent=35 // pred_check_branch
          %261 = sbr.rel (%p259) target = $region40
        $region39: #{tpu_custom_call.1} parent=35 // pred_region
          %262 = dma.done %s255, 128
        $region40: #{tpu_custom_call.1} parent=35 // pred_fallthru
          _
        %s263 = sand.u32 %s129, 1
        %s264 = scalar_lea.sflag [#allocation7], %s263
        %s265 = sand.u32 %s129, 1
        %s266 = smul.addr %s265, 4
        %s267 = scalar_lea.vmem [#allocation6], %s266
        // Predicated region
        $region41: #{tpu_custom_call.1} parent=35 // pred_check
          %p268 = pneg %p142
        $region42: #{tpu_custom_call.1} parent=35 // pred_check_branch
          %270 = sbr.rel (%p268) target = $region44
        $region43: #{tpu_custom_call.1} parent=35 // pred_region
          %271 = dma.done %s264, 64
        $region44: #{tpu_custom_call.1} parent=35 // pred_fallthru
          _
        %p272 = scmp.lt.s32.totalorder %s29, 2
        %s273 = scalar_select %p272, %s29, 2
        %p274 = scmp.lt.s32.totalorder %s28, 1
        %s275 = scalar_select %p274, %s28, 1
        %p276 = scmp.lt.s32.totalorder %s273, 2
        %s277 = scalar_select %p276, %s273, 2
        %s278 = smul.addr %s275, 3
        %s279 = sadd.s32 %s277, %s278
        %s280 = smul.addr %s279, 8
        %s281 = scalar_lea.vmem %s0, %s280
        %p282 = pneg %p63
        %p283 = pneg %p60
        %s284 = sand.u32 %s82, 1
        %s285 = scalar_lea.sflag [#allocation4], %s284
        %s286 = sand.u32 %s82, 1
        %s287 = smul.addr %s286, 8
        %s288 = scalar_lea.vmem [#allocation3], %s287
        %p289 = pneg %p95
        %p290 = pneg %p92
        %p291 = pneg %p116
        %p292 = pneg %p113
        %s293 = sand.u32 %s129, 1
        %s294 = scalar_lea.sflag [#allocation7], %s293
        %s295 = sand.u32 %s129, 1
        %s296 = smul.addr %s295, 4
        %s297 = scalar_lea.vmem [#allocation6], %s296
        %p298 = pneg %p142
        %p299 = pneg %p139
        %p300 = pneg %p170
        %p301 = pneg %p167
        %s302 = sand.u32 %s157, 1
        %s303 = scalar_lea.sflag [#allocation5], %s302
        %s304 = sand.u32 %s157, 1
        %s305 = smul.addr %s304, 4
        %s306 = scalar_lea.vmem [#allocation8], %s305
        %p307 = scmp.lt.s32.totalorder %s29, 2
        %s308 = scalar_select %p307, %s29, 2
        %p309 = scmp.lt.s32.totalorder %s28, 1
        %s310 = scalar_select %p309, %s28, 1
        %p311 = scmp.lt.s32.totalorder %s308, 2
        %s312 = scalar_select %p311, %s308, 2
        %s313 = smul.addr %s310, 3
        %s314 = sadd.s32 %s312, %s313
        %s315 = smul.addr %s314, 8
        %s316 = scalar_lea.vmem %s0, %s315
        %p317 = scmp.lt.s32.totalorder %s29, 2
        %s318 = scalar_select %p317, %s29, 2
        %p319 = scmp.lt.s32.totalorder %s29, 2
        %s320 = scalar_select %p319, %s29, 2
        %p321 = scmp.eq.s32.totalorder %s29, 0
        // Predicated region
        $region45: #{tpu_custom_call.1} parent=35 // pred_check
          %p322 = pneg %p321
        $region46: #{tpu_custom_call.1} parent=35 // pred_check_branch
          %324 = sbr.rel (%p322) target = $region48
        $region47: #{tpu_custom_call.1} parent=35 // pred_region
          %325 = vst [vmem:[#allocation2] sm:$0xf] 0.0
        $region48: #{tpu_custom_call.1} parent=35 // pred_fallthru
          _
        %v326 = vld [vmem:[%s316] sm:$0xff]
        %v327 = vld [vmem:[%s258] sm:$0xff]
        %v328 = vlaneseq
        %v329 = vand.u32 %v328, 127
        %s330 = smul.u32 %s29, 128
        %v331 = vstv %s330
        %v332 = vadd.s32 %v329, %v331
        %vm333 = vcmp.lt.s32.totalorder %v332, 384
        %v334 = vsel %vm333, %v326, 0.0
        %v335 = vsel %vm333, %v327, 0.0
        %v336 = vld [vmem:[%s2] sm:$0xff]
        %v337 = vld [vmem:[%s2 + $0x8] sm:$0xff]
        %s338 = scalar_lea.vmem %s2, 16
        %v339 = vld [vmem:[%s338] sm:$0xff]
        %v340 = vld [vmem:[%s338 + $0x8] sm:$0xff]
        %vm341 = vcmask 64512
        %v343 = vsel %vm341, %v339, 0
        %v346 = vsel %vm341, %v340, 0
        %348 = vmatprep.subr.mxu0 0.0
        %v349 = vand.u32 %v335, 4294901760
        %350 = vmatpush1.msra.mxu0 %v349
        %351 = vmatprep.subr.mxu0 0.0
        %352 = vmatpush1.msra.mxu0 0.0
        %353 = vmatprep.subr.mxu0 0.0
        %354 = vmatpush1.msra.mxu0 0.0
        %355 = vmatprep.subr.mxu0 0.0
        %356 = vmatpush1.msra.mxu0 0.0
        %357 = vmatprep.subr.mxu0 0.0
        %358 = vmatpush1.msra.mxu0 0.0
        %359 = vmatprep.subr.mxu0 0.0
        %360 = vmatpush1.msra.mxu0 0.0
        %361 = vmatprep.subr.mxu0 0.0
        %362 = vmatpush1.msra.mxu0 0.0
        %363 = vmatprep.subr.mxu0 0.0
        %364 = vmatpush1.msra.mxu0 0.0
        %365 = vmatprep.subr.mxu0 0.0
        %366 = vmatpush1.msra.mxu0 0.0
        %367 = vmatprep.subr.mxu0 0.0
        %368 = vmatpush1.msra.mxu0 0.0
        %369 = vmatprep.subr.mxu0 0.0
        %370 = vmatpush1.msra.mxu0 0.0
        %371 = vmatprep.subr.mxu0 0.0
        %372 = vmatpush1.msra.mxu0 0.0
        %373 = vmatprep.subr.mxu0 0.0
        %374 = vmatpush1.msra.mxu0 0.0
        %375 = vmatprep.subr.mxu0 0.0
        %376 = vmatpush1.msra.mxu0 0.0
        %377 = vmatprep.subr.mxu0 0.0
        %378 = vmatpush1.msra.mxu0 0.0
        %379 = vmatprep.subr.mxu0 0.0
        %380 = vmatpush1.msra.mxu0 0.0
        %381 = vmatprep.subr.mxu0 0.0
        %382 = vmatpush1.msra.mxu0 0.0
        %383 = vmatprep.subr.mxu0 0.0
        %384 = vmatpush1.msra.mxu0 0.0
        %385 = vmatprep.subr.mxu0 0.0
        %386 = vmatpush1.msra.mxu0 0.0
        %387 = vmatprep.subr.mxu0 0.0
        %388 = vmatpush1.msra.mxu0 0.0
        %389 = vmatprep.subr.mxu0 0.0
        %390 = vmatpush1.msra.mxu0 0.0
        %391 = vmatprep.subr.mxu0 0.0
        %392 = vmatpush1.msra.mxu0 0.0
        %393 = vmatprep.subr.mxu0 0.0
        %394 = vmatpush1.msra.mxu0 0.0
        %395 = vmatprep.subr.mxu0 0.0
        %396 = vmatpush1.msra.mxu0 0.0
        %397 = vmatprep.subr.mxu0 0.0
        %398 = vmatpush1.msra.mxu0 0.0
        %399 = vmatprep.subr.mxu0 0.0
        %400 = vmatpush1.msra.mxu0 0.0
        %401 = vmatprep.subr.mxu0 0.0
        %402 = vmatpush1.msra.mxu0 0.0
        %403 = vmatprep.subr.mxu0 0.0
        %404 = vmatpush1.msra.mxu0 0.0
        %405 = vmatprep.subr.mxu0 0.0
        %406 = vmatpush1.msra.mxu0 0.0
        %407 = vmatprep.subr.mxu0 0.0
        %408 = vmatpush1.msra.mxu0 0.0
        %409 = vmatprep.subr.mxu0 0.0
        %410 = vmatpush1.msra.mxu0 0.0
        %411 = vmatprep.subr.mxu0 0.0
        %412 = vmatpush1.msra.mxu0 0.0
        %413 = vmatprep.mubr.f32.mxu0 0.0
        %v414 = vand.u32 %v343, 4294901760
        %v415 = vsub.f32 %v343, %v414
        %v416 = vand.u32 %v415, 4294901760
        %v417 = vsub.f32 %v415, %v416
        %v418 = vand.u32 %v417, 4294901760
        %419 = vmatmul.mubr.f32.gmra.mrb[0].mxu0 %v418
        %v420 = vpop.f32.mrb[0].mxu0
        %v421 = vadd.f32 0.0, %v420
        %v422 = vpop.f32.mrb[0].mxu0
        %423 = vmatprep.mubr.f32.mxu0 0.0
        %v424 = vand.u32 %v346, 4294901760
        %v425 = vsub.f32 %v346, %v424
        %v426 = vand.u32 %v425, 4294901760
        %v427 = vsub.f32 %v425, %v426
        %v428 = vand.u32 %v427, 4294901760
        %429 = vmatmul.mubr.f32.gmra.mrb[0].mxu0 %v428
        %v430 = vpop.f32.mrb[0].mxu0
        %v431 = vadd.f32 0.0, %v430
        %v432 = vpop.f32.mrb[0].mxu0
        %433 = vdwg.mxu0
        %434 = vmatprep.subr.mxu0 0.0
        %v435 = vand.u32 %v335, 4294901760
        %v436 = vsub.f32 %v335, %v435
        %v437 = vand.u32 %v436, 4294901760
        %v438 = vsub.f32 %v436, %v437
        %v439 = vand.u32 %v438, 4294901760
        %440 = vmatpush1.msra.mxu0 %v439
        %441 = vmatprep.subr.mxu0 0.0
        %442 = vmatpush1.msra.mxu0 0.0
        %443 = vmatprep.subr.mxu0 0.0
        %444 = vmatpush1.msra.mxu0 0.0
        %445 = vmatprep.subr.mxu0 0.0
        %446 = vmatpush1.msra.mxu0 0.0
        %447 = vmatprep.subr.mxu0 0.0
        %448 = vmatpush1.msra.mxu0 0.0
        %449 = vmatprep.subr.mxu0 0.0
        %450 = vmatpush1.msra.mxu0 0.0
        %451 = vmatprep.subr.mxu0 0.0
        %452 = vmatpush1.msra.mxu0 0.0
        %453 = vmatprep.subr.mxu0 0.0
        %454 = vmatpush1.msra.mxu0 0.0
        %455 = vmatprep.subr.mxu0 0.0
        %456 = vmatpush1.msra.mxu0 0.0
        %457 = vmatprep.subr.mxu0 0.0
        %458 = vmatpush1.msra.mxu0 0.0
        %459 = vmatprep.subr.mxu0 0.0
        %460 = vmatpush1.msra.mxu0 0.0
        %461 = vmatprep.subr.mxu0 0.0
        %462 = vmatpush1.msra.mxu0 0.0
        %463 = vmatprep.subr.mxu0 0.0
        %464 = vmatpush1.msra.mxu0 0.0
        %465 = vmatprep.subr.mxu0 0.0
        %466 = vmatpush1.msra.mxu0 0.0
        %467 = vmatprep.subr.mxu0 0.0
        %468 = vmatpush1.msra.mxu0 0.0
        %469 = vmatprep.subr.mxu0 0.0
        %470 = vmatpush1.msra.mxu0 0.0
        %471 = vmatprep.subr.mxu0 0.0
        %472 = vmatpush1.msra.mxu0 0.0
        %473 = vmatprep.subr.mxu0 0.0
        %474 = vmatpush1.msra.mxu0 0.0
        %475 = vmatprep.subr.mxu0 0.0
        %476 = vmatpush1.msra.mxu0 0.0
        %477 = vmatprep.subr.mxu0 0.0
        %478 = vmatpush1.msra.mxu0 0.0
        %479 = vmatprep.subr.mxu0 0.0
        %480 = vmatpush1.msra.mxu0 0.0
        %481 = vmatprep.subr.mxu0 0.0
        %482 = vmatpush1.msra.mxu0 0.0
        %483 = vmatprep.subr.mxu0 0.0
        %484 = vmatpush1.msra.mxu0 0.0
        %485 = vmatprep.subr.mxu0 0.0
        %486 = vmatpush1.msra.mxu0 0.0
        %487 = vmatprep.subr.mxu0 0.0
        %488 = vmatpush1.msra.mxu0 0.0
        %489 = vmatprep.subr.mxu0 0.0
        %490 = vmatpush1.msra.mxu0 0.0
        %491 = vmatprep.subr.mxu0 0.0
        %492 = vmatpush1.msra.mxu0 0.0
        %493 = vmatprep.subr.mxu0 0.0
        %494 = vmatpush1.msra.mxu0 0.0
        %495 = vmatprep.subr.mxu0 0.0
        %496 = vmatpush1.msra.mxu0 0.0
        %497 = vmatprep.subr.mxu0 0.0
        %498 = vmatpush1.msra.mxu0 0.0
        %499 = vmatprep.subr.mxu0 0.0
        %500 = vmatpush1.msra.mxu0 0.0
        %501 = vmatprep.subr.mxu0 0.0
        %502 = vmatpush1.msra.mxu0 0.0
        %503 = vmatprep.mubr.f32.mxu0 0.0
        %v504 = vand.u32 %v343, 4294901760
        %505 = vmatmul.mubr.f32.gmra.mrb[0].mxu0 %v504
        %v506 = vpop.f32.mrb[0].mxu0
        %v507 = vadd.f32 %v421, %v506
        %v508 = vpop.f32.mrb[0].mxu0
        %509 = vmatprep.mubr.f32.mxu0 0.0
        %v510 = vand.u32 %v346, 4294901760
        %511 = vmatmul.mubr.f32.gmra.mrb[0].mxu0 %v510
        %v512 = vpop.f32.mrb[0].mxu0
        %v513 = vadd.f32 %v431, %v512
        %v514 = vpop.f32.mrb[0].mxu0
        %515 = vdwg.mxu0
        %516 = vmatprep.subr.mxu0 0.0
        %v517 = vand.u32 %v335, 4294901760
        %v518 = vsub.f32 %v335, %v517
        %519 = vmatpush1.msra.mxu0 %v518
        %520 = vmatprep.subr.mxu0 0.0
        %521 = vmatpush1.msra.mxu0 0.0
        %522 = vmatprep.subr.mxu0 0.0
        %523 = vmatpush1.msra.mxu0 0.0
        %524 = vmatprep.subr.mxu0 0.0
        %525 = vmatpush1.msra.mxu0 0.0
        %526 = vmatprep.subr.mxu0 0.0
        %527 = vmatpush1.msra.mxu0 0.0
        %528 = vmatprep.subr.mxu0 0.0
        %529 = vmatpush1.msra.mxu0 0.0
        %530 = vmatprep.subr.mxu0 0.0
        %531 = vmatpush1.msra.mxu0 0.0
        %532 = vmatprep.subr.mxu0 0.0
        %533 = vmatpush1.msra.mxu0 0.0
        %534 = vmatprep.subr.mxu0 0.0
        %535 = vmatpush1.msra.mxu0 0.0
        %536 = vmatprep.subr.mxu0 0.0
        %537 = vmatpush1.msra.mxu0 0.0
        %538 = vmatprep.subr.mxu0 0.0
        %539 = vmatpush1.msra.mxu0 0.0
        %540 = vmatprep.subr.mxu0 0.0
        %541 = vmatpush1.msra.mxu0 0.0
        %542 = vmatprep.subr.mxu0 0.0
        %543 = vmatpush1.msra.mxu0 0.0
        %544 = vmatprep.subr.mxu0 0.0
        %545 = vmatpush1.msra.mxu0 0.0
        %546 = vmatprep.subr.mxu0 0.0
        %547 = vmatpush1.msra.mxu0 0.0
        %548 = vmatprep.subr.mxu0 0.0
        %549 = vmatpush1.msra.mxu0 0.0
        %550 = vmatprep.subr.mxu0 0.0
        %551 = vmatpush1.msra.mxu0 0.0
        %552 = vmatprep.subr.mxu0 0.0
        %553 = vmatpush1.msra.mxu0 0.0
        %554 = vmatprep.subr.mxu0 0.0
        %555 = vmatpush1.msra.mxu0 0.0
        %556 = vmatprep.subr.mxu0 0.0
        %557 = vmatpush1.msra.mxu0 0.0
        %558 = vmatprep.subr.mxu0 0.0
        %559 = vmatpush1.msra.mxu0 0.0
        %560 = vmatprep.subr.mxu0 0.0
        %561 = vmatpush1.msra.mxu0 0.0
        %562 = vmatprep.subr.mxu0 0.0
        %563 = vmatpush1.msra.mxu0 0.0
        %564 = vmatprep.subr.mxu0 0.0
        %565 = vmatpush1.msra.mxu0 0.0
        %566 = vmatprep.subr.mxu0 0.0
        %567 = vmatpush1.msra.mxu0 0.0
        %568 = vmatprep.subr.mxu0 0.0
        %569 = vmatpush1.msra.mxu0 0.0
        %570 = vmatprep.subr.mxu0 0.0
        %571 = vmatpush1.msra.mxu0 0.0
        %572 = vmatprep.subr.mxu0 0.0
        %573 = vmatpush1.msra.mxu0 0.0
        %574 = vmatprep.subr.mxu0 0.0
        %575 = vmatpush1.msra.mxu0 0.0
        %576 = vmatprep.subr.mxu0 0.0
        %577 = vmatpush1.msra.mxu0 0.0
        %578 = vmatprep.subr.mxu0 0.0
        %579 = vmatpush1.msra.mxu0 0.0
        %580 = vmatprep.subr.mxu0 0.0
        %581 = vmatpush1.msra.mxu0 0.0
        %582 = vmatprep.mubr.f32.mxu0 0.0
        %v583 = vand.u32 %v343, 4294901760
        %v584 = vsub.f32 %v343, %v583
        %585 = vmatmul.mubr.f32.gmra.mrb[0].mxu0 %v584
        %v586 = vpop.f32.mrb[0].mxu0
        %v587 = vadd.f32 %v507, %v586
        %v588 = vpop.f32.mrb[0].mxu0
        %589 = vmatprep.mubr.f32.mxu0 0.0
        %v590 = vand.u32 %v346, 4294901760
        %v591 = vsub.f32 %v346, %v590
        %592 = vmatmul.mubr.f32.gmra.mrb[0].mxu0 %v591
        %v593 = vpop.f32.mrb[0].mxu0
        %v594 = vadd.f32 %v513, %v593
        %v595 = vpop.f32.mrb[0].mxu0
        %596 = vdwg.mxu0
        %597 = vmatprep.subr.mxu0 0.0
        %v598 = vand.u32 %v335, 4294901760
        %599 = vmatpush1.msra.mxu0 %v598
        %600 = vmatprep.subr.mxu0 0.0
        %601 = vmatpush1.msra.mxu0 0.0
        %602 = vmatprep.subr.mxu0 0.0
        %603 = vmatpush1.msra.mxu0 0.0
        %604 = vmatprep.subr.mxu0 0.0
        %605 = vmatpush1.msra.mxu0 0.0
        %606 = vmatprep.subr.mxu0 0.0
        %607 = vmatpush1.msra.mxu0 0.0
        %608 = vmatprep.subr.mxu0 0.0
        %609 = vmatpush1.msra.mxu0 0.0
        %610 = vmatprep.subr.mxu0 0.0
        %611 = vmatpush1.msra.mxu0 0.0
        %612 = vmatprep.subr.mxu0 0.0
        %613 = vmatpush1.msra.mxu0 0.0
        %614 = vmatprep.subr.mxu0 0.0
        %615 = vmatpush1.msra.mxu0 0.0
        %616 = vmatprep.subr.mxu0 0.0
        %617 = vmatpush1.msra.mxu0 0.0
        %618 = vmatprep.subr.mxu0 0.0
        %619 = vmatpush1.msra.mxu0 0.0
        %620 = vmatprep.subr.mxu0 0.0
        %621 = vmatpush1.msra.mxu0 0.0
        %622 = vmatprep.subr.mxu0 0.0
        %623 = vmatpush1.msra.mxu0 0.0
        %624 = vmatprep.subr.mxu0 0.0
        %625 = vmatpush1.msra.mxu0 0.0
        %626 = vmatprep.subr.mxu0 0.0
        %627 = vmatpush1.msra.mxu0 0.0
        %628 = vmatprep.subr.mxu0 0.0
        %629 = vmatpush1.msra.mxu0 0.0
        %630 = vmatprep.subr.mxu0 0.0
        %631 = vmatpush1.msra.mxu0 0.0
        %632 = vmatprep.subr.mxu0 0.0
        %633 = vmatpush1.msra.mxu0 0.0
        %634 = vmatprep.subr.mxu0 0.0
        %635 = vmatpush1.msra.mxu0 0.0
        %636 = vmatprep.subr.mxu0 0.0
        %637 = vmatpush1.msra.mxu0 0.0
        %638 = vmatprep.subr.mxu0 0.0
        %639 = vmatpush1.msra.mxu0 0.0
        %640 = vmatprep.subr.mxu0 0.0
        %641 = vmatpush1.msra.mxu0 0.0
        %642 = vmatprep.subr.mxu0 0.0
        %643 = vmatpush1.msra.mxu0 0.0
        %644 = vmatprep.subr.mxu0 0.0
        %645 = vmatpush1.msra.mxu0 0.0
        %646 = vmatprep.subr.mxu0 0.0
        %647 = vmatpush1.msra.mxu0 0.0
        %648 = vmatprep.subr.mxu0 0.0
        %649 = vmatpush1.msra.mxu0 0.0
        %650 = vmatprep.subr.mxu0 0.0
        %651 = vmatpush1.msra.mxu0 0.0
        %652 = vmatprep.subr.mxu0 0.0
        %653 = vmatpush1.msra.mxu0 0.0
        %654 = vmatprep.subr.mxu0 0.0
        %655 = vmatpush1.msra.mxu0 0.0
        %656 = vmatprep.subr.mxu0 0.0
        %657 = vmatpush1.msra.mxu0 0.0
        %658 = vmatprep.subr.mxu0 0.0
        %659 = vmatpush1.msra.mxu0 0.0
        %660 = vmatprep.subr.mxu0 0.0
        %661 = vmatpush1.msra.mxu0 0.0
        %662 = vmatprep.mubr.f32.mxu0 0.0
        %v663 = vand.u32 %v343, 4294901760
        %v664 = vsub.f32 %v343, %v663
        %v665 = vand.u32 %v664, 4294901760
        %666 = vmatmul.mubr.f32.gmra.mrb[0].mxu0 %v665
        %v667 = vpop.f32.mrb[0].mxu0
        %v668 = vadd.f32 %v587, %v667
        %v669 = vpop.f32.mrb[0].mxu0
        %670 = vmatprep.mubr.f32.mxu0 0.0
        %v671 = vand.u32 %v346, 4294901760
        %v672 = vsub.f32 %v346, %v671
        %v673 = vand.u32 %v672, 4294901760
        %674 = vmatmul.mubr.f32.gmra.mrb[0].mxu0 %v673
        %v675 = vpop.f32.mrb[0].mxu0
        %v676 = vadd.f32 %v594, %v675
        %v677 = vpop.f32.mrb[0].mxu0
        %678 = vdwg.mxu0
        %679 = vmatprep.subr.mxu0 0.0
        %v680 = vand.u32 %v335, 4294901760
        %v681 = vsub.f32 %v335, %v680
        %v682 = vand.u32 %v681, 4294901760
        %683 = vmatpush1.msra.mxu0 %v682
        %684 = vmatprep.subr.mxu0 0.0
        %685 = vmatpush1.msra.mxu0 0.0
        %686 = vmatprep.subr.mxu0 0.0
        %687 = vmatpush1.msra.mxu0 0.0
        %688 = vmatprep.subr.mxu0 0.0
        %689 = vmatpush1.msra.mxu0 0.0
        %690 = vmatprep.subr.mxu0 0.0
        %691 = vmatpush1.msra.mxu0 0.0
        %692 = vmatprep.subr.mxu0 0.0
        %693 = vmatpush1.msra.mxu0 0.0
        %694 = vmatprep.subr.mxu0 0.0
        %695 = vmatpush1.msra.mxu0 0.0
        %696 = vmatprep.subr.mxu0 0.0
        %697 = vmatpush1.msra.mxu0 0.0
        %698 = vmatprep.subr.mxu0 0.0
        %699 = vmatpush1.msra.mxu0 0.0
        %700 = vmatprep.subr.mxu0 0.0
        %701 = vmatpush1.msra.mxu0 0.0
        %702 = vmatprep.subr.mxu0 0.0
        %703 = vmatpush1.msra.mxu0 0.0
        %704 = vmatprep.subr.mxu0 0.0
        %705 = vmatpush1.msra.mxu0 0.0
        %706 = vmatprep.subr.mxu0 0.0
        %707 = vmatpush1.msra.mxu0 0.0
        %708 = vmatprep.subr.mxu0 0.0
        %709 = vmatpush1.msra.mxu0 0.0
        %710 = vmatprep.subr.mxu0 0.0
        %711 = vmatpush1.msra.mxu0 0.0
        %712 = vmatprep.subr.mxu0 0.0
        %713 = vmatpush1.msra.mxu0 0.0
        %714 = vmatprep.subr.mxu0 0.0
        %715 = vmatpush1.msra.mxu0 0.0
        %716 = vmatprep.subr.mxu0 0.0
        %717 = vmatpush1.msra.mxu0 0.0
        %718 = vmatprep.subr.mxu0 0.0
        %719 = vmatpush1.msra.mxu0 0.0
        %720 = vmatprep.subr.mxu0 0.0
        %721 = vmatpush1.msra.mxu0 0.0
        %722 = vmatprep.subr.mxu0 0.0
        %723 = vmatpush1.msra.mxu0 0.0
        %724 = vmatprep.subr.mxu0 0.0
        %725 = vmatpush1.msra.mxu0 0.0
        %726 = vmatprep.subr.mxu0 0.0
        %727 = vmatpush1.msra.mxu0 0.0
        %728 = vmatprep.subr.mxu0 0.0
        %729 = vmatpush1.msra.mxu0 0.0
        %730 = vmatprep.subr.mxu0 0.0
        %731 = vmatpush1.msra.mxu0 0.0
        %732 = vmatprep.subr.mxu0 0.0
        %733 = vmatpush1.msra.mxu0 0.0
        %734 = vmatprep.subr.mxu0 0.0
        %735 = vmatpush1.msra.mxu0 0.0
        %736 = vmatprep.subr.mxu0 0.0
        %737 = vmatpush1.msra.mxu0 0.0
        %738 = vmatprep.subr.mxu0 0.0
        %739 = vmatpush1.msra.mxu0 0.0
        %740 = vmatprep.subr.mxu0 0.0
        %741 = vmatpush1.msra.mxu0 0.0
        %742 = vmatprep.subr.mxu0 0.0
        %743 = vmatpush1.msra.mxu0 0.0
        %744 = vmatprep.subr.mxu0 0.0
        %745 = vmatpush1.msra.mxu0 0.0
        %746 = vmatprep.mubr.f32.mxu0 0.0
        %v747 = vand.u32 %v343, 4294901760
        %748 = vmatmul.mubr.f32.gmra.mrb[0].mxu0 %v747
        %v749 = vpop.f32.mrb[0].mxu0
        %v750 = vadd.f32 %v668, %v749
        %v751 = vpop.f32.mrb[0].mxu0
        %752 = vmatprep.mubr.f32.mxu0 0.0
        %v753 = vand.u32 %v346, 4294901760
        %754 = vmatmul.mubr.f32.gmra.mrb[0].mxu0 %v753
        %v755 = vpop.f32.mrb[0].mxu0
        %v756 = vadd.f32 %v676, %v755
        %v757 = vpop.f32.mrb[0].mxu0
        %758 = vdwg.mxu0
        %759 = vmatprep.subr.mxu0 0.0
        %v760 = vand.u32 %v335, 4294901760
        %761 = vmatpush1.msra.mxu0 %v760
        %762 = vmatprep.subr.mxu0 0.0
        %763 = vmatpush1.msra.mxu0 0.0
        %764 = vmatprep.subr.mxu0 0.0
        %765 = vmatpush1.msra.mxu0 0.0
        %766 = vmatprep.subr.mxu0 0.0
        %767 = vmatpush1.msra.mxu0 0.0
        %768 = vmatprep.subr.mxu0 0.0
        %769 = vmatpush1.msra.mxu0 0.0
        %770 = vmatprep.subr.mxu0 0.0
        %771 = vmatpush1.msra.mxu0 0.0
        %772 = vmatprep.subr.mxu0 0.0
        %773 = vmatpush1.msra.mxu0 0.0
        %774 = vmatprep.subr.mxu0 0.0
        %775 = vmatpush1.msra.mxu0 0.0
        %776 = vmatprep.subr.mxu0 0.0
        %777 = vmatpush1.msra.mxu0 0.0
        %778 = vmatprep.subr.mxu0 0.0
        %779 = vmatpush1.msra.mxu0 0.0
        %780 = vmatprep.subr.mxu0 0.0
        %781 = vmatpush1.msra.mxu0 0.0
        %782 = vmatprep.subr.mxu0 0.0
        %783 = vmatpush1.msra.mxu0 0.0
        %784 = vmatprep.subr.mxu0 0.0
        %785 = vmatpush1.msra.mxu0 0.0
        %786 = vmatprep.subr.mxu0 0.0
        %787 = vmatpush1.msra.mxu0 0.0
        %788 = vmatprep.subr.mxu0 0.0
        %789 = vmatpush1.msra.mxu0 0.0
        %790 = vmatprep.subr.mxu0 0.0
        %791 = vmatpush1.msra.mxu0 0.0
        %792 = vmatprep.subr.mxu0 0.0
        %793 = vmatpush1.msra.mxu0 0.0
        %794 = vmatprep.subr.mxu0 0.0
        %795 = vmatpush1.msra.mxu0 0.0
        %796 = vmatprep.subr.mxu0 0.0
        %797 = vmatpush1.msra.mxu0 0.0
        %798 = vmatprep.subr.mxu0 0.0
        %799 = vmatpush1.msra.mxu0 0.0
        %800 = vmatprep.subr.mxu0 0.0
        %801 = vmatpush1.msra.mxu0 0.0
        %802 = vmatprep.subr.mxu0 0.0
        %803 = vmatpush1.msra.mxu0 0.0
        %804 = vmatprep.subr.mxu0 0.0
        %805 = vmatpush1.msra.mxu0 0.0
        %806 = vmatprep.subr.mxu0 0.0
        %807 = vmatpush1.msra.mxu0 0.0
        %808 = vmatprep.subr.mxu0 0.0
        %809 = vmatpush1.msra.mxu0 0.0
        %810 = vmatprep.subr.mxu0 0.0
        %811 = vmatpush1.msra.mxu0 0.0
        %812 = vmatprep.subr.mxu0 0.0
        %813 = vmatpush1.msra.mxu0 0.0
        %814 = vmatprep.subr.mxu0 0.0
        %815 = vmatpush1.msra.mxu0 0.0
        %816 = vmatprep.subr.mxu0 0.0
        %817 = vmatpush1.msra.mxu0 0.0
        %818 = vmatprep.subr.mxu0 0.0
        %819 = vmatpush1.msra.mxu0 0.0
        %820 = vmatprep.subr.mxu0 0.0
        %821 = vmatpush1.msra.mxu0 0.0
        %822 = vmatprep.subr.mxu0 0.0
        %823 = vmatpush1.msra.mxu0 0.0
        %824 = vmatprep.mubr.f32.mxu0 0.0
        %v825 = vand.u32 %v343, 4294901760
        %826 = vmatmul.mubr.f32.gmra.mrb[0].mxu0 %v825
        %v827 = vpop.f32.mrb[0].mxu0
        %v828 = vadd.f32 %v750, %v827
        %v829 = vpop.f32.mrb[0].mxu0
        %830 = vmatprep.mubr.f32.mxu0 0.0
        %v831 = vand.u32 %v346, 4294901760
        %832 = vmatmul.mubr.f32.gmra.mrb[0].mxu0 %v831
        %v833 = vpop.f32.mrb[0].mxu0
        %v834 = vadd.f32 %v756, %v833
        %v835 = vpop.f32.mrb[0].mxu0
        %836 = vdwg.mxu0
        %v838 = vsel %vm341, %v336, 0
        %v841 = vsel %vm341, %v337, 0
        %843 = vmatprep.subr.mxu0 0.0
        %v844 = vand.u32 %v334, 4294901760
        %845 = vmatpush1.msra.mxu0 %v844
        %846 = vmatprep.subr.mxu0 0.0
        %847 = vmatpush1.msra.mxu0 0.0
        %848 = vmatprep.subr.mxu0 0.0
        %849 = vmatpush1.msra.mxu0 0.0
        %850 = vmatprep.subr.mxu0 0.0
        %851 = vmatpush1.msra.mxu0 0.0
        %852 = vmatprep.subr.mxu0 0.0
        %853 = vmatpush1.msra.mxu0 0.0
        %854 = vmatprep.subr.mxu0 0.0
        %855 = vmatpush1.msra.mxu0 0.0
        %856 = vmatprep.subr.mxu0 0.0
        %857 = vmatpush1.msra.mxu0 0.0
        %858 = vmatprep.subr.mxu0 0.0
        %859 = vmatpush1.msra.mxu0 0.0
        %860 = vmatprep.subr.mxu0 0.0
        %861 = vmatpush1.msra.mxu0 0.0
        %862 = vmatprep.subr.mxu0 0.0
        %863 = vmatpush1.msra.mxu0 0.0
        %864 = vmatprep.subr.mxu0 0.0
        %865 = vmatpush1.msra.mxu0 0.0
        %866 = vmatprep.subr.mxu0 0.0
        %867 = vmatpush1.msra.mxu0 0.0
        %868 = vmatprep.subr.mxu0 0.0
        %869 = vmatpush1.msra.mxu0 0.0
        %870 = vmatprep.subr.mxu0 0.0
        %871 = vmatpush1.msra.mxu0 0.0
        %872 = vmatprep.subr.mxu0 0.0
        %873 = vmatpush1.msra.mxu0 0.0
        %874 = vmatprep.subr.mxu0 0.0
        %875 = vmatpush1.msra.mxu0 0.0
        %876 = vmatprep.subr.mxu0 0.0
        %877 = vmatpush1.msra.mxu0 0.0
        %878 = vmatprep.subr.mxu0 0.0
        %879 = vmatpush1.msra.mxu0 0.0
        %880 = vmatprep.subr.mxu0 0.0
        %881 = vmatpush1.msra.mxu0 0.0
        %882 = vmatprep.subr.mxu0 0.0
        %883 = vmatpush1.msra.mxu0 0.0
        %884 = vmatprep.subr.mxu0 0.0
        %885 = vmatpush1.msra.mxu0 0.0
        %886 = vmatprep.subr.mxu0 0.0
        %887 = vmatpush1.msra.mxu0 0.0
        %888 = vmatprep.subr.mxu0 0.0
        %889 = vmatpush1.msra.mxu0 0.0
        %890 = vmatprep.subr.mxu0 0.0
        %891 = vmatpush1.msra.mxu0 0.0
        %892 = vmatprep.subr.mxu0 0.0
        %893 = vmatpush1.msra.mxu0 0.0
        %894 = vmatprep.subr.mxu0 0.0
        %895 = vmatpush1.msra.mxu0 0.0
        %896 = vmatprep.subr.mxu0 0.0
        %897 = vmatpush1.msra.mxu0 0.0
        %898 = vmatprep.subr.mxu0 0.0
        %899 = vmatpush1.msra.mxu0 0.0
        %900 = vmatprep.subr.mxu0 0.0
        %901 = vmatpush1.msra.mxu0 0.0
        %902 = vmatprep.subr.mxu0 0.0
        %903 = vmatpush1.msra.mxu0 0.0
        %904 = vmatprep.subr.mxu0 0.0
        %905 = vmatpush1.msra.mxu0 0.0
        %906 = vmatprep.subr.mxu0 0.0
        %907 = vmatpush1.msra.mxu0 0.0
        %908 = vmatprep.mubr.f32.mxu0 0.0
        %v909 = vand.u32 %v838, 4294901760
        %v910 = vsub.f32 %v838, %v909
        %v911 = vand.u32 %v910, 4294901760
        %v912 = vsub.f32 %v910, %v911
        %v913 = vand.u32 %v912, 4294901760
        %914 = vmatmul.mubr.f32.gmra.mrb[0].mxu0 %v913
        %v915 = vpop.f32.mrb[0].mxu0
        %v916 = vadd.f32 %v828, %v915
        %v917 = vpop.f32.mrb[0].mxu0
        %918 = vmatprep.mubr.f32.mxu0 0.0
        %v919 = vand.u32 %v841, 4294901760
        %v920 = vsub.f32 %v841, %v919
        %v921 = vand.u32 %v920, 4294901760
        %v922 = vsub.f32 %v920, %v921
        %v923 = vand.u32 %v922, 4294901760
        %924 = vmatmul.mubr.f32.gmra.mrb[0].mxu0 %v923
        %v925 = vpop.f32.mrb[0].mxu0
        %v926 = vadd.f32 %v834, %v925
        %v927 = vpop.f32.mrb[0].mxu0
        %928 = vdwg.mxu0
        %929 = vmatprep.subr.mxu0 0.0
        %v930 = vand.u32 %v334, 4294901760
        %v931 = vsub.f32 %v334, %v930
        %v932 = vand.u32 %v931, 4294901760
        %v933 = vsub.f32 %v931, %v932
        %v934 = vand.u32 %v933, 4294901760
        %935 = vmatpush1.msra.mxu0 %v934
        %936 = vmatprep.subr.mxu0 0.0
        %937 = vmatpush1.msra.mxu0 0.0
        %938 = vmatprep.subr.mxu0 0.0
        %939 = vmatpush1.msra.mxu0 0.0
        %940 = vmatprep.subr.mxu0 0.0
        %941 = vmatpush1.msra.mxu0 0.0
        %942 = vmatprep.subr.mxu0 0.0
        %943 = vmatpush1.msra.mxu0 0.0
        %944 = vmatprep.subr.mxu0 0.0
        %945 = vmatpush1.msra.mxu0 0.0
        %946 = vmatprep.subr.mxu0 0.0
        %947 = vmatpush1.msra.mxu0 0.0
        %948 = vmatprep.subr.mxu0 0.0
        %949 = vmatpush1.msra.mxu0 0.0
        %950 = vmatprep.subr.mxu0 0.0
        %951 = vmatpush1.msra.mxu0 0.0
        %952 = vmatprep.subr.mxu0 0.0
        %953 = vmatpush1.msra.mxu0 0.0
        %954 = vmatprep.subr.mxu0 0.0
        %955 = vmatpush1.msra.mxu0 0.0
        %956 = vmatprep.subr.mxu0 0.0
        %957 = vmatpush1.msra.mxu0 0.0
        %958 = vmatprep.subr.mxu0 0.0
        %959 = vmatpush1.msra.mxu0 0.0
        %960 = vmatprep.subr.mxu0 0.0
        %961 = vmatpush1.msra.mxu0 0.0
        %962 = vmatprep.subr.mxu0 0.0
        %963 = vmatpush1.msra.mxu0 0.0
        %964 = vmatprep.subr.mxu0 0.0
        %965 = vmatpush1.msra.mxu0 0.0
        %966 = vmatprep.subr.mxu0 0.0
        %967 = vmatpush1.msra.mxu0 0.0
        %968 = vmatprep.subr.mxu0 0.0
        %969 = vmatpush1.msra.mxu0 0.0
        %970 = vmatprep.subr.mxu0 0.0
        %971 = vmatpush1.msra.mxu0 0.0
        %972 = vmatprep.subr.mxu0 0.0
        %973 = vmatpush1.msra.mxu0 0.0
        %974 = vmatprep.subr.mxu0 0.0
        %975 = vmatpush1.msra.mxu0 0.0
        %976 = vmatprep.subr.mxu0 0.0
        %977 = vmatpush1.msra.mxu0 0.0
        %978 = vmatprep.subr.mxu0 0.0
        %979 = vmatpush1.msra.mxu0 0.0
        %980 = vmatprep.subr.mxu0 0.0
        %981 = vmatpush1.msra.mxu0 0.0
        %982 = vmatprep.subr.mxu0 0.0
        %983 = vmatpush1.msra.mxu0 0.0
        %984 = vmatprep.subr.mxu0 0.0
        %985 = vmatpush1.msra.mxu0 0.0
        %986 = vmatprep.subr.mxu0 0.0
        %987 = vmatpush1.msra.mxu0 0.0
        %988 = vmatprep.subr.mxu0 0.0
        %989 = vmatpush1.msra.mxu0 0.0
        %990 = vmatprep.subr.mxu0 0.0
        %991 = vmatpush1.msra.mxu0 0.0
        %992 = vmatprep.subr.mxu0 0.0
        %993 = vmatpush1.msra.mxu0 0.0
        %994 = vmatprep.subr.mxu0 0.0
        %995 = vmatpush1.msra.mxu0 0.0
        %996 = vmatprep.subr.mxu0 0.0
        %997 = vmatpush1.msra.mxu0 0.0
        %998 = vmatprep.mubr.f32.mxu0 0.0
        %v999 = vand.u32 %v838, 4294901760
        %1000 = vmatmul.mubr.f32.gmra.mrb[0].mxu0 %v999
        %v1001 = vpop.f32.mrb[0].mxu0
        %v1002 = vadd.f32 %v916, %v1001
        %v1003 = vpop.f32.mrb[0].mxu0
        %1004 = vmatprep.mubr.f32.mxu0 0.0
        %v1005 = vand.u32 %v841, 4294901760
        %1006 = vmatmul.mubr.f32.gmra.mrb[0].mxu0 %v1005
        %v1007 = vpop.f32.mrb[0].mxu0
        %v1008 = vadd.f32 %v926, %v1007
        %v1009 = vpop.f32.mrb[0].mxu0
        %1010 = vdwg.mxu0
        %1011 = vmatprep.subr.mxu0 0.0
        %v1012 = vand.u32 %v334, 4294901760
        %v1013 = vsub.f32 %v334, %v1012
        %1014 = vmatpush1.msra.mxu0 %v1013
        %1015 = vmatprep.subr.mxu0 0.0
        %1016 = vmatpush1.msra.mxu0 0.0
        %1017 = vmatprep.subr.mxu0 0.0
        %1018 = vmatpush1.msra.mxu0 0.0
        %1019 = vmatprep.subr.mxu0 0.0
        %1020 = vmatpush1.msra.mxu0 0.0
        %1021 = vmatprep.subr.mxu0 0.0
        %1022 = vmatpush1.msra.mxu0 0.0
        %1023 = vmatprep.subr.mxu0 0.0
        %1024 = vmatpush1.msra.mxu0 0.0
        %1025 = vmatprep.subr.mxu0 0.0
        %1026 = vmatpush1.msra.mxu0 0.0
        %1027 = vmatprep.subr.mxu0 0.0
        %1028 = vmatpush1.msra.mxu0 0.0
        %1029 = vmatprep.subr.mxu0 0.0
        %1030 = vmatpush1.msra.mxu0 0.0
        %1031 = vmatprep.subr.mxu0 0.0
        %1032 = vmatpush1.msra.mxu0 0.0
        %1033 = vmatprep.subr.mxu0 0.0
        %1034 = vmatpush1.msra.mxu0 0.0
        %1035 = vmatprep.subr.mxu0 0.0
        %1036 = vmatpush1.msra.mxu0 0.0
        %1037 = vmatprep.subr.mxu0 0.0
        %1038 = vmatpush1.msra.mxu0 0.0
        %1039 = vmatprep.subr.mxu0 0.0
        %1040 = vmatpush1.msra.mxu0 0.0
        %1041 = vmatprep.subr.mxu0 0.0
        %1042 = vmatpush1.msra.mxu0 0.0
        %1043 = vmatprep.subr.mxu0 0.0
        %1044 = vmatpush1.msra.mxu0 0.0
        %1045 = vmatprep.subr.mxu0 0.0
        %1046 = vmatpush1.msra.mxu0 0.0
        %1047 = vmatprep.subr.mxu0 0.0
        %1048 = vmatpush1.msra.mxu0 0.0
        %1049 = vmatprep.subr.mxu0 0.0
        %1050 = vmatpush1.msra.mxu0 0.0
        %1051 = vmatprep.subr.mxu0 0.0
        %1052 = vmatpush1.msra.mxu0 0.0
        %1053 = vmatprep.subr.mxu0 0.0
        %1054 = vmatpush1.msra.mxu0 0.0
        %1055 = vmatprep.subr.mxu0 0.0
        %1056 = vmatpush1.msra.mxu0 0.0
        %1057 = vmatprep.subr.mxu0 0.0
        %1058 = vmatpush1.msra.mxu0 0.0
        %1059 = vmatprep.subr.mxu0 0.0
        %1060 = vmatpush1.msra.mxu0 0.0
        %1061 = vmatprep.subr.mxu0 0.0
        %1062 = vmatpush1.msra.mxu0 0.0
        %1063 = vmatprep.subr.mxu0 0.0
        %1064 = vmatpush1.msra.mxu0 0.0
        %1065 = vmatprep.subr.mxu0 0.0
        %1066 = vmatpush1.msra.mxu0 0.0
        %1067 = vmatprep.subr.mxu0 0.0
        %1068 = vmatpush1.msra.mxu0 0.0
        %1069 = vmatprep.subr.mxu0 0.0
        %1070 = vmatpush1.msra.mxu0 0.0
        %1071 = vmatprep.subr.mxu0 0.0
        %1072 = vmatpush1.msra.mxu0 0.0
        %1073 = vmatprep.subr.mxu0 0.0
        %1074 = vmatpush1.msra.mxu0 0.0
        %1075 = vmatprep.subr.mxu0 0.0
        %1076 = vmatpush1.msra.mxu0 0.0
        %1077 = vmatprep.mubr.f32.mxu0 0.0
        %v1078 = vand.u32 %v838, 4294901760
        %v1079 = vsub.f32 %v838, %v1078
        %1080 = vmatmul.mubr.f32.gmra.mrb[0].mxu0 %v1079
        %v1081 = vpop.f32.mrb[0].mxu0
        %v1082 = vadd.f32 %v1002, %v1081
        %v1083 = vpop.f32.mrb[0].mxu0
        %1084 = vmatprep.mubr.f32.mxu0 0.0
        %v1085 = vand.u32 %v841, 4294901760
        %v1086 = vsub.f32 %v841, %v1085
        %1087 = vmatmul.mubr.f32.gmra.mrb[0].mxu0 %v1086
        %v1088 = vpop.f32.mrb[0].mxu0
        %v1089 = vadd.f32 %v1008, %v1088
        %v1090 = vpop.f32.mrb[0].mxu0
        %1091 = vdwg.mxu0
        %1092 = vmatprep.subr.mxu0 0.0
        %v1093 = vand.u32 %v334, 4294901760
        %1094 = vmatpush1.msra.mxu0 %v1093
        %1095 = vmatprep.subr.mxu0 0.0
        %1096 = vmatpush1.msra.mxu0 0.0
        %1097 = vmatprep.subr.mxu0 0.0
        %1098 = vmatpush1.msra.mxu0 0.0
        %1099 = vmatprep.subr.mxu0 0.0
        %1100 = vmatpush1.msra.mxu0 0.0
        %1101 = vmatprep.subr.mxu0 0.0
        %1102 = vmatpush1.msra.mxu0 0.0
        %1103 = vmatprep.subr.mxu0 0.0
        %1104 = vmatpush1.msra.mxu0 0.0
        %1105 = vmatprep.subr.mxu0 0.0
        %1106 = vmatpush1.msra.mxu0 0.0
        %1107 = vmatprep.subr.mxu0 0.0
        %1108 = vmatpush1.msra.mxu0 0.0
        %1109 = vmatprep.subr.mxu0 0.0
        %1110 = vmatpush1.msra.mxu0 0.0
        %1111 = vmatprep.subr.mxu0 0.0
        %1112 = vmatpush1.msra.mxu0 0.0
        %1113 = vmatprep.subr.mxu0 0.0
        %1114 = vmatpush1.msra.mxu0 0.0
        %1115 = vmatprep.subr.mxu0 0.0
        %1116 = vmatpush1.msra.mxu0 0.0
        %1117 = vmatprep.subr.mxu0 0.0
        %1118 = vmatpush1.msra.mxu0 0.0
        %1119 = vmatprep.subr.mxu0 0.0
        %1120 = vmatpush1.msra.mxu0 0.0
        %1121 = vmatprep.subr.mxu0 0.0
        %1122 = vmatpush1.msra.mxu0 0.0
        %1123 = vmatprep.subr.mxu0 0.0
        %1124 = vmatpush1.msra.mxu0 0.0
        %1125 = vmatprep.subr.mxu0 0.0
        %1126 = vmatpush1.msra.mxu0 0.0
        %1127 = vmatprep.subr.mxu0 0.0
        %1128 = vmatpush1.msra.mxu0 0.0
        %1129 = vmatprep.subr.mxu0 0.0
        %1130 = vmatpush1.msra.mxu0 0.0
        %1131 = vmatprep.subr.mxu0 0.0
        %1132 = vmatpush1.msra.mxu0 0.0
        %1133 = vmatprep.subr.mxu0 0.0
        %1134 = vmatpush1.msra.mxu0 0.0
        %1135 = vmatprep.subr.mxu0 0.0
        %1136 = vmatpush1.msra.mxu0 0.0
        %1137 = vmatprep.subr.mxu0 0.0
        %1138 = vmatpush1.msra.mxu0 0.0
        %1139 = vmatprep.subr.mxu0 0.0
        %1140 = vmatpush1.msra.mxu0 0.0
        %1141 = vmatprep.subr.mxu0 0.0
        %1142 = vmatpush1.msra.mxu0 0.0
        %1143 = vmatprep.subr.mxu0 0.0
        %1144 = vmatpush1.msra.mxu0 0.0
        %1145 = vmatprep.subr.mxu0 0.0
        %1146 = vmatpush1.msra.mxu0 0.0
        %1147 = vmatprep.subr.mxu0 0.0
        %1148 = vmatpush1.msra.mxu0 0.0
        %1149 = vmatprep.subr.mxu0 0.0
        %1150 = vmatpush1.msra.mxu0 0.0
        %1151 = vmatprep.subr.mxu0 0.0
        %1152 = vmatpush1.msra.mxu0 0.0
        %1153 = vmatprep.subr.mxu0 0.0
        %1154 = vmatpush1.msra.mxu0 0.0
        %1155 = vmatprep.subr.mxu0 0.0
        %1156 = vmatpush1.msra.mxu0 0.0
        %1157 = vmatprep.mubr.f32.mxu0 0.0
        %v1158 = vand.u32 %v838, 4294901760
        %v1159 = vsub.f32 %v838, %v1158
        %v1160 = vand.u32 %v1159, 4294901760
        %1161 = vmatmul.mubr.f32.gmra.mrb[0].mxu0 %v1160
        %v1162 = vpop.f32.mrb[0].mxu0
        %v1163 = vadd.f32 %v1082, %v1162
        %v1164 = vpop.f32.mrb[0].mxu0
        %1165 = vmatprep.mubr.f32.mxu0 0.0
        %v1166 = vand.u32 %v841, 4294901760
        %v1167 = vsub.f32 %v841, %v1166
        %v1168 = vand.u32 %v1167, 4294901760
        %1169 = vmatmul.mubr.f32.gmra.mrb[0].mxu0 %v1168
        %v1170 = vpop.f32.mrb[0].mxu0
        %v1171 = vadd.f32 %v1089, %v1170
        %v1172 = vpop.f32.mrb[0].mxu0
        %1173 = vdwg.mxu0
        %1174 = vmatprep.subr.mxu0 0.0
        %v1175 = vand.u32 %v334, 4294901760
        %v1176 = vsub.f32 %v334, %v1175
        %v1177 = vand.u32 %v1176, 4294901760
        %1178 = vmatpush1.msra.mxu0 %v1177
        %1179 = vmatprep.subr.mxu0 0.0
        %1180 = vmatpush1.msra.mxu0 0.0
        %1181 = vmatprep.subr.mxu0 0.0
        %1182 = vmatpush1.msra.mxu0 0.0
        %1183 = vmatprep.subr.mxu0 0.0
        %1184 = vmatpush1.msra.mxu0 0.0
        %1185 = vmatprep.subr.mxu0 0.0
        %1186 = vmatpush1.msra.mxu0 0.0
        %1187 = vmatprep.subr.mxu0 0.0
        %1188 = vmatpush1.msra.mxu0 0.0
        %1189 = vmatprep.subr.mxu0 0.0
        %1190 = vmatpush1.msra.mxu0 0.0
        %1191 = vmatprep.subr.mxu0 0.0
        %1192 = vmatpush1.msra.mxu0 0.0
        %1193 = vmatprep.subr.mxu0 0.0
        %1194 = vmatpush1.msra.mxu0 0.0
        %1195 = vmatprep.subr.mxu0 0.0
        %1196 = vmatpush1.msra.mxu0 0.0
        %1197 = vmatprep.subr.mxu0 0.0
        %1198 = vmatpush1.msra.mxu0 0.0
        %1199 = vmatprep.subr.mxu0 0.0
        %1200 = vmatpush1.msra.mxu0 0.0
        %1201 = vmatprep.subr.mxu0 0.0
        %1202 = vmatpush1.msra.mxu0 0.0
        %1203 = vmatprep.subr.mxu0 0.0
        %1204 = vmatpush1.msra.mxu0 0.0
        %1205 = vmatprep.subr.mxu0 0.0
        %1206 = vmatpush1.msra.mxu0 0.0
        %1207 = vmatprep.subr.mxu0 0.0
        %1208 = vmatpush1.msra.mxu0 0.0
        %1209 = vmatprep.subr.mxu0 0.0
        %1210 = vmatpush1.msra.mxu0 0.0
        %1211 = vmatprep.subr.mxu0 0.0
        %1212 = vmatpush1.msra.mxu0 0.0
        %1213 = vmatprep.subr.mxu0 0.0
        %1214 = vmatpush1.msra.mxu0 0.0
        %1215 = vmatprep.subr.mxu0 0.0
        %1216 = vmatpush1.msra.mxu0 0.0
        %1217 = vmatprep.subr.mxu0 0.0
        %1218 = vmatpush1.msra.mxu0 0.0
        %1219 = vmatprep.subr.mxu0 0.0
        %1220 = vmatpush1.msra.mxu0 0.0
        %1221 = vmatprep.subr.mxu0 0.0
        %1222 = vmatpush1.msra.mxu0 0.0
        %1223 = vmatprep.subr.mxu0 0.0
        %1224 = vmatpush1.msra.mxu0 0.0
        %1225 = vmatprep.subr.mxu0 0.0
        %1226 = vmatpush1.msra.mxu0 0.0
        %1227 = vmatprep.subr.mxu0 0.0
        %1228 = vmatpush1.msra.mxu0 0.0
        %1229 = vmatprep.subr.mxu0 0.0
        %1230 = vmatpush1.msra.mxu0 0.0
        %1231 = vmatprep.subr.mxu0 0.0
        %1232 = vmatpush1.msra.mxu0 0.0
        %1233 = vmatprep.subr.mxu0 0.0
        %1234 = vmatpush1.msra.mxu0 0.0
        %1235 = vmatprep.subr.mxu0 0.0
        %1236 = vmatpush1.msra.mxu0 0.0
        %1237 = vmatprep.subr.mxu0 0.0
        %1238 = vmatpush1.msra.mxu0 0.0
        %1239 = vmatprep.subr.mxu0 0.0
        %1240 = vmatpush1.msra.mxu0 0.0
        %1241 = vmatprep.mubr.f32.mxu0 0.0
        %v1242 = vand.u32 %v838, 4294901760
        %1243 = vmatmul.mubr.f32.gmra.mrb[0].mxu0 %v1242
        %v1244 = vpop.f32.mrb[0].mxu0
        %v1245 = vadd.f32 %v1163, %v1244
        %v1246 = vpop.f32.mrb[0].mxu0
        %1247 = vmatprep.mubr.f32.mxu0 0.0
        %v1248 = vand.u32 %v841, 4294901760
        %1249 = vmatmul.mubr.f32.gmra.mrb[0].mxu0 %v1248
        %v1250 = vpop.f32.mrb[0].mxu0
        %v1251 = vadd.f32 %v1171, %v1250
        %v1252 = vpop.f32.mrb[0].mxu0
        %1253 = vdwg.mxu0
        %1254 = vmatprep.subr.mxu0 0.0
        %v1255 = vand.u32 %v334, 4294901760
        %1256 = vmatpush1.msra.mxu0 %v1255
        %1257 = vmatprep.subr.mxu0 0.0
        %1258 = vmatpush1.msra.mxu0 0.0
        %1259 = vmatprep.subr.mxu0 0.0
        %1260 = vmatpush1.msra.mxu0 0.0
        %1261 = vmatprep.subr.mxu0 0.0
        %1262 = vmatpush1.msra.mxu0 0.0
        %1263 = vmatprep.subr.mxu0 0.0
        %1264 = vmatpush1.msra.mxu0 0.0
        %1265 = vmatprep.subr.mxu0 0.0
        %1266 = vmatpush1.msra.mxu0 0.0
        %1267 = vmatprep.subr.mxu0 0.0
        %1268 = vmatpush1.msra.mxu0 0.0
        %1269 = vmatprep.subr.mxu0 0.0
        %1270 = vmatpush1.msra.mxu0 0.0
        %1271 = vmatprep.subr.mxu0 0.0
        %1272 = vmatpush1.msra.mxu0 0.0
        %1273 = vmatprep.subr.mxu0 0.0
        %1274 = vmatpush1.msra.mxu0 0.0
        %1275 = vmatprep.subr.mxu0 0.0
        %1276 = vmatpush1.msra.mxu0 0.0
        %1277 = vmatprep.subr.mxu0 0.0
        %1278 = vmatpush1.msra.mxu0 0.0
        %1279 = vmatprep.subr.mxu0 0.0
        %1280 = vmatpush1.msra.mxu0 0.0
        %1281 = vmatprep.subr.mxu0 0.0
        %1282 = vmatpush1.msra.mxu0 0.0
        %1283 = vmatprep.subr.mxu0 0.0
        %1284 = vmatpush1.msra.mxu0 0.0
        %1285 = vmatprep.subr.mxu0 0.0
        %1286 = vmatpush1.msra.mxu0 0.0
        %1287 = vmatprep.subr.mxu0 0.0
        %1288 = vmatpush1.msra.mxu0 0.0
        %1289 = vmatprep.subr.mxu0 0.0
        %1290 = vmatpush1.msra.mxu0 0.0
        %1291 = vmatprep.subr.mxu0 0.0
        %1292 = vmatpush1.msra.mxu0 0.0
        %1293 = vmatprep.subr.mxu0 0.0
        %1294 = vmatpush1.msra.mxu0 0.0
        %1295 = vmatprep.subr.mxu0 0.0
        %1296 = vmatpush1.msra.mxu0 0.0
        %1297 = vmatprep.subr.mxu0 0.0
        %1298 = vmatpush1.msra.mxu0 0.0
        %1299 = vmatprep.subr.mxu0 0.0
        %1300 = vmatpush1.msra.mxu0 0.0
        %1301 = vmatprep.subr.mxu0 0.0
        %1302 = vmatpush1.msra.mxu0 0.0
        %1303 = vmatprep.subr.mxu0 0.0
        %1304 = vmatpush1.msra.mxu0 0.0
        %1305 = vmatprep.subr.mxu0 0.0
        %1306 = vmatpush1.msra.mxu0 0.0
        %1307 = vmatprep.subr.mxu0 0.0
        %1308 = vmatpush1.msra.mxu0 0.0
        %1309 = vmatprep.subr.mxu0 0.0
        %1310 = vmatpush1.msra.mxu0 0.0
        %1311 = vmatprep.subr.mxu0 0.0
        %1312 = vmatpush1.msra.mxu0 0.0
        %1313 = vmatprep.subr.mxu0 0.0
        %1314 = vmatpush1.msra.mxu0 0.0
        %1315 = vmatprep.subr.mxu0 0.0
        %1316 = vmatpush1.msra.mxu0 0.0
        %1317 = vmatprep.subr.mxu0 0.0
        %1318 = vmatpush1.msra.mxu0 0.0
        %1319 = vmatprep.mubr.f32.mxu0 0.0
        %v1320 = vand.u32 %v838, 4294901760
        %1321 = vmatmul.mubr.f32.gmra.mrb[0].mxu0 %v1320
        %v1322 = vpop.f32.mrb[0].mxu0
        %v1323 = vadd.f32 %v1245, %v1322
        %v1324 = vpop.f32.mrb[0].mxu0
        %1325 = vmatprep.mubr.f32.mxu0 0.0
        %v1326 = vand.u32 %v841, 4294901760
        %1327 = vmatmul.mubr.f32.gmra.mrb[0].mxu0 %v1326
        %v1328 = vpop.f32.mrb[0].mxu0
        %v1329 = vadd.f32 %v1251, %v1328
        %v1330 = vpop.f32.mrb[0].mxu0
        %1331 = vdwg.mxu0
        %v1333 = vrot.slane %v1323, 4
        %1335 = vrot.lane.b32.xlu0 %v1333, 1
        %v1336 = vpop.permute.xlu0 %1335
        %vm1337 = vcmp.ge.s32.totalorder %v329, 1
        %v1338 = vsel %vm1337, %v1336, 0.0
        %v1339 = vadd.f32 %v1323, %v1338
        %vm1340 = vcmp.lt.s32.totalorder %v329, 1
        %v1341 = vsel %vm1340, %v1336, 0.0
        %v1342 = vadd.f32 %v1341, 0.0
        %1343 = vrot.lane.b32.xlu0 %v1329, 2
        %v1344 = vpop.permute.xlu0 %1343
        %vm1345 = vcmp.ge.s32.totalorder %v329, 2
        %v1346 = vsel %vm1345, %v1344, 0.0
        %v1347 = vadd.f32 %v1339, %v1346
        %vm1348 = vcmp.lt.s32.totalorder %v329, 2
        %v1349 = vsel %vm1348, %v1344, 0.0
        %v1350 = vadd.f32 %v1342, %v1349
        %v1352 = vrot.slane %v1329, 4
        %1354 = vrot.lane.b32.xlu0 %v1352, 3
        %v1355 = vpop.permute.xlu0 %1354
        %vm1356 = vcmp.ge.s32.totalorder %v329, 3
        %v1357 = vsel %vm1356, %v1355, 0.0
        %v1358 = vadd.f32 %v1347, %v1357
        %vm1359 = vcmp.lt.s32.totalorder %v329, 3
        %v1360 = vsel %vm1359, %v1355, 0.0
        %v1361 = vadd.f32 %v1350, %v1360
        %v1362 = vld [vmem:[#allocation2] sm:$0xf]
        %v1363 = vadd.f32 %v1358, %v1362
        %v1364 = vld [vmem:[%s267] sm:$0xf]
        %v1365 = vmul.f32 %v1363, %v1364
        %1366 = vst [vmem:[%s306] sm:$0xf] %v1365
        %1367 = vst [vmem:[#allocation2] sm:$0xf] %v1361
        %s1368 = sand.u32 %s157, 1
        %s1369 = scalar_lea.sflag [#allocation5], %s1368
        %s1370 = sand.u32 %s157, 1
        %s1371 = smul.addr %s1370, 4
        %s1372 = scalar_lea.vmem [#allocation8], %s1371
        // Predicated region
        $region49: #{tpu_custom_call.1} parent=35 // pred_check
          %p1373 = pneg %p167
        $region50: #{tpu_custom_call.1} parent=35 // pred_check_branch
          %1375 = sbr.rel (%p1373) target = $region52
        $region51: #{tpu_custom_call.1} parent=35 // pred_region
          %s1377 = ssub.s32 64, 64
          %1378 = vsyncadd %s1369, %s1377
          %s1379 = smul.addr %s28, 4
          %s1380 = sadd.s32 %s29, %s1379
          %s1381 = smul.addr %s1380, 64
          %s1382 = scalar_lea.hbm %s4, %s1381
          %s1384 = sshll.u32 %s1372, 4
          %s1385 = int_to_ptr.vmem [resolvable:$true] %s1384
          %1387 = dma.vmem_to_hbm [thread:$0]  %s1385, 64, %s1382, %s1369
        $region52: #{tpu_custom_call.1} parent=35 // pred_fallthru
          _
      $region36: #{tpu_custom_call.1} parent=5 // pred_fallthru
        _
      %p1388 = scmp.le.s32.totalorder 2, %s19
      // Predicated region
      $region53: #{tpu_custom_call.1} parent=5 // pred_check
        %p1389 = pneg %p1388
      $region54: #{tpu_custom_call.1} parent=5 // pred_check_branch
        %1391 = sbr.rel (%p1389) target = $region56
      $region55: #{tpu_custom_call.1} parent=5 // pred_region
        %s1392 = ssub.s32 %s19, 2
        // Predicated region
        $region57: #{tpu_custom_call.1} parent=55 // pred_check
          %p1393 = pneg %p173
        $region58: #{tpu_custom_call.1} parent=55 // pred_check_branch
          %1395 = sbr.rel (%p1393) target = $region60
        $region59: #{tpu_custom_call.1} parent=55 // pred_region
          %s1396 = sand.u32 %s158, 1
          %s1397 = scalar_lea.sflag [#allocation5], %s1396
          %s1398 = sand.u32 %s158, 1
          %s1399 = smul.addr %s1398, 4
          %s1400 = scalar_lea.vmem [#allocation8], %s1399
          %1401 = dma.done %s1397, 64
        $region60: #{tpu_custom_call.1} parent=55 // pred_fallthru
          _
      $region56: #{tpu_custom_call.1} parent=5 // pred_fallthru
        _
    $region6: #{tpu_custom_call.1} parent=1 // loop_footer
      %s23 = sadd.s32 1, %s19
    $region7: #{tpu_custom_call.1} parent=1 // loop_footer_branch
      %18 = sbr.rel target = $region3
    $region8: #{tpu_custom_call.1} parent=1 // loop_exit
      _
    %1402 = vsyncpa [#allocation4], 1
    %s1403 = scalar_lea.sflag [#allocation4], 1
    %1404 = vsyncpa %s1403, 1
    %1405 = vsyncpa [#allocation7], 1
    %s1406 = scalar_lea.sflag [#allocation7], 1
    %1407 = vsyncpa %s1406, 1
    %1408 = vsyncpa [#allocation5], 1
    %s1409 = scalar_lea.sflag [#allocation5], 1
    %1410 = vsyncpa %s1409, 1

</llo_original>
